<compile_context>
chip_gen: v7x
topology: tpu7x:2x2x1
jax: 0.10.0
libtpu: 0.0.40
codegen_flags: <defaults>
</compile_context>

<pallas_src>
import functools

import jax
import jax.numpy as jnp
import numpy as np
from jax import lax
from jax.experimental import pallas as pl
from jax.experimental.pallas import tpu as pltpu


# Scoped VMEM budget: <= 64 MiB physical on v7x; 128 MiB on v5e/v6e (raise there for
# production tile sizes).  Actual usage at these shapes is a few hundred KiB.
_VMEM_LIMIT = 48 * 1024 * 1024


# -----------------------------------------------------------------------------
# Pallas kernels
# -----------------------------------------------------------------------------
def _mm_gn_kernel(*refs, eps, relu, has_skip, inv_count):
    """Per-sample: y = x @ w ; GroupNorm(y) ; (+ skip) ; optional ReLU.

    refs (in order):
      x_ref     (P, Cin)      one sample (batch squeezed by BlockSpec)
      w_ref     (Cin, Cout)
      gamma_ref (1, Cout)
      beta_ref  (1, Cout)
      gsum_ref  (Cout, Cout)  0/1 group-membership matrix (compute dtype)
      [skip_ref (P, Cout)]    optional fused residual
      o_ref     (P, Cout)
    """
    if has_skip:
        x_ref, w_ref, gamma_ref, beta_ref, gsum_ref, skip_ref, o_ref = refs
    else:
        x_ref, w_ref, gamma_ref, beta_ref, gsum_ref, o_ref = refs
        skip_ref = None

    y = jnp.dot(x_ref[...], w_ref[...],
                preferred_element_type=jnp.float32)            # (P, Cout) f32

    # --- GroupNorm stats: reduce over P first, then tiny group matmul ---
    A = gsum_ref[...].astype(jnp.float32)                      # (Cout, Cout)
    sum_y = jnp.sum(y, axis=0, keepdims=True)                  # (1, Cout)
    mean = jnp.dot(sum_y, A, preferred_element_type=jnp.float32) * inv_count
    yc = y - mean                                              # centred (two-pass var)
    sum_sq = jnp.sum(yc * yc, axis=0, keepdims=True)           # (1, Cout)
    var = jnp.dot(sum_sq, A, preferred_element_type=jnp.float32) * inv_count

    out = yc * lax.rsqrt(var + eps) * gamma_ref[...] + beta_ref[...]
    if has_skip:
        out = out + skip_ref[...].astype(jnp.float32)
    if relu:
        out = jnp.maximum(out, 0.0)
    o_ref[...] = out.astype(o_ref.dtype)


def _gconv_gn_relu_kernel(x_ref, w_ref, mask_ref, gamma_ref, beta_ref, gsum_ref,
                          o_ref, acc_ref, *, stride, Ho, Wo, Wqs, eps, inv_count):
    """Grouped 3x3 conv + GroupNorm + ReLU for one sample.  Grid = (batch,).

    x_ref     (s*s, Hqs*Wqs, C)  padded activation, parity-split (space-to-depth) by
                                 the conv stride, q-space flattened row-major.
    w_ref     (9, C, C)          per-tap block-diagonal grouped weights (lane-dense).
    mask_ref  (Mslab, 1)         1.0 for valid slab rows, 0.0 for wrap-around junk.
    gamma_ref (1, C)
    beta_ref  (1, C)
    gsum_ref  (C, C)             0/1 group-membership matrix (compute dtype).
    o_ref     (Ho, Wo, C)        lane-dense output; (N,Ho,Wo,C) reshapes freely to
                                 (N, P, C) for the following 1x1 conv.
    acc_ref   (Mslab, C) f32     VMEM accumulator over the 9 taps.
    """
    m_slab = acc_ref.shape[0]

    acc_ref[...] = jnp.zeros_like(acc_ref)
    # 9 taps, generated in-kernel as contiguous row-slabs of the flattened input.
    for kh in range(3):
        for kw in range(3):
            pidx = (kh % stride) * stride + (kw % stride)      # parity plane
            r0 = (kh // stride) * Wqs + (kw // stride)         # slab start row
            win = x_ref[pidx, pl.ds(r0, m_slab), :]            # (Mslab, C)
            acc_ref[...] += jnp.dot(win, w_ref[kh * 3 + kw],
                                    preferred_element_type=jnp.float32)

    y = acc_ref[...]                                           # (Mslab, C) f32
    msk = mask_ref[...]                                        # (Mslab, 1)
    A = gsum_ref[...].astype(jnp.float32)                      # (C, C)

    # GroupNorm stats over valid rows only (junk rows masked to zero).
    sum_y = jnp.sum(y * msk, axis=0, keepdims=True)            # (1, C)
    mean = jnp.dot(sum_y, A, preferred_element_type=jnp.float32) * inv_count
    yc = y - mean
    sum_sq = jnp.sum(yc * yc * msk, axis=0, keepdims=True)     # (1, C)
    var = jnp.dot(sum_sq, A, preferred_element_type=jnp.float32) * inv_count

    scale = lax.rsqrt(var + eps) * gamma_ref[...]              # (1, C)
    shift = beta_ref[...] - mean * scale                       # (1, C)

    # Compact the slab: store only the Wo valid columns of each output row.
    for h in range(Ho):
        row = acc_ref[pl.ds(h * Wqs, Wo), :]                   # (Wo, C) f32
        o_ref[h] = jnp.maximum(row * scale + shift, 0.0).astype(o_ref.dtype)


# -----------------------------------------------------------------------------
# Pallas wrappers
# -----------------------------------------------------------------------------
def mm_gn(x, w, gamma, beta, num_groups, *, eps=1e-5, relu=False, skip=None,
          compute_dtype=jnp.bfloat16, out_dtype=None):
    """x: (N, P, Cin) @ w: (Cin, Cout) -> GroupNorm (+skip) (+ReLU): (N, P, Cout)."""
    N, P, Cin = x.shape
    Cout = w.shape[1]
    gw = Cout // num_groups
    out_dtype = out_dtype or compute_dtype

    gidx = jnp.arange(Cout) // gw
    gsum = (gidx[:, None] == gidx[None, :]).astype(compute_dtype)  # (Cout, Cout) 0/1
    gamma2 = gamma.reshape(1, Cout).astype(jnp.float32)
    beta2 = beta.reshape(1, Cout).astype(jnp.float32)

    has_skip = skip is not None
    kernel = functools.partial(_mm_gn_kernel, eps=eps, relu=relu,
                               has_skip=has_skip, inv_count=1.0 / float(P * gw))

    # TODO(synk): tile P here (with cross-tile GN stat accumulation) for production
    #             sizes; whole-sample blocks are fine at these toy shapes.
    in_specs = [
        pl.BlockSpec((None, P, Cin), lambda n: (n, 0, 0)),
        pl.BlockSpec((Cin, Cout), lambda n: (0, 0)),
        pl.BlockSpec((1, Cout), lambda n: (0, 0)),
        pl.BlockSpec((1, Cout), lambda n: (0, 0)),
        pl.BlockSpec((Cout, Cout), lambda n: (0, 0)),
    ]
    args = [x.astype(compute_dtype), w.astype(compute_dtype), gamma2, beta2, gsum]
    if has_skip:
        in_specs.append(pl.BlockSpec((None, P, Cout), lambda n: (n, 0, 0)))
        args.append(skip)

    cbytes = jnp.dtype(compute_dtype).itemsize
    bytes_accessed = (N * P * Cin + Cin * Cout + Cout * Cout) * cbytes
    bytes_accessed += N * P * Cout * jnp.dtype(out_dtype).itemsize + 2 * Cout * 4
    if has_skip:
        bytes_accessed += N * P * Cout * jnp.dtype(skip.dtype).itemsize
    cost = pl.CostEstimate(
        flops=int(2 * N * P * Cin * Cout + 10 * N * P * Cout),
        transcendentals=int(N * Cout),
        bytes_accessed=int(bytes_accessed))

    return pl.pallas_call(
        kernel,
        out_shape=jax.ShapeDtypeStruct((N, P, Cout), out_dtype),
        grid=(N,),
        in_specs=in_specs,
        out_specs=pl.BlockSpec((None, P, Cout), lambda n: (n, 0, 0)),
        compiler_params=pltpu.CompilerParams(
            dimension_semantics=("parallel",),
            vmem_limit_bytes=_VMEM_LIMIT),
        cost_estimate=cost,
    )(*args)


def grouped_conv3x3_gn_relu(h_nhwc, w2, gamma, beta, num_groups, *, stride,
                            eps=1e-5, compute_dtype=jnp.bfloat16, out_dtype=None):
    """Grouped 3x3 conv (pad=1) + GroupNorm + ReLU.  Returns (N, Ho*Wo, C), Ho, Wo."""
    N, H, W, C = h_nhwc.shape
    G = num_groups
    gw = C // G
    s = int(stride)
    out_dtype = out_dtype or compute_dtype

    Ho = (H - 1) // s + 1
    Wo = (W - 1) // s + 1
    # Padded spatial dims, rounded up to multiples of the stride.
    Hq = ((H + 2 + s - 1) // s) * s
    Wq = ((W + 2 + s - 1) // s) * s
    Hqs, Wqs = Hq // s, Wq // s
    Mslab = (Ho - 1) * Wqs + Wo            # slab rows accessed per tap

    xp = jnp.pad(h_nhwc.astype(compute_dtype),
                 ((0, 0), (1, Hq - H - 1), (1, Wq - W - 1), (0, 0)))
    if s == 1:
        xflat = xp.reshape(N, 1, Hq * Wq, C)                       # free reshape
    else:
        # Space-to-depth by stride parity: one 1x-traffic transpose, only on
        # downsampling (stride-2) blocks; makes every tap window a contiguous slab.
        xflat = xp.reshape(N, Hqs, s, Wqs, s, C)
        xflat = jnp.transpose(xflat, (0, 2, 4, 1, 3, 5)).reshape(N, s * s,
                                                                 Hqs * Wqs, C)

    # PyTorch grouped weight (C, gw, 3, 3) -> 9 block-diagonal (C, C) matrices
    # (off-group entries are exact zeros, so no cross-group leakage).
    w9 = jnp.transpose(w2.reshape(G, gw, gw, 3, 3), (3, 4, 0, 2, 1)).reshape(
        9, G, gw, gw)
    wd = jnp.einsum("tgij,gh->tgihj", w9, jnp.eye(G, dtype=w9.dtype))
    wd = wd.reshape(9, C, C).astype(compute_dtype)

    # Slab rows that wrap across the padded width are junk -> mask out of GN stats.
    mask = ((jnp.arange(Mslab) % Wqs) < Wo).astype(jnp.float32).reshape(Mslab, 1)

    gidx = jnp.arange(C) // gw
    gsum = (gidx[:, None] == gidx[None, :]).astype(compute_dtype)  # (C, C)
    gamma2 = gamma.reshape(1, C).astype(jnp.float32)
    beta2 = beta.reshape(1, C).astype(jnp.float32)

    kernel = functools.partial(_gconv_gn_relu_kernel, stride=s, Ho=Ho, Wo=Wo,
                               Wqs=Wqs, eps=eps,
                               inv_count=1.0 / float(Ho * Wo * gw))

    cbytes = jnp.dtype(compute_dtype).itemsize
    cost = pl.CostEstimate(
        flops=int(2 * N * 9 * Mslab * C * C + 12 * N * Mslab * C),
        transcendentals=int(N * C),
        bytes_accessed=int((N * s * s * Hqs * Wqs * C + 9 * C * C) * cbytes
                           + N * Ho * Wo * C * jnp.dtype(out_dtype).itemsize))

    y = pl.pallas_call(
        kernel,
        out_shape=jax.ShapeDtypeStruct((N, Ho, Wo, C), out_dtype),
        grid=(N,),
        in_specs=[
            pl.BlockSpec((None, s * s, Hqs * Wqs, C), lambda n: (n, 0, 0, 0)),
            pl.BlockSpec((9, C, C), lambda n: (0, 0, 0)),
            pl.BlockSpec((Mslab, 1), lambda n: (0, 0)),
            pl.BlockSpec((1, C), lambda n: (0, 0)),
            pl.BlockSpec((1, C), lambda n: (0, 0)),
            pl.BlockSpec((C, C), lambda n: (0, 0)),
        ],
        out_specs=pl.BlockSpec((None, Ho, Wo, C), lambda n: (n, 0, 0, 0)),
        scratch_shapes=[pltpu.VMEM((Mslab, C), jnp.float32)],
        compiler_params=pltpu.CompilerParams(
            dimension_semantics=("parallel",),
            vmem_limit_bytes=_VMEM_LIMIT),
        cost_estimate=cost,
    )(xflat, wd, mask, gamma2, beta2, gsum)

    # (N, Ho, Wo, C) -> (N, P, C) is a free row-major reshape (no transpose).
    return y.reshape(N, Ho * Wo, C), Ho, Wo


# -----------------------------------------------------------------------------
# RegNetXBlock forward (Pallas)
# -----------------------------------------------------------------------------
def regnetx_block_forward(x_nchw, p, stride, group_width,
                          compute_dtype=jnp.bfloat16):
    Cin = x_nchw.shape[1]
    Cout = p["w3"].shape[0]
    G = Cout // group_width
    cd = compute_dtype

    # Early cast: NCHW -> NHWC directly in the compute dtype (no f32 staging copy).
    x = jnp.transpose(x_nchw, (0, 2, 3, 1)).astype(cd)             # NHWC
    N, H, W, _ = x.shape

    # ---- main branch ----
    w1 = jnp.transpose(p["w1"][:, :, 0, 0])                        # (Cin, Cout)
    h1 = mm_gn(x.reshape(N, H * W, Cin), w1, p["g1"], p["b1"], G,
               relu=True, compute_dtype=cd)                        # (N, H*W, Cout)
    h1 = h1.reshape(N, H, W, Cout)

    h2, Ho, Wo = grouped_conv3x3_gn_relu(h1, p["w2"], p["g2"], p["b2"], G,
                                         stride=stride, compute_dtype=cd)

    # ---- skip branch ----
    if stride != 1 or Cin != Cout:
        w_ds = jnp.transpose(p["w_ds"][:, :, 0, 0])                # (Cin, Cout)
        if stride != 1:
            # AvgPool2d(3, 2, 1, count_include_pad=True): window SUM in the compute
            # dtype, with the /9 folded into the downsample 1x1 weights.
            pooled = lax.reduce_window(
                x, jnp.array(0.0, x.dtype), lax.add, (1, 3, 3, 1), (1, 2, 2, 1),
                [(0, 0), (1, 1), (1, 1), (0, 0)])
            skip_in = pooled.reshape(N, Ho * Wo, Cin)
            w_ds = w_ds / 9.0
        else:
            skip_in = x.reshape(N, H * W, Cin)
        skip = mm_gn(skip_in, w_ds, p["g_ds"], p["b_ds"], G,
                     relu=False, compute_dtype=cd)                 # (N, Ho*Wo, Cout)
    else:
        # NOTE: in the bf16 path the identity skip is rounded to bf16 before the
        # (f32) in-kernel residual add; the reference adds in f32.
        skip = x.reshape(N, H * W, Cout)

    # conv3 (1x1) + GN + residual add + ReLU, all fused in one kernel.
    w3 = jnp.transpose(p["w3"][:, :, 0, 0])                        # (Cout, Cout)
    out = mm_gn(h2, w3, p["g3"], p["b3"], G, relu=True, skip=skip,
                compute_dtype=cd, out_dtype=jnp.float32)           # (N, Ho*Wo, Cout)

    out = out.reshape(N, Ho, Wo, Cout)
    return jnp.transpose(out, (0, 3, 1, 2))                        # NCHW


# -----------------------------------------------------------------------------
# Pure-JAX reference (mirrors the PyTorch module)
# -----------------------------------------------------------------------------
def ref_forward(x_nchw, p, stride, group_width):
    Cin = x_nchw.shape[1]
    Cout = p["w3"].shape[0]
    G = Cout // group_width
    x = jnp.transpose(x_nchw, (0, 2, 3, 1)).astype(jnp.float32)

    def conv(h, w_oihw, s=1, pad=0, groups=1):
        w = jnp.transpose(w_oihw, (2, 3, 1, 0))
        return lax.conv_general_dilated(
            h, w, (s, s), [(pad, pad), (pad, pad)],
            dimension_numbers=("NHWC", "HWIO", "NHWC"),
            feature_group_count=groups,
            precision=lax.Precision.HIGHEST)

    def gn(h, gamma, beta, eps=1e-5):
        N, H, W, C = h.shape
        hg = h.reshape(N, H * W, G, C // G)
        mean = hg.mean(axis=(1, 3), keepdims=True)
        var = ((hg - mean) ** 2).mean(axis=(1, 3), keepdims=True)
        hn = (hg - mean) / jnp.sqrt(var + eps)
        return hn.reshape(N, H, W, C) * gamma + beta

    if stride != 1 or Cin != Cout:
        skip = x
        if stride != 1:
            s = lax.reduce_window(skip, 0.0, lax.add, (1, 3, 3, 1), (1, 2, 2, 1),
                                  [(0, 0), (1, 1), (1, 1), (0, 0)])
            skip = s / 9.0
        skip = gn(conv(skip, p["w_ds"]), p["g_ds"], p["b_ds"])
    else:
        skip = x

    h = jnp.maximum(gn(conv(x, p["w1"]), p["g1"], p["b1"]), 0.0)
    h = jnp.maximum(gn(conv(h, p["w2"], s=stride, pad=1, groups=G),
                       p["g2"], p["b2"]), 0.0)
    h = gn(conv(h, p["w3"]), p["g3"], p["b3"])
    out = jnp.maximum(h + skip, 0.0)
    return jnp.transpose(out, (0, 3, 1, 2))


# -----------------------------------------------------------------------------
if __name__ == "__main__":
    key = jax.random.PRNGKey(0)

    def make_params(k, Cin, Cout, gw, sc=0.1):
        ks = jax.random.split(k, 12)
        return dict(
            w1=sc * jax.random.normal(ks[0], (Cout, Cin, 1, 1), jnp.float32),
            g1=1.0 + 0.1 * jax.random.normal(ks[1], (Cout,), jnp.float32),
            b1=0.1 * jax.random.normal(ks[2], (Cout,), jnp.float32),
            w2=sc * jax.random.normal(ks[3], (Cout, gw, 3, 3), jnp.float32),
            g2=1.0 + 0.1 * jax.random.normal(ks[4], (Cout,), jnp.float32),
            b2=0.1 * jax.random.normal(ks[5], (Cout,), jnp.float32),
            w3=sc * jax.random.normal(ks[6], (Cout, Cout, 1, 1), jnp.float32),
            g3=1.0 + 0.1 * jax.random.normal(ks[7], (Cout,), jnp.float32),
            b3=0.1 * jax.random.normal(ks[8], (Cout,), jnp.float32),
            w_ds=sc * jax.random.normal(ks[9], (Cout, Cin, 1, 1), jnp.float32),
            g_ds=1.0 + 0.1 * jax.random.normal(ks[10], (Cout,), jnp.float32),
            b_ds=0.1 * jax.random.normal(ks[11], (Cout,), jnp.float32),
        )

    # --- Config A: stride=2, Cin != Cout (AvgPool + 1x1 + GN downsample) ---
    N, Cin, H, W = 2, 8, 16, 16
    Cout, group_width, stride = 16, 8, 2
    kp, kx, key = jax.random.split(key, 3)
    p = make_params(kp, Cin, Cout, group_width)
    x = jax.random.normal(kx, (N, Cin, H, W), jnp.float32)
    ref = ref_forward(x, p, stride, group_width)

    # f32 compute path: tight correctness check vs. pure-JAX reference.
    fwd_f32 = jax.jit(lambda xx: regnetx_block_forward(
        xx, p, stride, group_width, compute_dtype=jnp.float32))
    out_f32 = jax.block_until_ready(fwd_f32(x))
    assert out_f32.shape == (N, Cout, H // stride, W // stride), out_f32.shape
    np.testing.assert_allclose(np.asarray(out_f32), np.asarray(ref),
                               atol=2e-3, rtol=2e-3)

    # bf16 compute path (production defaults): run + loose sanity check.
    fwd_bf16 = jax.jit(lambda xx: regnetx_block_forward(
        xx, p, stride, group_width, compute_dtype=jnp.bfloat16))
    out_bf16 = jax.block_until_ready(fwd_bf16(x))
    assert bool(jnp.isfinite(out_bf16).all())
    np.testing.assert_allclose(np.asarray(out_bf16), np.asarray(ref),
                               atol=0.15, rtol=0.05)

    # --- Config B: stride=1, Cin == Cout (identity skip) ---
    N2, C2, H2, W2 = 2, 16, 8, 8
    kp2, kx2 = jax.random.split(key)
    p2 = make_params(kp2, C2, C2, group_width)
    x2 = jax.random.normal(kx2, (N2, C2, H2, W2), jnp.float32)
    fwd2 = jax.jit(lambda xx: regnetx_block_forward(
        xx, p2, 1, group_width, compute_dtype=jnp.float32))
    out2 = jax.block_until_ready(fwd2(x2))
    ref2 = ref_forward(x2, p2, 1, group_width)
    np.testing.assert_allclose(np.asarray(out2), np.asarray(ref2),
                               atol=2e-3, rtol=2e-3)

    print("KERNEL_OK")
</pallas_src>

<mosaic_0001>
module attributes {stable_mosaic.version = 11 : i64} {
  func.func @_mm_gn_kernel(%arg0: i32, %arg1: memref<1x256x8xf32, #tpu.memory_space<vmem>>, %arg2: memref<8x16xf32, #tpu.memory_space<vmem>>, %arg3: memref<1x16xf32, #tpu.memory_space<vmem>>, %arg4: memref<1x16xf32, #tpu.memory_space<vmem>>, %arg5: memref<16x16xf32, #tpu.memory_space<vmem>>, %arg6: memref<1x256x16xf32, #tpu.memory_space<vmem>>) attributes {dimension_semantics = [#tpu.dimension_semantics<parallel>], iteration_bounds = array<i64: 2>, scalar_prefetch = 0 : i64, scratch_operands = 0 : i64, tpu.core_type = #tpu.core_type<tc>, window_params = [{transform_indices = @transform_0, window_bounds = array<i64: 1, 256, 8>}, {pipeline_mode = #tpu.pipeline_mode<synchronous>, transform_indices = @transform_1, window_bounds = array<i64: 8, 16>}, {pipeline_mode = #tpu.pipeline_mode<synchronous>, transform_indices = @transform_2, window_bounds = array<i64: 1, 16>}, {pipeline_mode = #tpu.pipeline_mode<synchronous>, transform_indices = @transform_3, window_bounds = array<i64: 1, 16>}, {pipeline_mode = #tpu.pipeline_mode<synchronous>, transform_indices = @transform_4, window_bounds = array<i64: 16, 16>}, {transform_indices = @transform_5, window_bounds = array<i64: 1, 256, 16>}]} {
    %c0 = arith.constant 0 : index
    %c0_0 = arith.constant 0 : index
    %c0_1 = arith.constant 0 : index
    %0 = vector.load %arg1[%c0, %c0_0, %c0_1] : memref<1x256x8xf32, #tpu.memory_space<vmem>>, vector<1x256x8xf32>
    %1 = vector.shape_cast %0 : vector<1x256x8xf32> to vector<256x8xf32>
    %c0_2 = arith.constant 0 : index
    %c0_3 = arith.constant 0 : index
    %2 = vector.load %arg2[%c0_2, %c0_3] : memref<8x16xf32, #tpu.memory_space<vmem>>, vector<8x16xf32>
    %cst = arith.constant dense<0.000000e+00> : vector<256x16xf32>
    %3 = tpu.matmul %1, %2, %cst {dimension_numbers = #tpu.dot_dimension_numbers<[1], [0], [0], [1], [0, 0, 1, 1], [], []>} : vector<256x8xf32>, vector<8x16xf32>, vector<256x16xf32> -> vector<256x16xf32>
    %c0_4 = arith.constant 0 : index
    %c0_5 = arith.constant 0 : index
    %4 = vector.load %arg5[%c0_4, %c0_5] : memref<16x16xf32, #tpu.memory_space<vmem>>, vector<16x16xf32>
    %cst_6 = arith.constant dense<0.000000e+00> : vector<16xf32>
    %5 = vector.multi_reduction <add>, %3, %cst_6 [0] : vector<256x16xf32> to vector<16xf32>
    %6 = vector.shape_cast %5 : vector<16xf32> to vector<1x16xf32>
    %cst_7 = arith.constant dense<0.000000e+00> : vector<1x16xf32>
    %7 = tpu.matmul %6, %4, %cst_7 {dimension_numbers = #tpu.dot_dimension_numbers<[1], [0], [0], [1], [0, 0, 1, 1], [], []>} : vector<1x16xf32>, vector<16x16xf32>, vector<1x16xf32> -> vector<1x16xf32>
    %cst_8 = arith.constant 4.8828125E-4 : f32
    %8 = vector.broadcast %cst_8 : f32 to vector<1x16xf32>
    %9 = arith.mulf %7, %8 : vector<1x16xf32>
    %10 = vector.broadcast %9 : vector<1x16xf32> to vector<256x16xf32>
    %11 = arith.subf %3, %10 : vector<256x16xf32>
    %12 = arith.mulf %11, %11 : vector<256x16xf32>
    %cst_9 = arith.constant dense<0.000000e+00> : vector<16xf32>
    %13 = vector.multi_reduction <add>, %12, %cst_9 [0] : vector<256x16xf32> to vector<16xf32>
    %14 = vector.shape_cast %13 : vector<16xf32> to vector<1x16xf32>
    %cst_10 = arith.constant dense<0.000000e+00> : vector<1x16xf32>
    %15 = tpu.matmul %14, %4, %cst_10 {dimension_numbers = #tpu.dot_dimension_numbers<[1], [0], [0], [1], [0, 0, 1, 1], [], []>} : vector<1x16xf32>, vector<16x16xf32>, vector<1x16xf32> -> vector<1x16xf32>
    %cst_11 = arith.constant 4.8828125E-4 : f32
    %16 = vector.broadcast %cst_11 : f32 to vector<1x16xf32>
    %17 = arith.mulf %15, %16 : vector<1x16xf32>
    %cst_12 = arith.constant 9.99999974E-6 : f32
    %18 = vector.broadcast %cst_12 : f32 to vector<1x16xf32>
    %19 = arith.addf %17, %18 : vector<1x16xf32>
    %20 = math.rsqrt %19 : vector<1x16xf32>
    %21 = vector.broadcast %20 : vector<1x16xf32> to vector<256x16xf32>
    %22 = arith.mulf %11, %21 : vector<256x16xf32>
    %c0_13 = arith.constant 0 : index
    %c0_14 = arith.constant 0 : index
    %23 = vector.load %arg3[%c0_13, %c0_14] : memref<1x16xf32, #tpu.memory_space<vmem>>, vector<1x16xf32>
    %24 = vector.broadcast %23 : vector<1x16xf32> to vector<256x16xf32>
    %25 = arith.mulf %22, %24 : vector<256x16xf32>
    %c0_15 = arith.constant 0 : index
    %c0_16 = arith.constant 0 : index
    %26 = vector.load %arg4[%c0_15, %c0_16] : memref<1x16xf32, #tpu.memory_space<vmem>>, vector<1x16xf32>
    %27 = vector.broadcast %26 : vector<1x16xf32> to vector<256x16xf32>
    %28 = arith.addf %25, %27 : vector<256x16xf32>
    %cst_17 = arith.constant 0.000000e+00 : f32
    %29 = vector.broadcast %cst_17 : f32 to vector<256x16xf32>
    %30 = arith.maximumf %28, %29 : vector<256x16xf32>
    %c0_18 = arith.constant 0 : index
    %c0_19 = arith.constant 0 : index
    %c0_20 = arith.constant 0 : index
    %31 = vector.load %arg6[%c0_18, %c0_19, %c0_20] : memref<1x256x16xf32, #tpu.memory_space<vmem>>, vector<1x256x16xf32>
    %32 = vector.shape_cast %31 : vector<1x256x16xf32> to vector<256x16xf32>
    %33 = vector.shape_cast %30 : vector<256x16xf32> to vector<1x256x16xf32>
    tpu.vector_store %arg6[%c0_18, %c0_19, %c0_20], %33 {strides = array<i32>} : memref<1x256x16xf32, #tpu.memory_space<vmem>>, vector<1x256x16xf32>,
    return
  }
  func.func @transform_0(%arg0: i32) -> (i32, i32, i32) {
    %c0_i32 = arith.constant 0 : i32
    %c0_i32_0 = arith.constant 0 : i32
    %c0_i32_1 = arith.constant 0 : i32
    return %arg0, %c0_i32, %c0_i32_0 : i32, i32, i32
  }
  func.func @transform_1(%arg0: i32) -> (i32, i32) {
    %c0_i32 = arith.constant 0 : i32
    %c0_i32_0 = arith.constant 0 : i32
    %c0_i32_1 = arith.constant 0 : i32
    return %c0_i32, %c0_i32_0 : i32, i32
  }
  func.func @transform_2(%arg0: i32) -> (i32, i32) {
    %c0_i32 = arith.constant 0 : i32
    %c0_i32_0 = arith.constant 0 : i32
    %c0_i32_1 = arith.constant 0 : i32
    return %c0_i32, %c0_i32_0 : i32, i32
  }
  func.func @transform_3(%arg0: i32) -> (i32, i32) {
    %c0_i32 = arith.constant 0 : i32
    %c0_i32_0 = arith.constant 0 : i32
    %c0_i32_1 = arith.constant 0 : i32
    return %c0_i32, %c0_i32_0 : i32, i32
  }
  func.func @transform_4(%arg0: i32) -> (i32, i32) {
    %c0_i32 = arith.constant 0 : i32
    %c0_i32_0 = arith.constant 0 : i32
    %c0_i32_1 = arith.constant 0 : i32
    return %c0_i32, %c0_i32_0 : i32, i32
  }
  func.func @transform_5(%arg0: i32) -> (i32, i32, i32) {
    %c0_i32 = arith.constant 0 : i32
    %c0_i32_0 = arith.constant 0 : i32
    %c0_i32_1 = arith.constant 0 : i32
    return %arg0, %c0_i32, %c0_i32_0 : i32, i32, i32
  }
}

module attributes {stable_mosaic.version = 11 : i64} {
  func.func @_mm_gn_kernel(%arg0: i32, %arg1: memref<1x64x16xf32, #tpu.memory_space<vmem>>, %arg2: memref<16x16xf32, #tpu.memory_space<vmem>>, %arg3: memref<1x16xf32, #tpu.memory_space<vmem>>, %arg4: memref<1x16xf32, #tpu.memory_space<vmem>>, %arg5: memref<16x16xf32, #tpu.memory_space<vmem>>, %arg6: memref<1x64x16xf32, #tpu.memory_space<vmem>>, %arg7: memref<1x64x16xf32, #tpu.memory_space<vmem>>) attributes {dimension_semantics = [#tpu.dimension_semantics<parallel>], iteration_bounds = array<i64: 2>, scalar_prefetch = 0 : i64, scratch_operands = 0 : i64, tpu.core_type = #tpu.core_type<tc>, window_params = [{transform_indices = @transform_0, window_bounds = array<i64: 1, 64, 16>}, {pipeline_mode = #tpu.pipeline_mode<synchronous>, transform_indices = @transform_1, window_bounds = array<i64: 16, 16>}, {pipeline_mode = #tpu.pipeline_mode<synchronous>, transform_indices = @transform_2, window_bounds = array<i64: 1, 16>}, {pipeline_mode = #tpu.pipeline_mode<synchronous>, transform_indices = @transform_3, window_bounds = array<i64: 1, 16>}, {pipeline_mode = #tpu.pipeline_mode<synchronous>, transform_indices = @transform_4, window_bounds = array<i64: 16, 16>}, {transform_indices = @transform_5, window_bounds = array<i64: 1, 64, 16>}, {transform_indices = @transform_6, window_bounds = array<i64: 1, 64, 16>}]} {
    %c0 = arith.constant 0 : index
    %c0_0 = arith.constant 0 : index
    %c0_1 = arith.constant 0 : index
    %0 = vector.load %arg1[%c0, %c0_0, %c0_1] : memref<1x64x16xf32, #tpu.memory_space<vmem>>, vector<1x64x16xf32>
    %1 = vector.shape_cast %0 : vector<1x64x16xf32> to vector<64x16xf32>
    %c0_2 = arith.constant 0 : index
    %c0_3 = arith.constant 0 : index
    %2 = vector.load %arg2[%c0_2, %c0_3] : memref<16x16xf32, #tpu.memory_space<vmem>>, vector<16x16xf32>
    %cst = arith.constant dense<0.000000e+00> : vector<64x16xf32>
    %3 = tpu.matmul %1, %2, %cst {dimension_numbers = #tpu.dot_dimension_numbers<[1], [0], [0], [1], [0, 0, 1, 1], [], []>} : vector<64x16xf32>, vector<16x16xf32>, vector<64x16xf32> -> vector<64x16xf32>
    %c0_4 = arith.constant 0 : index
    %c0_5 = arith.constant 0 : index
    %4 = vector.load %arg5[%c0_4, %c0_5] : memref<16x16xf32, #tpu.memory_space<vmem>>, vector<16x16xf32>
    %cst_6 = arith.constant dense<0.000000e+00> : vector<16xf32>
    %5 = vector.multi_reduction <add>, %3, %cst_6 [0] : vector<64x16xf32> to vector<16xf32>
    %6 = vector.shape_cast %5 : vector<16xf32> to vector<1x16xf32>
    %cst_7 = arith.constant dense<0.000000e+00> : vector<1x16xf32>
    %7 = tpu.matmul %6, %4, %cst_7 {dimension_numbers = #tpu.dot_dimension_numbers<[1], [0], [0], [1], [0, 0, 1, 1], [], []>} : vector<1x16xf32>, vector<16x16xf32>, vector<1x16xf32> -> vector<1x16xf32>
    %cst_8 = arith.constant 0.001953125 : f32
    %8 = vector.broadcast %cst_8 : f32 to vector<1x16xf32>
    %9 = arith.mulf %7, %8 : vector<1x16xf32>
    %10 = vector.broadcast %9 : vector<1x16xf32> to vector<64x16xf32>
    %11 = arith.subf %3, %10 : vector<64x16xf32>
    %12 = arith.mulf %11, %11 : vector<64x16xf32>
    %cst_9 = arith.constant dense<0.000000e+00> : vector<16xf32>
    %13 = vector.multi_reduction <add>, %12, %cst_9 [0] : vector<64x16xf32> to vector<16xf32>
    %14 = vector.shape_cast %13 : vector<16xf32> to vector<1x16xf32>
    %cst_10 = arith.constant dense<0.000000e+00> : vector<1x16xf32>
    %15 = tpu.matmul %14, %4, %cst_10 {dimension_numbers = #tpu.dot_dimension_numbers<[1], [0], [0], [1], [0, 0, 1, 1], [], []>} : vector<1x16xf32>, vector<16x16xf32>, vector<1x16xf32> -> vector<1x16xf32>
    %cst_11 = arith.constant 0.001953125 : f32
    %16 = vector.broadcast %cst_11 : f32 to vector<1x16xf32>
    %17 = arith.mulf %15, %16 : vector<1x16xf32>
    %cst_12 = arith.constant 9.99999974E-6 : f32
    %18 = vector.broadcast %cst_12 : f32 to vector<1x16xf32>
    %19 = arith.addf %17, %18 : vector<1x16xf32>
    %20 = math.rsqrt %19 : vector<1x16xf32>
    %21 = vector.broadcast %20 : vector<1x16xf32> to vector<64x16xf32>
    %22 = arith.mulf %11, %21 : vector<64x16xf32>
    %c0_13 = arith.constant 0 : index
    %c0_14 = arith.constant 0 : index
    %23 = vector.load %arg3[%c0_13, %c0_14] : memref<1x16xf32, #tpu.memory_space<vmem>>, vector<1x16xf32>
    %24 = vector.broadcast %23 : vector<1x16xf32> to vector<64x16xf32>
    %25 = arith.mulf %22, %24 : vector<64x16xf32>
    %c0_15 = arith.constant 0 : index
    %c0_16 = arith.constant 0 : index
    %26 = vector.load %arg4[%c0_15, %c0_16] : memref<1x16xf32, #tpu.memory_space<vmem>>, vector<1x16xf32>
    %27 = vector.broadcast %26 : vector<1x16xf32> to vector<64x16xf32>
    %28 = arith.addf %25, %27 : vector<64x16xf32>
    %c0_17 = arith.constant 0 : index
    %c0_18 = arith.constant 0 : index
    %c0_19 = arith.constant 0 : index
    %29 = vector.load %arg6[%c0_17, %c0_18, %c0_19] : memref<1x64x16xf32, #tpu.memory_space<vmem>>, vector<1x64x16xf32>
    %30 = vector.shape_cast %29 : vector<1x64x16xf32> to vector<64x16xf32>
    %31 = arith.addf %28, %30 : vector<64x16xf32>
    %cst_20 = arith.constant 0.000000e+00 : f32
    %32 = vector.broadcast %cst_20 : f32 to vector<64x16xf32>
    %33 = arith.maximumf %31, %32 : vector<64x16xf32>
    %c0_21 = arith.constant 0 : index
    %c0_22 = arith.constant 0 : index
    %c0_23 = arith.constant 0 : index
    %34 = vector.load %arg7[%c0_21, %c0_22, %c0_23] : memref<1x64x16xf32, #tpu.memory_space<vmem>>, vector<1x64x16xf32>
    %35 = vector.shape_cast %34 : vector<1x64x16xf32> to vector<64x16xf32>
    %36 = vector.shape_cast %33 : vector<64x16xf32> to vector<1x64x16xf32>
    tpu.vector_store %arg7[%c0_21, %c0_22, %c0_23], %36 {strides = array<i32>} : memref<1x64x16xf32, #tpu.memory_space<vmem>>, vector<1x64x16xf32>,
    return
  }
  func.func @transform_0(%arg0: i32) -> (i32, i32, i32) {
    %c0_i32 = arith.constant 0 : i32
    %c0_i32_0 = arith.constant 0 : i32
    %c0_i32_1 = arith.constant 0 : i32
    return %arg0, %c0_i32, %c0_i32_0 : i32, i32, i32
  }
  func.func @transform_1(%arg0: i32) -> (i32, i32) {
    %c0_i32 = arith.constant 0 : i32
    %c0_i32_0 = arith.constant 0 : i32
    %c0_i32_1 = arith.constant 0 : i32
    return %c0_i32, %c0_i32_0 : i32, i32
  }
  func.func @transform_2(%arg0: i32) -> (i32, i32) {
    %c0_i32 = arith.constant 0 : i32
    %c0_i32_0 = arith.constant 0 : i32
    %c0_i32_1 = arith.constant 0 : i32
    return %c0_i32, %c0_i32_0 : i32, i32
  }
  func.func @transform_3(%arg0: i32) -> (i32, i32) {
    %c0_i32 = arith.constant 0 : i32
    %c0_i32_0 = arith.constant 0 : i32
    %c0_i32_1 = arith.constant 0 : i32
    return %c0_i32, %c0_i32_0 : i32, i32
  }
  func.func @transform_4(%arg0: i32) -> (i32, i32) {
    %c0_i32 = arith.constant 0 : i32
    %c0_i32_0 = arith.constant 0 : i32
    %c0_i32_1 = arith.constant 0 : i32
    return %c0_i32, %c0_i32_0 : i32, i32
  }
  func.func @transform_5(%arg0: i32) -> (i32, i32, i32) {
    %c0_i32 = arith.constant 0 : i32
    %c0_i32_0 = arith.constant 0 : i32
    %c0_i32_1 = arith.constant 0 : i32
    return %arg0, %c0_i32, %c0_i32_0 : i32, i32, i32
  }
  func.func @transform_6(%arg0: i32) -> (i32, i32, i32) {
    %c0_i32 = arith.constant 0 : i32
    %c0_i32_0 = arith.constant 0 : i32
    %c0_i32_1 = arith.constant 0 : i32
    return %arg0, %c0_i32, %c0_i32_0 : i32, i32, i32
  }
}

module attributes {stable_mosaic.version = 11 : i64} {
  func.func @_mm_gn_kernel(%arg0: i32, %arg1: memref<1x64x8xf32, #tpu.memory_space<vmem>>, %arg2: memref<8x16xf32, #tpu.memory_space<vmem>>, %arg3: memref<1x16xf32, #tpu.memory_space<vmem>>, %arg4: memref<1x16xf32, #tpu.memory_space<vmem>>, %arg5: memref<16x16xf32, #tpu.memory_space<vmem>>, %arg6: memref<1x64x16xf32, #tpu.memory_space<vmem>>) attributes {dimension_semantics = [#tpu.dimension_semantics<parallel>], iteration_bounds = array<i64: 2>, scalar_prefetch = 0 : i64, scratch_operands = 0 : i64, tpu.core_type = #tpu.core_type<tc>, window_params = [{transform_indices = @transform_0, window_bounds = array<i64: 1, 64, 8>}, {pipeline_mode = #tpu.pipeline_mode<synchronous>, transform_indices = @transform_1, window_bounds = array<i64: 8, 16>}, {pipeline_mode = #tpu.pipeline_mode<synchronous>, transform_indices = @transform_2, window_bounds = array<i64: 1, 16>}, {pipeline_mode = #tpu.pipeline_mode<synchronous>, transform_indices = @transform_3, window_bounds = array<i64: 1, 16>}, {pipeline_mode = #tpu.pipeline_mode<synchronous>, transform_indices = @transform_4, window_bounds = array<i64: 16, 16>}, {transform_indices = @transform_5, window_bounds = array<i64: 1, 64, 16>}]} {
    %c0 = arith.constant 0 : index
    %c0_0 = arith.constant 0 : index
    %c0_1 = arith.constant 0 : index
    %0 = vector.load %arg1[%c0, %c0_0, %c0_1] : memref<1x64x8xf32, #tpu.memory_space<vmem>>, vector<1x64x8xf32>
    %1 = vector.shape_cast %0 : vector<1x64x8xf32> to vector<64x8xf32>
    %c0_2 = arith.constant 0 : index
    %c0_3 = arith.constant 0 : index
    %2 = vector.load %arg2[%c0_2, %c0_3] : memref<8x16xf32, #tpu.memory_space<vmem>>, vector<8x16xf32>
    %cst = arith.constant dense<0.000000e+00> : vector<64x16xf32>
    %3 = tpu.matmul %1, %2, %cst {dimension_numbers = #tpu.dot_dimension_numbers<[1], [0], [0], [1], [0, 0, 1, 1], [], []>} : vector<64x8xf32>, vector<8x16xf32>, vector<64x16xf32> -> vector<64x16xf32>
    %c0_4 = arith.constant 0 : index
    %c0_5 = arith.constant 0 : index
    %4 = vector.load %arg5[%c0_4, %c0_5] : memref<16x16xf32, #tpu.memory_space<vmem>>, vector<16x16xf32>
    %cst_6 = arith.constant dense<0.000000e+00> : vector<16xf32>
    %5 = vector.multi_reduction <add>, %3, %cst_6 [0] : vector<64x16xf32> to vector<16xf32>
    %6 = vector.shape_cast %5 : vector<16xf32> to vector<1x16xf32>
    %cst_7 = arith.constant dense<0.000000e+00> : vector<1x16xf32>
    %7 = tpu.matmul %6, %4, %cst_7 {dimension_numbers = #tpu.dot_dimension_numbers<[1], [0], [0], [1], [0, 0, 1, 1], [], []>} : vector<1x16xf32>, vector<16x16xf32>, vector<1x16xf32> -> vector<1x16xf32>
    %cst_8 = arith.constant 0.001953125 : f32
    %8 = vector.broadcast %cst_8 : f32 to vector<1x16xf32>
    %9 = arith.mulf %7, %8 : vector<1x16xf32>
    %10 = vector.broadcast %9 : vector<1x16xf32> to vector<64x16xf32>
    %11 = arith.subf %3, %10 : vector<64x16xf32>
    %12 = arith.mulf %11, %11 : vector<64x16xf32>
    %cst_9 = arith.constant dense<0.000000e+00> : vector<16xf32>
    %13 = vector.multi_reduction <add>, %12, %cst_9 [0] : vector<64x16xf32> to vector<16xf32>
    %14 = vector.shape_cast %13 : vector<16xf32> to vector<1x16xf32>
    %cst_10 = arith.constant dense<0.000000e+00> : vector<1x16xf32>
    %15 = tpu.matmul %14, %4, %cst_10 {dimension_numbers = #tpu.dot_dimension_numbers<[1], [0], [0], [1], [0, 0, 1, 1], [], []>} : vector<1x16xf32>, vector<16x16xf32>, vector<1x16xf32> -> vector<1x16xf32>
    %cst_11 = arith.constant 0.001953125 : f32
    %16 = vector.broadcast %cst_11 : f32 to vector<1x16xf32>
    %17 = arith.mulf %15, %16 : vector<1x16xf32>
    %cst_12 = arith.constant 9.99999974E-6 : f32
    %18 = vector.broadcast %cst_12 : f32 to vector<1x16xf32>
    %19 = arith.addf %17, %18 : vector<1x16xf32>
    %20 = math.rsqrt %19 : vector<1x16xf32>
    %21 = vector.broadcast %20 : vector<1x16xf32> to vector<64x16xf32>
    %22 = arith.mulf %11, %21 : vector<64x16xf32>
    %c0_13 = arith.constant 0 : index
    %c0_14 = arith.constant 0 : index
    %23 = vector.load %arg3[%c0_13, %c0_14] : memref<1x16xf32, #tpu.memory_space<vmem>>, vector<1x16xf32>
    %24 = vector.broadcast %23 : vector<1x16xf32> to vector<64x16xf32>
    %25 = arith.mulf %22, %24 : vector<64x16xf32>
    %c0_15 = arith.constant 0 : index
    %c0_16 = arith.constant 0 : index
    %26 = vector.load %arg4[%c0_15, %c0_16] : memref<1x16xf32, #tpu.memory_space<vmem>>, vector<1x16xf32>
    %27 = vector.broadcast %26 : vector<1x16xf32> to vector<64x16xf32>
    %28 = arith.addf %25, %27 : vector<64x16xf32>
    %c0_17 = arith.constant 0 : index
    %c0_18 = arith.constant 0 : index
    %c0_19 = arith.constant 0 : index
    %29 = vector.load %arg6[%c0_17, %c0_18, %c0_19] : memref<1x64x16xf32, #tpu.memory_space<vmem>>, vector<1x64x16xf32>
    %30 = vector.shape_cast %29 : vector<1x64x16xf32> to vector<64x16xf32>
    %31 = vector.shape_cast %28 : vector<64x16xf32> to vector<1x64x16xf32>
    tpu.vector_store %arg6[%c0_17, %c0_18, %c0_19], %31 {strides = array<i32>} : memref<1x64x16xf32, #tpu.memory_space<vmem>>, vector<1x64x16xf32>,
    return
  }
  func.func @transform_0(%arg0: i32) -> (i32, i32, i32) {
    %c0_i32 = arith.constant 0 : i32
    %c0_i32_0 = arith.constant 0 : i32
    %c0_i32_1 = arith.constant 0 : i32
    return %arg0, %c0_i32, %c0_i32_0 : i32, i32, i32
  }
  func.func @transform_1(%arg0: i32) -> (i32, i32) {
    %c0_i32 = arith.constant 0 : i32
    %c0_i32_0 = arith.constant 0 : i32
    %c0_i32_1 = arith.constant 0 : i32
    return %c0_i32, %c0_i32_0 : i32, i32
  }
  func.func @transform_2(%arg0: i32) -> (i32, i32) {
    %c0_i32 = arith.constant 0 : i32
    %c0_i32_0 = arith.constant 0 : i32
    %c0_i32_1 = arith.constant 0 : i32
    return %c0_i32, %c0_i32_0 : i32, i32
  }
  func.func @transform_3(%arg0: i32) -> (i32, i32) {
    %c0_i32 = arith.constant 0 : i32
    %c0_i32_0 = arith.constant 0 : i32
    %c0_i32_1 = arith.constant 0 : i32
    return %c0_i32, %c0_i32_0 : i32, i32
  }
  func.func @transform_4(%arg0: i32) -> (i32, i32) {
    %c0_i32 = arith.constant 0 : i32
    %c0_i32_0 = arith.constant 0 : i32
    %c0_i32_1 = arith.constant 0 : i32
    return %c0_i32, %c0_i32_0 : i32, i32
  }
  func.func @transform_5(%arg0: i32) -> (i32, i32, i32) {
    %c0_i32 = arith.constant 0 : i32
    %c0_i32_0 = arith.constant 0 : i32
    %c0_i32_1 = arith.constant 0 : i32
    return %arg0, %c0_i32, %c0_i32_0 : i32, i32, i32
  }
}

module attributes {stable_mosaic.version = 11 : i64} {
  func.func @_gconv_gn_relu_kernel(%arg0: i32, %arg1: memref<1x4x81x16xf32, #tpu.memory_space<vmem>>, %arg2: memref<9x16x16xf32, #tpu.memory_space<vmem>>, %arg3: memref<71x1xf32, #tpu.memory_space<vmem>>, %arg4: memref<1x16xf32, #tpu.memory_space<vmem>>, %arg5: memref<1x16xf32, #tpu.memory_space<vmem>>, %arg6: memref<16x16xf32, #tpu.memory_space<vmem>>, %arg7: memref<1x8x8x16xf32, #tpu.memory_space<vmem>>, %arg8: memref<71x16xf32, #tpu.memory_space<vmem>>) attributes {dimension_semantics = [#tpu.dimension_semantics<parallel>], iteration_bounds = array<i64: 2>, scalar_prefetch = 0 : i64, scratch_operands = 1 : i64, tpu.core_type = #tpu.core_type<tc>, window_params = [{transform_indices = @transform_0, window_bounds = array<i64: 1, 4, 81, 16>}, {pipeline_mode = #tpu.pipeline_mode<synchronous>, transform_indices = @transform_1, window_bounds = array<i64: 9, 16, 16>}, {pipeline_mode = #tpu.pipeline_mode<synchronous>, transform_indices = @transform_2, window_bounds = array<i64: 71, 1>}, {pipeline_mode = #tpu.pipeline_mode<synchronous>, transform_indices = @transform_3, window_bounds = array<i64: 1, 16>}, {pipeline_mode = #tpu.pipeline_mode<synchronous>, transform_indices = @transform_4, window_bounds = array<i64: 1, 16>}, {pipeline_mode = #tpu.pipeline_mode<synchronous>, transform_indices = @transform_5, window_bounds = array<i64: 16, 16>}, {transform_indices = @transform_6, window_bounds = array<i64: 1, 8, 8, 16>}]} {
    %cst = arith.constant 0.000000e+00 : f32
    %0 = vector.broadcast %cst : f32 to vector<71x16xf32>
    %c0 = arith.constant 0 : index
    %c0_0 = arith.constant 0 : index
    %1 = vector.load %arg8[%c0, %c0_0] : memref<71x16xf32, #tpu.memory_space<vmem>>, vector<71x16xf32>
    tpu.vector_store %arg8[%c0, %c0_0], %0 {strides = array<i32>} : memref<71x16xf32, #tpu.memory_space<vmem>>, vector<71x16xf32>,
    %c0_1 = arith.constant 0 : index
    %c0_2 = arith.constant 0 : index
    %c0_3 = arith.constant 0 : index
    %c0_4 = arith.constant 0 : index
    %2 = vector.load %arg1[%c0_1, %c0_2, %c0_3, %c0_4] : memref<1x4x81x16xf32, #tpu.memory_space<vmem>>, vector<1x1x71x16xf32>
    %3 = vector.shape_cast %2 : vector<1x1x71x16xf32> to vector<71x16xf32>
    %c0_5 = arith.constant 0 : index
    %c0_6 = arith.constant 0 : index
    %4 = vector.load %arg8[%c0_5, %c0_6] : memref<71x16xf32, #tpu.memory_space<vmem>>, vector<71x16xf32>
    %c0_7 = arith.constant 0 : index
    %c0_8 = arith.constant 0 : index
    %c0_9 = arith.constant 0 : index
    %5 = vector.load %arg2[%c0_7, %c0_8, %c0_9] : memref<9x16x16xf32, #tpu.memory_space<vmem>>, vector<1x16x16xf32>
    %6 = vector.shape_cast %5 : vector<1x16x16xf32> to vector<16x16xf32>
    %cst_10 = arith.constant dense<0.000000e+00> : vector<71x16xf32>
    %7 = tpu.matmul %3, %6, %cst_10 {dimension_numbers = #tpu.dot_dimension_numbers<[1], [0], [0], [1], [0, 0, 1, 1], [], []>} : vector<71x16xf32>, vector<16x16xf32>, vector<71x16xf32> -> vector<71x16xf32>
    %8 = arith.addf %4, %7 : vector<71x16xf32>
    %c0_11 = arith.constant 0 : index
    %c0_12 = arith.constant 0 : index
    %9 = vector.load %arg8[%c0_11, %c0_12] : memref<71x16xf32, #tpu.memory_space<vmem>>, vector<71x16xf32>
    tpu.vector_store %arg8[%c0_11, %c0_12], %8 {strides = array<i32>} : memref<71x16xf32, #tpu.memory_space<vmem>>, vector<71x16xf32>,
    %c0_13 = arith.constant 0 : index
    %c1 = arith.constant 1 : index
    %c0_14 = arith.constant 0 : index
    %c0_15 = arith.constant 0 : index
    %10 = vector.load %arg1[%c0_13, %c1, %c0_14, %c0_15] : memref<1x4x81x16xf32, #tpu.memory_space<vmem>>, vector<1x1x71x16xf32>
    %11 = vector.shape_cast %10 : vector<1x1x71x16xf32> to vector<71x16xf32>
    %c0_16 = arith.constant 0 : index
    %c0_17 = arith.constant 0 : index
    %12 = vector.load %arg8[%c0_16, %c0_17] : memref<71x16xf32, #tpu.memory_space<vmem>>, vector<71x16xf32>
    %c1_18 = arith.constant 1 : index
    %c0_19 = arith.constant 0 : index
    %c0_20 = arith.constant 0 : index
    %13 = vector.load %arg2[%c1_18, %c0_19, %c0_20] : memref<9x16x16xf32, #tpu.memory_space<vmem>>, vector<1x16x16xf32>
    %14 = vector.shape_cast %13 : vector<1x16x16xf32> to vector<16x16xf32>
    %cst_21 = arith.constant dense<0.000000e+00> : vector<71x16xf32>
    %15 = tpu.matmul %11, %14, %cst_21 {dimension_numbers = #tpu.dot_dimension_numbers<[1], [0], [0], [1], [0, 0, 1, 1], [], []>} : vector<71x16xf32>, vector<16x16xf32>, vector<71x16xf32> -> vector<71x16xf32>
    %16 = arith.addf %12, %15 : vector<71x16xf32>
    %c0_22 = arith.constant 0 : index
    %c0_23 = arith.constant 0 : index
    %17 = vector.load %arg8[%c0_22, %c0_23] : memref<71x16xf32, #tpu.memory_space<vmem>>, vector<71x16xf32>
    tpu.vector_store %arg8[%c0_22, %c0_23], %16 {strides = array<i32>} : memref<71x16xf32, #tpu.memory_space<vmem>>, vector<71x16xf32>,
    %c0_24 = arith.constant 0 : index
    %c0_25 = arith.constant 0 : index
    %c1_26 = arith.constant 1 : index
    %c0_27 = arith.constant 0 : index
    %18 = vector.load %arg1[%c0_24, %c0_25, %c1_26, %c0_27] : memref<1x4x81x16xf32, #tpu.memory_space<vmem>>, vector<1x1x71x16xf32>
    %19 = vector.shape_cast %18 : vector<1x1x71x16xf32> to vector<71x16xf32>
    %c0_28 = arith.constant 0 : index
    %c0_29 = arith.constant 0 : index
    %20 = vector.load %arg8[%c0_28, %c0_29] : memref<71x16xf32, #tpu.memory_space<vmem>>, vector<71x16xf32>
    %c2 = arith.constant 2 : index
    %c0_30 = arith.constant 0 : index
    %c0_31 = arith.constant 0 : index
    %21 = vector.load %arg2[%c2, %c0_30, %c0_31] : memref<9x16x16xf32, #tpu.memory_space<vmem>>, vector<1x16x16xf32>
    %22 = vector.shape_cast %21 : vector<1x16x16xf32> to vector<16x16xf32>
    %cst_32 = arith.constant dense<0.000000e+00> : vector<71x16xf32>
    %23 = tpu.matmul %19, %22, %cst_32 {dimension_numbers = #tpu.dot_dimension_numbers<[1], [0], [0], [1], [0, 0, 1, 1], [], []>} : vector<71x16xf32>, vector<16x16xf32>, vector<71x16xf32> -> vector<71x16xf32>
    %24 = arith.addf %20, %23 : vector<71x16xf32>
    %c0_33 = arith.constant 0 : index
    %c0_34 = arith.constant 0 : index
    %25 = vector.load %arg8[%c0_33, %c0_34] : memref<71x16xf32, #tpu.memory_space<vmem>>, vector<71x16xf32>
    tpu.vector_store %arg8[%c0_33, %c0_34], %24 {strides = array<i32>} : memref<71x16xf32, #tpu.memory_space<vmem>>, vector<71x16xf32>,
    %c0_35 = arith.constant 0 : index
    %c2_36 = arith.constant 2 : index
    %c0_37 = arith.constant 0 : index
    %c0_38 = arith.constant 0 : index
    %26 = vector.load %arg1[%c0_35, %c2_36, %c0_37, %c0_38] : memref<1x4x81x16xf32, #tpu.memory_space<vmem>>, vector<1x1x71x16xf32>
    %27 = vector.shape_cast %26 : vector<1x1x71x16xf32> to vector<71x16xf32>
    %c0_39 = arith.constant 0 : index
    %c0_40 = arith.constant 0 : index
    %28 = vector.load %arg8[%c0_39, %c0_40] : memref<71x16xf32, #tpu.memory_space<vmem>>, vector<71x16xf32>
    %c3 = arith.constant 3 : index
    %c0_41 = arith.constant 0 : index
    %c0_42 = arith.constant 0 : index
    %29 = vector.load %arg2[%c3, %c0_41, %c0_42] : memref<9x16x16xf32, #tpu.memory_space<vmem>>, vector<1x16x16xf32>
    %30 = vector.shape_cast %29 : vector<1x16x16xf32> to vector<16x16xf32>
    %cst_43 = arith.constant dense<0.000000e+00> : vector<71x16xf32>
    %31 = tpu.matmul %27, %30, %cst_43 {dimension_numbers = #tpu.dot_dimension_numbers<[1], [0], [0], [1], [0, 0, 1, 1], [], []>} : vector<71x16xf32>, vector<16x16xf32>, vector<71x16xf32> -> vector<71x16xf32>
    %32 = arith.addf %28, %31 : vector<71x16xf32>
    %c0_44 = arith.constant 0 : index
    %c0_45 = arith.constant 0 : index
    %33 = vector.load %arg8[%c0_44, %c0_45] : memref<71x16xf32, #tpu.memory_space<vmem>>, vector<71x16xf32>
    tpu.vector_store %arg8[%c0_44, %c0_45], %32 {strides = array<i32>} : memref<71x16xf32, #tpu.memory_space<vmem>>, vector<71x16xf32>,
    %c0_46 = arith.constant 0 : index
    %c3_47 = arith.constant 3 : index
    %c0_48 = arith.constant 0 : index
    %c0_49 = arith.constant 0 : index
    %34 = vector.load %arg1[%c0_46, %c3_47, %c0_48, %c0_49] : memref<1x4x81x16xf32, #tpu.memory_space<vmem>>, vector<1x1x71x16xf32>
    %35 = vector.shape_cast %34 : vector<1x1x71x16xf32> to vector<71x16xf32>
    %c0_50 = arith.constant 0 : index
    %c0_51 = arith.constant 0 : index
    %36 = vector.load %arg8[%c0_50, %c0_51] : memref<71x16xf32, #tpu.memory_space<vmem>>, vector<71x16xf32>
    %c4 = arith.constant 4 : index
    %c0_52 = arith.constant 0 : index
    %c0_53 = arith.constant 0 : index
    %37 = vector.load %arg2[%c4, %c0_52, %c0_53] : memref<9x16x16xf32, #tpu.memory_space<vmem>>, vector<1x16x16xf32>
    %38 = vector.shape_cast %37 : vector<1x16x16xf32> to vector<16x16xf32>
    %cst_54 = arith.constant dense<0.000000e+00> : vector<71x16xf32>
    %39 = tpu.matmul %35, %38, %cst_54 {dimension_numbers = #tpu.dot_dimension_numbers<[1], [0], [0], [1], [0, 0, 1, 1], [], []>} : vector<71x16xf32>, vector<16x16xf32>, vector<71x16xf32> -> vector<71x16xf32>
    %40 = arith.addf %36, %39 : vector<71x16xf32>
    %c0_55 = arith.constant 0 : index
    %c0_56 = arith.constant 0 : index
    %41 = vector.load %arg8[%c0_55, %c0_56] : memref<71x16xf32, #tpu.memory_space<vmem>>, vector<71x16xf32>
    tpu.vector_store %arg8[%c0_55, %c0_56], %40 {strides = array<i32>} : memref<71x16xf32, #tpu.memory_space<vmem>>, vector<71x16xf32>,
    %c0_57 = arith.constant 0 : index
    %c2_58 = arith.constant 2 : index
    %c1_59 = arith.constant 1 : index
    %c0_60 = arith.constant 0 : index
    %42 = vector.load %arg1[%c0_57, %c2_58, %c1_59, %c0_60] : memref<1x4x81x16xf32, #tpu.memory_space<vmem>>, vector<1x1x71x16xf32>
    %43 = vector.shape_cast %42 : vector<1x1x71x16xf32> to vector<71x16xf32>
    %c0_61 = arith.constant 0 : index
    %c0_62 = arith.constant 0 : index
    %44 = vector.load %arg8[%c0_61, %c0_62] : memref<71x16xf32, #tpu.memory_space<vmem>>, vector<71x16xf32>
    %c5 = arith.constant 5 : index
    %c0_63 = arith.constant 0 : index
    %c0_64 = arith.constant 0 : index
    %45 = vector.load %arg2[%c5, %c0_63, %c0_64] : memref<9x16x16xf32, #tpu.memory_space<vmem>>, vector<1x16x16xf32>
    %46 = vector.shape_cast %45 : vector<1x16x16xf32> to vector<16x16xf32>
    %cst_65 = arith.constant dense<0.000000e+00> : vector<71x16xf32>
    %47 = tpu.matmul %43, %46, %cst_65 {dimension_numbers = #tpu.dot_dimension_numbers<[1], [0], [0], [1], [0, 0, 1, 1], [], []>} : vector<71x16xf32>, vector<16x16xf32>, vector<71x16xf32> -> vector<71x16xf32>
    %48 = arith.addf %44, %47 : vector<71x16xf32>
    %c0_66 = arith.constant 0 : index
    %c0_67 = arith.constant 0 : index
    %49 = vector.load %arg8[%c0_66, %c0_67] : memref<71x16xf32, #tpu.memory_space<vmem>>, vector<71x16xf32>
    tpu.vector_store %arg8[%c0_66, %c0_67], %48 {strides = array<i32>} : memref<71x16xf32, #tpu.memory_space<vmem>>, vector<71x16xf32>,
    %c0_68 = arith.constant 0 : index
    %c0_69 = arith.constant 0 : index
    %c9 = arith.constant 9 : index
    %c0_70 = arith.constant 0 : index
    %50 = vector.load %arg1[%c0_68, %c0_69, %c9, %c0_70] : memref<1x4x81x16xf32, #tpu.memory_space<vmem>>, vector<1x1x71x16xf32>
    %51 = vector.shape_cast %50 : vector<1x1x71x16xf32> to vector<71x16xf32>
    %c0_71 = arith.constant 0 : index
    %c0_72 = arith.constant 0 : index
    %52 = vector.load %arg8[%c0_71, %c0_72] : memref<71x16xf32, #tpu.memory_space<vmem>>, vector<71x16xf32>
    %c6 = arith.constant 6 : index
    %c0_73 = arith.constant 0 : index
    %c0_74 = arith.constant 0 : index
    %53 = vector.load %arg2[%c6, %c0_73, %c0_74] : memref<9x16x16xf32, #tpu.memory_space<vmem>>, vector<1x16x16xf32>
    %54 = vector.shape_cast %53 : vector<1x16x16xf32> to vector<16x16xf32>
    %cst_75 = arith.constant dense<0.000000e+00> : vector<71x16xf32>
    %55 = tpu.matmul %51, %54, %cst_75 {dimension_numbers = #tpu.dot_dimension_numbers<[1], [0], [0], [1], [0, 0, 1, 1], [], []>} : vector<71x16xf32>, vector<16x16xf32>, vector<71x16xf32> -> vector<71x16xf32>
    %56 = arith.addf %52, %55 : vector<71x16xf32>
    %c0_76 = arith.constant 0 : index
    %c0_77 = arith.constant 0 : index
    %57 = vector.load %arg8[%c0_76, %c0_77] : memref<71x16xf32, #tpu.memory_space<vmem>>, vector<71x16xf32>
    tpu.vector_store %arg8[%c0_76, %c0_77], %56 {strides = array<i32>} : memref<71x16xf32, #tpu.memory_space<vmem>>, vector<71x16xf32>,
    %c0_78 = arith.constant 0 : index
    %c1_79 = arith.constant 1 : index
    %c9_80 = arith.constant 9 : index
    %c0_81 = arith.constant 0 : index
    %58 = vector.load %arg1[%c0_78, %c1_79, %c9_80, %c0_81] : memref<1x4x81x16xf32, #tpu.memory_space<vmem>>, vector<1x1x71x16xf32>
    %59 = vector.shape_cast %58 : vector<1x1x71x16xf32> to vector<71x16xf32>
    %c0_82 = arith.constant 0 : index
    %c0_83 = arith.constant 0 : index
    %60 = vector.load %arg8[%c0_82, %c0_83] : memref<71x16xf32, #tpu.memory_space<vmem>>, vector<71x16xf32>
    %c7 = arith.constant 7 : index
    %c0_84 = arith.constant 0 : index
    %c0_85 = arith.constant 0 : index
    %61 = vector.load %arg2[%c7, %c0_84, %c0_85] : memref<9x16x16xf32, #tpu.memory_space<vmem>>, vector<1x16x16xf32>
    %62 = vector.shape_cast %61 : vector<1x16x16xf32> to vector<16x16xf32>
    %cst_86 = arith.constant dense<0.000000e+00> : vector<71x16xf32>
    %63 = tpu.matmul %59, %62, %cst_86 {dimension_numbers = #tpu.dot_dimension_numbers<[1], [0], [0], [1], [0, 0, 1, 1], [], []>} : vector<71x16xf32>, vector<16x16xf32>, vector<71x16xf32> -> vector<71x16xf32>
    %64 = arith.addf %60, %63 : vector<71x16xf32>
    %c0_87 = arith.constant 0 : index
    %c0_88 = arith.constant 0 : index
    %65 = vector.load %arg8[%c0_87, %c0_88] : memref<71x16xf32, #tpu.memory_space<vmem>>, vector<71x16xf32>
    tpu.vector_store %arg8[%c0_87, %c0_88], %64 {strides = array<i32>} : memref<71x16xf32, #tpu.memory_space<vmem>>, vector<71x16xf32>,
    %c0_89 = arith.constant 0 : index
    %c0_90 = arith.constant 0 : index
    %c10 = arith.constant 10 : index
    %c0_91 = arith.constant 0 : index
    %66 = vector.load %arg1[%c0_89, %c0_90, %c10, %c0_91] : memref<1x4x81x16xf32, #tpu.memory_space<vmem>>, vector<1x1x71x16xf32>
    %67 = vector.shape_cast %66 : vector<1x1x71x16xf32> to vector<71x16xf32>
    %c0_92 = arith.constant 0 : index
    %c0_93 = arith.constant 0 : index
    %68 = vector.load %arg8[%c0_92, %c0_93] : memref<71x16xf32, #tpu.memory_space<vmem>>, vector<71x16xf32>
    %c8 = arith.constant 8 : index
    %c0_94 = arith.constant 0 : index
    %c0_95 = arith.constant 0 : index
    %69 = vector.load %arg2[%c8, %c0_94, %c0_95] : memref<9x16x16xf32, #tpu.memory_space<vmem>>, vector<1x16x16xf32>
    %70 = vector.shape_cast %69 : vector<1x16x16xf32> to vector<16x16xf32>
    %cst_96 = arith.constant dense<0.000000e+00> : vector<71x16xf32>
    %71 = tpu.matmul %67, %70, %cst_96 {dimension_numbers = #tpu.dot_dimension_numbers<[1], [0], [0], [1], [0, 0, 1, 1], [], []>} : vector<71x16xf32>, vector<16x16xf32>, vector<71x16xf32> -> vector<71x16xf32>
    %72 = arith.addf %68, %71 : vector<71x16xf32>
    %c0_97 = arith.constant 0 : index
    %c0_98 = arith.constant 0 : index
    %73 = vector.load %arg8[%c0_97, %c0_98] : memref<71x16xf32, #tpu.memory_space<vmem>>, vector<71x16xf32>
    tpu.vector_store %arg8[%c0_97, %c0_98], %72 {strides = array<i32>} : memref<71x16xf32, #tpu.memory_space<vmem>>, vector<71x16xf32>,
    %c0_99 = arith.constant 0 : index
    %c0_100 = arith.constant 0 : index
    %74 = vector.load %arg8[%c0_99, %c0_100] : memref<71x16xf32, #tpu.memory_space<vmem>>, vector<71x16xf32>
    %c0_101 = arith.constant 0 : index
    %c0_102 = arith.constant 0 : index
    %75 = vector.load %arg3[%c0_101, %c0_102] : memref<71x1xf32, #tpu.memory_space<vmem>>, vector<71x1xf32>
    %c0_103 = arith.constant 0 : index
    %c0_104 = arith.constant 0 : index
    %76 = vector.load %arg6[%c0_103, %c0_104] : memref<16x16xf32, #tpu.memory_space<vmem>>, vector<16x16xf32>
    %77 = vector.broadcast %75 : vector<71x1xf32> to vector<71x16xf32>
    %78 = arith.mulf %74, %77 : vector<71x16xf32>
    %cst_105 = arith.constant dense<0.000000e+00> : vector<16xf32>
    %79 = vector.multi_reduction <add>, %78, %cst_105 [0] : vector<71x16xf32> to vector<16xf32>
    %80 = vector.shape_cast %79 : vector<16xf32> to vector<1x16xf32>
    %cst_106 = arith.constant dense<0.000000e+00> : vector<1x16xf32>
    %81 = tpu.matmul %80, %76, %cst_106 {dimension_numbers = #tpu.dot_dimension_numbers<[1], [0], [0], [1], [0, 0, 1, 1], [], []>} : vector<1x16xf32>, vector<16x16xf32>, vector<1x16xf32> -> vector<1x16xf32>
    %cst_107 = arith.constant 0.001953125 : f32
    %82 = vector.broadcast %cst_107 : f32 to vector<1x16xf32>
    %83 = arith.mulf %81, %82 : vector<1x16xf32>
    %84 = vector.broadcast %83 : vector<1x16xf32> to vector<71x16xf32>
    %85 = arith.subf %74, %84 : vector<71x16xf32>
    %86 = arith.mulf %85, %85 : vector<71x16xf32>
    %87 = vector.broadcast %75 : vector<71x1xf32> to vector<71x16xf32>
    %88 = arith.mulf %86, %87 : vector<71x16xf32>
    %cst_108 = arith.constant dense<0.000000e+00> : vector<16xf32>
    %89 = vector.multi_reduction <add>, %88, %cst_108 [0] : vector<71x16xf32> to vector<16xf32>
    %90 = vector.shape_cast %89 : vector<16xf32> to vector<1x16xf32>
    %cst_109 = arith.constant dense<0.000000e+00> : vector<1x16xf32>
    %91 = tpu.matmul %90, %76, %cst_109 {dimension_numbers = #tpu.dot_dimension_numbers<[1], [0], [0], [1], [0, 0, 1, 1], [], []>} : vector<1x16xf32>, vector<16x16xf32>, vector<1x16xf32> -> vector<1x16xf32>
    %cst_110 = arith.constant 0.001953125 : f32
    %92 = vector.broadcast %cst_110 : f32 to vector<1x16xf32>
    %93 = arith.mulf %91, %92 : vector<1x16xf32>
    %cst_111 = arith.constant 9.99999974E-6 : f32
    %94 = vector.broadcast %cst_111 : f32 to vector<1x16xf32>
    %95 = arith.addf %93, %94 : vector<1x16xf32>
    %96 = math.rsqrt %95 : vector<1x16xf32>
    %c0_112 = arith.constant 0 : index
    %c0_113 = arith.constant 0 : index
    %97 = vector.load %arg4[%c0_112, %c0_113] : memref<1x16xf32, #tpu.memory_space<vmem>>, vector<1x16xf32>
    %98 = arith.mulf %96, %97 : vector<1x16xf32>
    %c0_114 = arith.constant 0 : index
    %c0_115 = arith.constant 0 : index
    %99 = vector.load %arg5[%c0_114, %c0_115] : memref<1x16xf32, #tpu.memory_space<vmem>>, vector<1x16xf32>
    %100 = arith.mulf %83, %98 : vector<1x16xf32>
    %101 = arith.subf %99, %100 : vector<1x16xf32>
    %c0_116 = arith.constant 0 : index
    %c0_117 = arith.constant 0 : index
    %102 = vector.load %arg8[%c0_116, %c0_117] : memref<71x16xf32, #tpu.memory_space<vmem>>, vector<8x16xf32>
    %103 = vector.broadcast %98 : vector<1x16xf32> to vector<8x16xf32>
    %104 = arith.mulf %102, %103 : vector<8x16xf32>
    %105 = vector.broadcast %101 : vector<1x16xf32> to vector<8x16xf32>
    %106 = arith.addf %104, %105 : vector<8x16xf32>
    %cst_118 = arith.constant 0.000000e+00 : f32
    %107 = vector.broadcast %cst_118 : f32 to vector<8x16xf32>
    %108 = arith.maximumf %106, %107 : vector<8x16xf32>
    %c0_119 = arith.constant 0 : index
    %c0_120 = arith.constant 0 : index
    %c0_121 = arith.constant 0 : index
    %c0_122 = arith.constant 0 : index
    %109 = vector.load %arg7[%c0_119, %c0_120, %c0_121, %c0_122] : memref<1x8x8x16xf32, #tpu.memory_space<vmem>>, vector<1x1x8x16xf32>
    %110 = vector.shape_cast %109 : vector<1x1x8x16xf32> to vector<8x16xf32>
    %111 = vector.shape_cast %108 : vector<8x16xf32> to vector<1x1x8x16xf32>
    tpu.vector_store %arg7[%c0_119, %c0_120, %c0_121, %c0_122], %111 {strides = array<i32>} : memref<1x8x8x16xf32, #tpu.memory_space<vmem>>, vector<1x1x8x16xf32>,
    %c9_123 = arith.constant 9 : index
    %c0_124 = arith.constant 0 : index
    %112 = vector.load %arg8[%c9_123, %c0_124] : memref<71x16xf32, #tpu.memory_space<vmem>>, vector<8x16xf32>
    %113 = vector.broadcast %98 : vector<1x16xf32> to vector<8x16xf32>
    %114 = arith.mulf %112, %113 : vector<8x16xf32>
    %115 = vector.broadcast %101 : vector<1x16xf32> to vector<8x16xf32>
    %116 = arith.addf %114, %115 : vector<8x16xf32>
    %cst_125 = arith.constant 0.000000e+00 : f32
    %117 = vector.broadcast %cst_125 : f32 to vector<8x16xf32>
    %118 = arith.maximumf %116, %117 : vector<8x16xf32>
    %c0_126 = arith.constant 0 : index
    %c1_127 = arith.constant 1 : index
    %c0_128 = arith.constant 0 : index
    %c0_129 = arith.constant 0 : index
    %119 = vector.load %arg7[%c0_126, %c1_127, %c0_128, %c0_129] : memref<1x8x8x16xf32, #tpu.memory_space<vmem>>, vector<1x1x8x16xf32>
    %120 = vector.shape_cast %119 : vector<1x1x8x16xf32> to vector<8x16xf32>
    %121 = vector.shape_cast %118 : vector<8x16xf32> to vector<1x1x8x16xf32>
    tpu.vector_store %arg7[%c0_126, %c1_127, %c0_128, %c0_129], %121 {strides = array<i32>} : memref<1x8x8x16xf32, #tpu.memory_space<vmem>>, vector<1x1x8x16xf32>,
    %c18 = arith.constant 18 : index
    %c0_130 = arith.constant 0 : index
    %122 = vector.load %arg8[%c18, %c0_130] : memref<71x16xf32, #tpu.memory_space<vmem>>, vector<8x16xf32>
    %123 = vector.broadcast %98 : vector<1x16xf32> to vector<8x16xf32>
    %124 = arith.mulf %122, %123 : vector<8x16xf32>
    %125 = vector.broadcast %101 : vector<1x16xf32> to vector<8x16xf32>
    %126 = arith.addf %124, %125 : vector<8x16xf32>
    %cst_131 = arith.constant 0.000000e+00 : f32
    %127 = vector.broadcast %cst_131 : f32 to vector<8x16xf32>
    %128 = arith.maximumf %126, %127 : vector<8x16xf32>
    %c0_132 = arith.constant 0 : index
    %c2_133 = arith.constant 2 : index
    %c0_134 = arith.constant 0 : index
    %c0_135 = arith.constant 0 : index
    %129 = vector.load %arg7[%c0_132, %c2_133, %c0_134, %c0_135] : memref<1x8x8x16xf32, #tpu.memory_space<vmem>>, vector<1x1x8x16xf32>
    %130 = vector.shape_cast %129 : vector<1x1x8x16xf32> to vector<8x16xf32>
    %131 = vector.shape_cast %128 : vector<8x16xf32> to vector<1x1x8x16xf32>
    tpu.vector_store %arg7[%c0_132, %c2_133, %c0_134, %c0_135], %131 {strides = array<i32>} : memref<1x8x8x16xf32, #tpu.memory_space<vmem>>, vector<1x1x8x16xf32>,
    %c27 = arith.constant 27 : index
    %c0_136 = arith.constant 0 : index
    %132 = vector.load %arg8[%c27, %c0_136] : memref<71x16xf32, #tpu.memory_space<vmem>>, vector<8x16xf32>
    %133 = vector.broadcast %98 : vector<1x16xf32> to vector<8x16xf32>
    %134 = arith.mulf %132, %133 : vector<8x16xf32>
    %135 = vector.broadcast %101 : vector<1x16xf32> to vector<8x16xf32>
    %136 = arith.addf %134, %135 : vector<8x16xf32>
    %cst_137 = arith.constant 0.000000e+00 : f32
    %137 = vector.broadcast %cst_137 : f32 to vector<8x16xf32>
    %138 = arith.maximumf %136, %137 : vector<8x16xf32>
    %c0_138 = arith.constant 0 : index
    %c3_139 = arith.constant 3 : index
    %c0_140 = arith.constant 0 : index
    %c0_141 = arith.constant 0 : index
    %139 = vector.load %arg7[%c0_138, %c3_139, %c0_140, %c0_141] : memref<1x8x8x16xf32, #tpu.memory_space<vmem>>, vector<1x1x8x16xf32>
    %140 = vector.shape_cast %139 : vector<1x1x8x16xf32> to vector<8x16xf32>
    %141 = vector.shape_cast %138 : vector<8x16xf32> to vector<1x1x8x16xf32>
    tpu.vector_store %arg7[%c0_138, %c3_139, %c0_140, %c0_141], %141 {strides = array<i32>} : memref<1x8x8x16xf32, #tpu.memory_space<vmem>>, vector<1x1x8x16xf32>,
    %c36 = arith.constant 36 : index
    %c0_142 = arith.constant 0 : index
    %142 = vector.load %arg8[%c36, %c0_142] : memref<71x16xf32, #tpu.memory_space<vmem>>, vector<8x16xf32>
    %143 = vector.broadcast %98 : vector<1x16xf32> to vector<8x16xf32>
    %144 = arith.mulf %142, %143 : vector<8x16xf32>
    %145 = vector.broadcast %101 : vector<1x16xf32> to vector<8x16xf32>
    %146 = arith.addf %144, %145 : vector<8x16xf32>
    %cst_143 = arith.constant 0.000000e+00 : f32
    %147 = vector.broadcast %cst_143 : f32 to vector<8x16xf32>
    %148 = arith.maximumf %146, %147 : vector<8x16xf32>
    %c0_144 = arith.constant 0 : index
    %c4_145 = arith.constant 4 : index
    %c0_146 = arith.constant 0 : index
    %c0_147 = arith.constant 0 : index
    %149 = vector.load %arg7[%c0_144, %c4_145, %c0_146, %c0_147] : memref<1x8x8x16xf32, #tpu.memory_space<vmem>>, vector<1x1x8x16xf32>
    %150 = vector.shape_cast %149 : vector<1x1x8x16xf32> to vector<8x16xf32>
    %151 = vector.shape_cast %148 : vector<8x16xf32> to vector<1x1x8x16xf32>
    tpu.vector_store %arg7[%c0_144, %c4_145, %c0_146, %c0_147], %151 {strides = array<i32>} : memref<1x8x8x16xf32, #tpu.memory_space<vmem>>, vector<1x1x8x16xf32>,
    %c45 = arith.constant 45 : index
    %c0_148 = arith.constant 0 : index
    %152 = vector.load %arg8[%c45, %c0_148] : memref<71x16xf32, #tpu.memory_space<vmem>>, vector<8x16xf32>
    %153 = vector.broadcast %98 : vector<1x16xf32> to vector<8x16xf32>
    %154 = arith.mulf %152, %153 : vector<8x16xf32>
    %155 = vector.broadcast %101 : vector<1x16xf32> to vector<8x16xf32>
    %156 = arith.addf %154, %155 : vector<8x16xf32>
    %cst_149 = arith.constant 0.000000e+00 : f32
    %157 = vector.broadcast %cst_149 : f32 to vector<8x16xf32>
    %158 = arith.maximumf %156, %157 : vector<8x16xf32>
    %c0_150 = arith.constant 0 : index
    %c5_151 = arith.constant 5 : index
    %c0_152 = arith.constant 0 : index
    %c0_153 = arith.constant 0 : index
    %159 = vector.load %arg7[%c0_150, %c5_151, %c0_152, %c0_153] : memref<1x8x8x16xf32, #tpu.memory_space<vmem>>, vector<1x1x8x16xf32>
    %160 = vector.shape_cast %159 : vector<1x1x8x16xf32> to vector<8x16xf32>
    %161 = vector.shape_cast %158 : vector<8x16xf32> to vector<1x1x8x16xf32>
    tpu.vector_store %arg7[%c0_150, %c5_151, %c0_152, %c0_153], %161 {strides = array<i32>} : memref<1x8x8x16xf32, #tpu.memory_space<vmem>>, vector<1x1x8x16xf32>,
    %c54 = arith.constant 54 : index
    %c0_154 = arith.constant 0 : index
    %162 = vector.load %arg8[%c54, %c0_154] : memref<71x16xf32, #tpu.memory_space<vmem>>, vector<8x16xf32>
    %163 = vector.broadcast %98 : vector<1x16xf32> to vector<8x16xf32>
    %164 = arith.mulf %162, %163 : vector<8x16xf32>
    %165 = vector.broadcast %101 : vector<1x16xf32> to vector<8x16xf32>
    %166 = arith.addf %164, %165 : vector<8x16xf32>
    %cst_155 = arith.constant 0.000000e+00 : f32
    %167 = vector.broadcast %cst_155 : f32 to vector<8x16xf32>
    %168 = arith.maximumf %166, %167 : vector<8x16xf32>
    %c0_156 = arith.constant 0 : index
    %c6_157 = arith.constant 6 : index
    %c0_158 = arith.constant 0 : index
    %c0_159 = arith.constant 0 : index
    %169 = vector.load %arg7[%c0_156, %c6_157, %c0_158, %c0_159] : memref<1x8x8x16xf32, #tpu.memory_space<vmem>>, vector<1x1x8x16xf32>
    %170 = vector.shape_cast %169 : vector<1x1x8x16xf32> to vector<8x16xf32>
    %171 = vector.shape_cast %168 : vector<8x16xf32> to vector<1x1x8x16xf32>
    tpu.vector_store %arg7[%c0_156, %c6_157, %c0_158, %c0_159], %171 {strides = array<i32>} : memref<1x8x8x16xf32, #tpu.memory_space<vmem>>, vector<1x1x8x16xf32>,
    %c63 = arith.constant 63 : index
    %c0_160 = arith.constant 0 : index
    %172 = vector.load %arg8[%c63, %c0_160] : memref<71x16xf32, #tpu.memory_space<vmem>>, vector<8x16xf32>
    %173 = vector.broadcast %98 : vector<1x16xf32> to vector<8x16xf32>
    %174 = arith.mulf %172, %173 : vector<8x16xf32>
    %175 = vector.broadcast %101 : vector<1x16xf32> to vector<8x16xf32>
    %176 = arith.addf %174, %175 : vector<8x16xf32>
    %cst_161 = arith.constant 0.000000e+00 : f32
    %177 = vector.broadcast %cst_161 : f32 to vector<8x16xf32>
    %178 = arith.maximumf %176, %177 : vector<8x16xf32>
    %c0_162 = arith.constant 0 : index
    %c7_163 = arith.constant 7 : index
    %c0_164 = arith.constant 0 : index
    %c0_165 = arith.constant 0 : index
    %179 = vector.load %arg7[%c0_162, %c7_163, %c0_164, %c0_165] : memref<1x8x8x16xf32, #tpu.memory_space<vmem>>, vector<1x1x8x16xf32>
    %180 = vector.shape_cast %179 : vector<1x1x8x16xf32> to vector<8x16xf32>
    %181 = vector.shape_cast %178 : vector<8x16xf32> to vector<1x1x8x16xf32>
    tpu.vector_store %arg7[%c0_162, %c7_163, %c0_164, %c0_165], %181 {strides = array<i32>} : memref<1x8x8x16xf32, #tpu.memory_space<vmem>>, vector<1x1x8x16xf32>,
    return
  }
  func.func @transform_0(%arg0: i32) -> (i32, i32, i32, i32) {
    %c0_i32 = arith.constant 0 : i32
    %c0_i32_0 = arith.constant 0 : i32
    %c0_i32_1 = arith.constant 0 : i32
    %c0_i32_2 = arith.constant 0 : i32
    return %arg0, %c0_i32, %c0_i32_0, %c0_i32_1 : i32, i32, i32, i32
  }
  func.func @transform_1(%arg0: i32) -> (i32, i32, i32) {
    %c0_i32 = arith.constant 0 : i32
    %c0_i32_0 = arith.constant 0 : i32
    %c0_i32_1 = arith.constant 0 : i32
    %c0_i32_2 = arith.constant 0 : i32
    return %c0_i32, %c0_i32_0, %c0_i32_1 : i32, i32, i32
  }
  func.func @transform_2(%arg0: i32) -> (i32, i32) {
    %c0_i32 = arith.constant 0 : i32
    %c0_i32_0 = arith.constant 0 : i32
    %c0_i32_1 = arith.constant 0 : i32
    return %c0_i32, %c0_i32_0 : i32, i32
  }
  func.func @transform_3(%arg0: i32) -> (i32, i32) {
    %c0_i32 = arith.constant 0 : i32
    %c0_i32_0 = arith.constant 0 : i32
    %c0_i32_1 = arith.constant 0 : i32
    return %c0_i32, %c0_i32_0 : i32, i32
  }
  func.func @transform_4(%arg0: i32) -> (i32, i32) {
    %c0_i32 = arith.constant 0 : i32
    %c0_i32_0 = arith.constant 0 : i32
    %c0_i32_1 = arith.constant 0 : i32
    return %c0_i32, %c0_i32_0 : i32, i32
  }
  func.func @transform_5(%arg0: i32) -> (i32, i32) {
    %c0_i32 = arith.constant 0 : i32
    %c0_i32_0 = arith.constant 0 : i32
    %c0_i32_1 = arith.constant 0 : i32
    return %c0_i32, %c0_i32_0 : i32, i32
  }
  func.func @transform_6(%arg0: i32) -> (i32, i32, i32, i32) {
    %c0_i32 = arith.constant 0 : i32
    %c0_i32_0 = arith.constant 0 : i32
    %c0_i32_1 = arith.constant 0 : i32
    %c0_i32_2 = arith.constant 0 : i32
    return %arg0, %c0_i32, %c0_i32_0, %c0_i32_1 : i32, i32, i32, i32
  }
}

</mosaic_0001>

<llo_original>
// kernel: _lambda_.4
$region0: #{_lambda_.4}
  #allocation0 [shape = 'u32[]', space=smem, size = 0x4, offset = 0x4, fixed_abs, tag = 'smem constant byte address 0x4 - core index']
  #allocation1 [shape = 'u32[144,128]{1,0:T(1,128)}', space=vmem, size = 0x12000, scoped, tag = 'internal scratch']
  %s0 = inlined_call_operand.vmem [shape: f32[2,256,8], index: 0, kind: input, shape index: {}]
  %s1 = inlined_call_operand.vmem [shape: f32[8,16], index: 1, kind: input, shape index: {}]
  %s2 = inlined_call_operand.vmem [shape: f32[1,16], index: 2, kind: input, shape index: {}]
  %s3 = inlined_call_operand.vmem [shape: f32[1,16], index: 3, kind: input, shape index: {}]
  %s4 = inlined_call_operand.vmem [shape: f32[16,16], index: 4, kind: input, shape index: {}]
  %s5 = inlined_call_operand.vmem [shape: f32[2,256,16], index: 5, kind: output, shape index: {}]
  %s6 = sld [smem:[#allocation0]]
  $region53: #{_lambda_.4} parent=0
    _
  %s8 = ssub.s32 1, %s6
  %s9 = scalar_select 0, %s8, %s6
  loop: start=0, step=1, limit=4
  $region2: #{_lambda_.4} parent=0 // loop_pre_header
    _
  $region3: #{_lambda_.4} parent=0 // loop_header
    %s11 = sphi 0, %s15
    %p12 = scmp.ge.s32.totalorder %s11, 4
    %s21 = sphi 0, %s23
    %s24 = sphi 0, %s21
    %s25 = sphi 0, %s24
    %s41 = sphi 0, %s25
    %s45 = sphi 0, %s45
    %s47 = sphi 0, %s45
    %s48 = sphi 0, %s47
    %s62 = sphi 0, %s48
    %s66 = sphi 0, %s66
    %s68 = sphi 0, %s66
    %s69 = sphi 0, %s68
    %s83 = sphi 0, %s69
    %s87 = sphi 0, %s87
    %s89 = sphi 0, %s87
    %s90 = sphi 0, %s89
    %s104 = sphi 0, %s90
    %s108 = sphi 0, %s108
    %s110 = sphi 0, %s108
    %s111 = sphi 0, %s110
    %s125 = sphi 0, %s111
    %s131 = sphi 0, %s133
    %s134 = sphi 0, %s131
    %s135 = sphi 0, %s134
    %s151 = sphi 0, %s135
  $region4: #{_lambda_.4} parent=0 // loop_header_branch
    %14 = sbr.rel (%p12) target = $region8
  $region5: #{_lambda_.4} parent=0 // loop_body
    %s16 = ssub.s32 %s11, 1
    %s17 = ssub.s32 %s11, 2
    %s18 = sadd.s32 %s11, 1
    %s19 = ssub.s32 %s11, %s18
    %p20 = scmp.eq.s32.totalorder %s19, 0
    %s22 = sadd.s32 %s21, 1
    %s23 = scalar_select %p20, %s21, %s22
    %p26 = pneg %p20
    %p27 = scmp.eq.s32.totalorder %s11, 1
    %p28 = por %p26, %p27
    %p29 = scmp.ne.s32.totalorder %s21, %s24
    %p30 = scmp.eq.s32.totalorder %s11, 0
    %p31 = por %p29, %p30
    %p32 = scmp.ne.s32.totalorder %s21, %s24
    %p33 = scmp.eq.s32.totalorder %s16, 1
    %p34 = por %p32, %p33
    %p35 = scmp.ne.s32.totalorder %s24, %s25
    %p36 = scmp.eq.s32.totalorder %s16, 0
    %p37 = por %p35, %p36
    %p38 = scmp.ne.s32.totalorder %s24, %s25
    %p39 = scmp.eq.s32.totalorder %s17, 1
    %p40 = por %p38, %p39
    %p42 = scmp.ne.s32.totalorder %s25, %s41
    %p43 = scmp.eq.s32.totalorder %s17, 0
    %p44 = por %p42, %p43
    %s46 = sadd.s32 %s45, 1
    %p49 = scmp.eq.s32.totalorder %s11, 1
    %p50 = scmp.ne.s32.totalorder %s45, %s47
    %p51 = scmp.eq.s32.totalorder %s11, 0
    %p52 = por %p50, %p51
    %p53 = scmp.ne.s32.totalorder %s45, %s47
    %p54 = scmp.eq.s32.totalorder %s16, 1
    %p55 = por %p53, %p54
    %p56 = scmp.ne.s32.totalorder %s47, %s48
    %p57 = scmp.eq.s32.totalorder %s16, 0
    %p58 = por %p56, %p57
    %p59 = scmp.ne.s32.totalorder %s47, %s48
    %p60 = scmp.eq.s32.totalorder %s17, 1
    %p61 = por %p59, %p60
    %p63 = scmp.ne.s32.totalorder %s48, %s62
    %p64 = scmp.eq.s32.totalorder %s17, 0
    %p65 = por %p63, %p64
    %s67 = sadd.s32 %s66, 1
    %p70 = scmp.eq.s32.totalorder %s11, 1
    %p71 = scmp.ne.s32.totalorder %s66, %s68
    %p72 = scmp.eq.s32.totalorder %s11, 0
    %p73 = por %p71, %p72
    %p74 = scmp.ne.s32.totalorder %s66, %s68
    %p75 = scmp.eq.s32.totalorder %s16, 1
    %p76 = por %p74, %p75
    %p77 = scmp.ne.s32.totalorder %s68, %s69
    %p78 = scmp.eq.s32.totalorder %s16, 0
    %p79 = por %p77, %p78
    %p80 = scmp.ne.s32.totalorder %s68, %s69
    %p81 = scmp.eq.s32.totalorder %s17, 1
    %p82 = por %p80, %p81
    %p84 = scmp.ne.s32.totalorder %s69, %s83
    %p85 = scmp.eq.s32.totalorder %s17, 0
    %p86 = por %p84, %p85
    %s88 = sadd.s32 %s87, 1
    %p91 = scmp.eq.s32.totalorder %s11, 1
    %p92 = scmp.ne.s32.totalorder %s87, %s89
    %p93 = scmp.eq.s32.totalorder %s11, 0
    %p94 = por %p92, %p93
    %p95 = scmp.ne.s32.totalorder %s87, %s89
    %p96 = scmp.eq.s32.totalorder %s16, 1
    %p97 = por %p95, %p96
    %p98 = scmp.ne.s32.totalorder %s89, %s90
    %p99 = scmp.eq.s32.totalorder %s16, 0
    %p100 = por %p98, %p99
    %p101 = scmp.ne.s32.totalorder %s89, %s90
    %p102 = scmp.eq.s32.totalorder %s17, 1
    %p103 = por %p101, %p102
    %p105 = scmp.ne.s32.totalorder %s90, %s104
    %p106 = scmp.eq.s32.totalorder %s17, 0
    %p107 = por %p105, %p106
    %s109 = sadd.s32 %s108, 1
    %p112 = scmp.eq.s32.totalorder %s11, 1
    %p113 = scmp.ne.s32.totalorder %s108, %s110
    %p114 = scmp.eq.s32.totalorder %s11, 0
    %p115 = por %p113, %p114
    %p116 = scmp.ne.s32.totalorder %s108, %s110
    %p117 = scmp.eq.s32.totalorder %s16, 1
    %p118 = por %p116, %p117
    %p119 = scmp.ne.s32.totalorder %s110, %s111
    %p120 = scmp.eq.s32.totalorder %s16, 0
    %p121 = por %p119, %p120
    %p122 = scmp.ne.s32.totalorder %s110, %s111
    %p123 = scmp.eq.s32.totalorder %s17, 1
    %p124 = por %p122, %p123
    %p126 = scmp.ne.s32.totalorder %s111, %s125
    %p127 = scmp.eq.s32.totalorder %s17, 0
    %p128 = por %p126, %p127
    %s129 = ssub.s32 %s11, %s18
    %p130 = scmp.eq.s32.totalorder %s129, 0
    %s132 = sadd.s32 %s131, 1
    %s133 = scalar_select %p130, %s131, %s132
    %p136 = pneg %p130
    %p137 = scmp.eq.s32.totalorder %s11, 1
    %p138 = por %p136, %p137
    %p139 = scmp.ne.s32.totalorder %s131, %s134
    %p140 = scmp.eq.s32.totalorder %s11, 0
    %p141 = por %p139, %p140
    %p142 = scmp.ne.s32.totalorder %s131, %s134
    %p143 = scmp.eq.s32.totalorder %s16, 1
    %p144 = por %p142, %p143
    %p145 = scmp.ne.s32.totalorder %s134, %s135
    %p146 = scmp.eq.s32.totalorder %s16, 0
    %p147 = por %p145, %p146
    %p148 = scmp.ne.s32.totalorder %s134, %s135
    %p149 = scmp.eq.s32.totalorder %s17, 1
    %p150 = por %p148, %p149
    %p152 = scmp.ne.s32.totalorder %s135, %s151
    %p153 = scmp.eq.s32.totalorder %s17, 0
    %p154 = por %p152, %p153
    %p155 = scmp.le.s32.totalorder 1, %s11
    %p156 = scmp.lt.s32.totalorder %s11, 3
    %p157 = pnand %p155, %p156
    %p158 = pneg %p157
    // Predicated region
    $region9: #{_lambda_.4} parent=5 // pred_check
      _
    $region10: #{_lambda_.4} parent=5 // pred_check_branch
      %160 = sbr.rel (%p157) target = $region12
    $region11: #{_lambda_.4} parent=5 // pred_region
      %s161 = ssub.s32 %s11, 1
      // Predicated region
      $region13: #{_lambda_.4} parent=11 // pred_check
        %p162 = pneg %p58
      $region14: #{_lambda_.4} parent=11 // pred_check_branch
        %164 = sbr.rel (%p162) target = $region16
      $region15: #{_lambda_.4} parent=11 // pred_region
        _
      $region16: #{_lambda_.4} parent=11 // pred_fallthru
        _
      // Predicated region
      $region17: #{_lambda_.4} parent=11 // pred_check
        %p165 = pneg %p79
      $region18: #{_lambda_.4} parent=11 // pred_check_branch
        %167 = sbr.rel (%p165) target = $region20
      $region19: #{_lambda_.4} parent=11 // pred_region
        _
      $region20: #{_lambda_.4} parent=11 // pred_fallthru
        _
      // Predicated region
      $region21: #{_lambda_.4} parent=11 // pred_check
        %p168 = pneg %p100
      $region22: #{_lambda_.4} parent=11 // pred_check_branch
        %170 = sbr.rel (%p168) target = $region24
      $region23: #{_lambda_.4} parent=11 // pred_region
        _
      $region24: #{_lambda_.4} parent=11 // pred_fallthru
        _
      // Predicated region
      $region25: #{_lambda_.4} parent=11 // pred_check
        %p171 = pneg %p121
      $region26: #{_lambda_.4} parent=11 // pred_check_branch
        %173 = sbr.rel (%p171) target = $region28
      $region27: #{_lambda_.4} parent=11 // pred_region
        _
      $region28: #{_lambda_.4} parent=11 // pred_fallthru
        _
    $region12: #{_lambda_.4} parent=5 // pred_fallthru
      _
    %p174 = scmp.lt.s32.totalorder %s11, 2
    // Predicated region
    $region29: #{_lambda_.4} parent=5 // pred_check
      %p175 = pneg %p174
    $region30: #{_lambda_.4} parent=5 // pred_check_branch
      %177 = sbr.rel (%p175) target = $region32
    $region31: #{_lambda_.4} parent=5 // pred_region
      // Predicated region
      $region33: #{_lambda_.4} parent=31 // pred_check
        %p178 = pneg %p31
      $region34: #{_lambda_.4} parent=31 // pred_check_branch
        %180 = sbr.rel (%p178) target = $region36
      $region35: #{_lambda_.4} parent=31 // pred_region
        %p181 = scmp.lt.s32.totalorder %s11, 1
        %s182 = scalar_select %p181, %s11, 1
        %s183 = smul.addr %s182, 32
        %s184 = smul.addr %s183, 8
        %s185 = scalar_lea.vmem %s0, %s184
      $region36: #{_lambda_.4} parent=31 // pred_fallthru
        _
    $region32: #{_lambda_.4} parent=5 // pred_fallthru
      _
    %p186 = scmp.le.s32.totalorder 1, %s11
    %p187 = scmp.lt.s32.totalorder %s11, 3
    %p188 = pnand %p186, %p187
    %p189 = pneg %p188
    // Predicated region
    $region37: #{_lambda_.4} parent=5 // pred_check
      _
    $region38: #{_lambda_.4} parent=5 // pred_check_branch
      %191 = sbr.rel (%p188) target = $region40
    $region39: #{_lambda_.4} parent=5 // pred_region
      %s192 = ssub.s32 %s11, 1
      %p193 = scmp.lt.s32.totalorder %s16, 1
      %s194 = scalar_select %p193, %s16, 1
      %s195 = smul.addr %s194, 32
      %s196 = smul.addr %s195, 8
      %s197 = scalar_lea.vmem %s0, %s196
      %p198 = pneg %p37
      %p199 = pneg %p34
      %p200 = pneg %p58
      %p201 = pneg %p55
      %p202 = pneg %p79
      %p203 = pneg %p76
      %p204 = pneg %p100
      %p205 = pneg %p97
      %p206 = pneg %p121
      %p207 = pneg %p118
      %p208 = pneg %p147
      %p209 = pneg %p144
      %p210 = scmp.lt.s32.totalorder %s16, 1
      %s211 = scalar_select %p210, %s16, 1
      %s212 = smul.addr %s211, 32
      %s213 = smul.addr %s212, 8
      %s214 = scalar_lea.vmem %s5, %s213
      %p215 = scmp.lt.s32.totalorder %s16, 1
      %s216 = scalar_select %p215, %s16, 1
      %s217 = smul.addr %s216, 32
      %s218 = smul.addr %s217, 8
      %s219 = scalar_lea.vmem %s0, %s218
      %p220 = scmp.lt.s32.totalorder %s16, 1
      %s221 = scalar_select %p220, %s16, 1
      %s222 = smul.addr %s221, 32
      %s223 = smul.addr %s222, 8
      %s224 = scalar_lea.vmem %s5, %s223
      %v225 = vld [vmem:[%s219] sm:$0xff]
      %v226 = vld [vmem:[%s219 + $0x8] sm:$0xff]
      %v227 = vld [vmem:[%s219 + $0x10] sm:$0xff]
      %v228 = vld [vmem:[%s219 + $0x18] sm:$0xff]
      %v229 = vld [vmem:[%s219 + $0x20] sm:$0xff]
      %v230 = vld [vmem:[%s219 + $0x28] sm:$0xff]
      %v231 = vld [vmem:[%s219 + $0x30] sm:$0xff]
      %v232 = vld [vmem:[%s219 + $0x38] sm:$0xff]
      %v233 = vld [vmem:[%s219 + $0x40] sm:$0xff]
      %v234 = vld [vmem:[%s219 + $0x48] sm:$0xff]
      %v235 = vld [vmem:[%s219 + $0x50] sm:$0xff]
      %v236 = vld [vmem:[%s219 + $0x58] sm:$0xff]
      %v237 = vld [vmem:[%s219 + $0x60] sm:$0xff]
      %v238 = vld [vmem:[%s219 + $0x68] sm:$0xff]
      %v239 = vld [vmem:[%s219 + $0x70] sm:$0xff]
      %v240 = vld [vmem:[%s219 + $0x78] sm:$0xff]
      %v241 = vld [vmem:[%s219 + $0x80] sm:$0xff]
      %v242 = vld [vmem:[%s219 + $0x88] sm:$0xff]
      %v243 = vld [vmem:[%s219 + $0x90] sm:$0xff]
      %v244 = vld [vmem:[%s219 + $0x98] sm:$0xff]
      %v245 = vld [vmem:[%s219 + $0xa0] sm:$0xff]
      %v246 = vld [vmem:[%s219 + $0xa8] sm:$0xff]
      %v247 = vld [vmem:[%s219 + $0xb0] sm:$0xff]
      %v248 = vld [vmem:[%s219 + $0xb8] sm:$0xff]
      %v249 = vld [vmem:[%s219 + $0xc0] sm:$0xff]
      %v250 = vld [vmem:[%s219 + $0xc8] sm:$0xff]
      %v251 = vld [vmem:[%s219 + $0xd0] sm:$0xff]
      %v252 = vld [vmem:[%s219 + $0xd8] sm:$0xff]
      %v253 = vld [vmem:[%s219 + $0xe0] sm:$0xff]
      %v254 = vld [vmem:[%s219 + $0xe8] sm:$0xff]
      %v255 = vld [vmem:[%s219 + $0xf0] sm:$0xff]
      %v256 = vld [vmem:[%s219 + $0xf8] sm:$0xff]
      %v257 = vld [vmem:[%s1] sm:$0xff]
      %vm258 = vcmask 64512
      %v260 = vsel %vm258, %v225, 0
      %v263 = vsel %vm258, %v226, 0
      %v266 = vsel %vm258, %v227, 0
      %v269 = vsel %vm258, %v228, 0
      %v272 = vsel %vm258, %v229, 0
      %v275 = vsel %vm258, %v230, 0
      %v278 = vsel %vm258, %v231, 0
      %v281 = vsel %vm258, %v232, 0
      %v284 = vsel %vm258, %v233, 0
      %v287 = vsel %vm258, %v234, 0
      %v290 = vsel %vm258, %v235, 0
      %v293 = vsel %vm258, %v236, 0
      %v296 = vsel %vm258, %v237, 0
      %v299 = vsel %vm258, %v238, 0
      %v302 = vsel %vm258, %v239, 0
      %v305 = vsel %vm258, %v240, 0
      %v308 = vsel %vm258, %v241, 0
      %v311 = vsel %vm258, %v242, 0
      %v314 = vsel %vm258, %v243, 0
      %v317 = vsel %vm258, %v244, 0
      %v320 = vsel %vm258, %v245, 0
      %v323 = vsel %vm258, %v246, 0
      %v326 = vsel %vm258, %v247, 0
      %v329 = vsel %vm258, %v248, 0
      %v332 = vsel %vm258, %v249, 0
      %v335 = vsel %vm258, %v250, 0
      %v338 = vsel %vm258, %v251, 0
      %v341 = vsel %vm258, %v252, 0
      %v344 = vsel %vm258, %v253, 0
      %v347 = vsel %vm258, %v254, 0
      %v350 = vsel %vm258, %v255, 0
      %v353 = vsel %vm258, %v256, 0
      %355 = vmatprep.subr.mxu0 0.0
      %356 = vmatpush1.msra.mxu0 %v257
      %357 = vmatprep.subr.mxu0 0.0
      %358 = vmatpush1.msra.mxu0 0.0
      %359 = vmatprep.subr.mxu0 0.0
      %360 = vmatpush1.msra.mxu0 0.0
      %361 = vmatprep.subr.mxu0 0.0
      %362 = vmatpush1.msra.mxu0 0.0
      %363 = vmatprep.subr.mxu0 0.0
      %364 = vmatpush1.msra.mxu0 0.0
      %365 = vmatprep.subr.mxu0 0.0
      %366 = vmatpush1.msra.mxu0 0.0
      %367 = vmatprep.subr.mxu0 0.0
      %368 = vmatpush1.msra.mxu0 0.0
      %369 = vmatprep.subr.mxu0 0.0
      %370 = vmatpush1.msra.mxu0 0.0
      %371 = vmatprep.subr.mxu0 0.0
      %372 = vmatpush1.msra.mxu0 0.0
      %373 = vmatprep.subr.mxu0 0.0
      %374 = vmatpush1.msra.mxu0 0.0
      %375 = vmatprep.subr.mxu0 0.0
      %376 = vmatpush1.msra.mxu0 0.0
      %377 = vmatprep.subr.mxu0 0.0
      %378 = vmatpush1.msra.mxu0 0.0
      %379 = vmatprep.subr.mxu0 0.0
      %380 = vmatpush1.msra.mxu0 0.0
      %381 = vmatprep.subr.mxu0 0.0
      %382 = vmatpush1.msra.mxu0 0.0
      %383 = vmatprep.subr.mxu0 0.0
      %384 = vmatpush1.msra.mxu0 0.0
      %385 = vmatprep.subr.mxu0 0.0
      %386 = vmatpush1.msra.mxu0 0.0
      %387 = vmatprep.subr.mxu0 0.0
      %388 = vmatpush1.msra.mxu0 0.0
      %389 = vmatprep.subr.mxu0 0.0
      %390 = vmatpush1.msra.mxu0 0.0
      %391 = vmatprep.subr.mxu0 0.0
      %392 = vmatpush1.msra.mxu0 0.0
      %393 = vmatprep.subr.mxu0 0.0
      %394 = vmatpush1.msra.mxu0 0.0
      %395 = vmatprep.subr.mxu0 0.0
      %396 = vmatpush1.msra.mxu0 0.0
      %397 = vmatprep.subr.mxu0 0.0
      %398 = vmatpush1.msra.mxu0 0.0
      %399 = vmatprep.subr.mxu0 0.0
      %400 = vmatpush1.msra.mxu0 0.0
      %401 = vmatprep.subr.mxu0 0.0
      %402 = vmatpush1.msra.mxu0 0.0
      %403 = vmatprep.subr.mxu0 0.0
      %404 = vmatpush1.msra.mxu0 0.0
      %405 = vmatprep.subr.mxu0 0.0
      %406 = vmatpush1.msra.mxu0 0.0
      %407 = vmatprep.subr.mxu0 0.0
      %408 = vmatpush1.msra.mxu0 0.0
      %409 = vmatprep.subr.mxu0 0.0
      %410 = vmatpush1.msra.mxu0 0.0
      %411 = vmatprep.subr.mxu0 0.0
      %412 = vmatpush1.msra.mxu0 0.0
      %413 = vmatprep.subr.mxu0 0.0
      %414 = vmatpush1.msra.mxu0 0.0
      %415 = vmatprep.subr.mxu0 0.0
      %416 = vmatpush1.msra.mxu0 0.0
      %417 = vmatprep.subr.mxu0 0.0
      %418 = vmatpush1.msra.mxu0 0.0
      %419 = vmatprep.mubr.f32.mxu0 0.0
      %420 = vmatmul.mubr.f32.gmra.mrb[0].mxu0 %v260
      %v421 = vpop.f32.mrb[0].mxu0
      %v422 = vadd.f32 0.0, %v421
      %v423 = vpop.f32.mrb[0].mxu0
      %424 = vmatprep.mubr.f32.mxu0 0.0
      %425 = vmatmul.mubr.f32.gmra.mrb[0].mxu0 %v263
      %v426 = vpop.f32.mrb[0].mxu0
      %v427 = vadd.f32 0.0, %v426
      %v428 = vpop.f32.mrb[0].mxu0
      %429 = vmatprep.mubr.f32.mxu0 0.0
      %430 = vmatmul.mubr.f32.gmra.mrb[0].mxu0 %v266
      %v431 = vpop.f32.mrb[0].mxu0
      %v432 = vadd.f32 0.0, %v431
      %v433 = vpop.f32.mrb[0].mxu0
      %434 = vmatprep.mubr.f32.mxu0 0.0
      %435 = vmatmul.mubr.f32.gmra.mrb[0].mxu0 %v269
      %v436 = vpop.f32.mrb[0].mxu0
      %v437 = vadd.f32 0.0, %v436
      %v438 = vpop.f32.mrb[0].mxu0
      %439 = vmatprep.mubr.f32.mxu0 0.0
      %440 = vmatmul.mubr.f32.gmra.mrb[0].mxu0 %v272
      %v441 = vpop.f32.mrb[0].mxu0
      %v442 = vadd.f32 0.0, %v441
      %v443 = vpop.f32.mrb[0].mxu0
      %444 = vmatprep.mubr.f32.mxu0 0.0
      %445 = vmatmul.mubr.f32.gmra.mrb[0].mxu0 %v275
      %v446 = vpop.f32.mrb[0].mxu0
      %v447 = vadd.f32 0.0, %v446
      %v448 = vpop.f32.mrb[0].mxu0
      %449 = vmatprep.mubr.f32.mxu0 0.0
      %450 = vmatmul.mubr.f32.gmra.mrb[0].mxu0 %v278
      %v451 = vpop.f32.mrb[0].mxu0
      %v452 = vadd.f32 0.0, %v451
      %v453 = vpop.f32.mrb[0].mxu0
      %454 = vmatprep.mubr.f32.mxu0 0.0
      %455 = vmatmul.mubr.f32.gmra.mrb[0].mxu0 %v281
      %v456 = vpop.f32.mrb[0].mxu0
      %v457 = vadd.f32 0.0, %v456
      %v458 = vpop.f32.mrb[0].mxu0
      %459 = vmatprep.mubr.f32.mxu0 0.0
      %460 = vmatmul.mubr.f32.gmra.mrb[0].mxu0 %v284
      %v461 = vpop.f32.mrb[0].mxu0
      %v462 = vadd.f32 0.0, %v461
      %v463 = vpop.f32.mrb[0].mxu0
      %464 = vmatprep.mubr.f32.mxu0 0.0
      %465 = vmatmul.mubr.f32.gmra.mrb[0].mxu0 %v287
      %v466 = vpop.f32.mrb[0].mxu0
      %v467 = vadd.f32 0.0, %v466
      %v468 = vpop.f32.mrb[0].mxu0
      %469 = vmatprep.mubr.f32.mxu0 0.0
      %470 = vmatmul.mubr.f32.gmra.mrb[0].mxu0 %v290
      %v471 = vpop.f32.mrb[0].mxu0
      %v472 = vadd.f32 0.0, %v471
      %v473 = vpop.f32.mrb[0].mxu0
      %474 = vmatprep.mubr.f32.mxu0 0.0
      %475 = vmatmul.mubr.f32.gmra.mrb[0].mxu0 %v293
      %v476 = vpop.f32.mrb[0].mxu0
      %v477 = vadd.f32 0.0, %v476
      %v478 = vpop.f32.mrb[0].mxu0
      %479 = vmatprep.mubr.f32.mxu0 0.0
      %480 = vmatmul.mubr.f32.gmra.mrb[0].mxu0 %v296
      %v481 = vpop.f32.mrb[0].mxu0
      %v482 = vadd.f32 0.0, %v481
      %v483 = vpop.f32.mrb[0].mxu0
      %484 = vmatprep.mubr.f32.mxu0 0.0
      %485 = vmatmul.mubr.f32.gmra.mrb[0].mxu0 %v299
      %v486 = vpop.f32.mrb[0].mxu0
      %v487 = vadd.f32 0.0, %v486
      %v488 = vpop.f32.mrb[0].mxu0
      %489 = vmatprep.mubr.f32.mxu0 0.0
      %490 = vmatmul.mubr.f32.gmra.mrb[0].mxu0 %v302
      %v491 = vpop.f32.mrb[0].mxu0
      %v492 = vadd.f32 0.0, %v491
      %v493 = vpop.f32.mrb[0].mxu0
      %494 = vmatprep.mubr.f32.mxu0 0.0
      %495 = vmatmul.mubr.f32.gmra.mrb[0].mxu0 %v305
      %v496 = vpop.f32.mrb[0].mxu0
      %v497 = vadd.f32 0.0, %v496
      %v498 = vpop.f32.mrb[0].mxu0
      %499 = vmatprep.mubr.f32.mxu0 0.0
      %500 = vmatmul.mubr.f32.gmra.mrb[0].mxu0 %v308
      %v501 = vpop.f32.mrb[0].mxu0
      %v502 = vadd.f32 0.0, %v501
      %v503 = vpop.f32.mrb[0].mxu0
      %504 = vmatprep.mubr.f32.mxu0 0.0
      %505 = vmatmul.mubr.f32.gmra.mrb[0].mxu0 %v311
      %v506 = vpop.f32.mrb[0].mxu0
      %v507 = vadd.f32 0.0, %v506
      %v508 = vpop.f32.mrb[0].mxu0
      %509 = vmatprep.mubr.f32.mxu0 0.0
      %510 = vmatmul.mubr.f32.gmra.mrb[0].mxu0 %v314
      %v511 = vpop.f32.mrb[0].mxu0
      %v512 = vadd.f32 0.0, %v511
      %v513 = vpop.f32.mrb[0].mxu0
      %514 = vmatprep.mubr.f32.mxu0 0.0
      %515 = vmatmul.mubr.f32.gmra.mrb[0].mxu0 %v317
      %v516 = vpop.f32.mrb[0].mxu0
      %v517 = vadd.f32 0.0, %v516
      %v518 = vpop.f32.mrb[0].mxu0
      %519 = vmatprep.mubr.f32.mxu0 0.0
      %520 = vmatmul.mubr.f32.gmra.mrb[0].mxu0 %v320
      %v521 = vpop.f32.mrb[0].mxu0
      %v522 = vadd.f32 0.0, %v521
      %v523 = vpop.f32.mrb[0].mxu0
      %524 = vmatprep.mubr.f32.mxu0 0.0
      %525 = vmatmul.mubr.f32.gmra.mrb[0].mxu0 %v323
      %v526 = vpop.f32.mrb[0].mxu0
      %v527 = vadd.f32 0.0, %v526
      %v528 = vpop.f32.mrb[0].mxu0
      %529 = vmatprep.mubr.f32.mxu0 0.0
      %530 = vmatmul.mubr.f32.gmra.mrb[0].mxu0 %v326
      %v531 = vpop.f32.mrb[0].mxu0
      %v532 = vadd.f32 0.0, %v531
      %v533 = vpop.f32.mrb[0].mxu0
      %534 = vmatprep.mubr.f32.mxu0 0.0
      %535 = vmatmul.mubr.f32.gmra.mrb[0].mxu0 %v329
      %v536 = vpop.f32.mrb[0].mxu0
      %v537 = vadd.f32 0.0, %v536
      %v538 = vpop.f32.mrb[0].mxu0
      %539 = vmatprep.mubr.f32.mxu0 0.0
      %540 = vmatmul.mubr.f32.gmra.mrb[0].mxu0 %v332
      %v541 = vpop.f32.mrb[0].mxu0
      %v542 = vadd.f32 0.0, %v541
      %v543 = vpop.f32.mrb[0].mxu0
      %544 = vmatprep.mubr.f32.mxu0 0.0
      %545 = vmatmul.mubr.f32.gmra.mrb[0].mxu0 %v335
      %v546 = vpop.f32.mrb[0].mxu0
      %v547 = vadd.f32 0.0, %v546
      %v548 = vpop.f32.mrb[0].mxu0
      %549 = vmatprep.mubr.f32.mxu0 0.0
      %550 = vmatmul.mubr.f32.gmra.mrb[0].mxu0 %v338
      %v551 = vpop.f32.mrb[0].mxu0
      %v552 = vadd.f32 0.0, %v551
      %v553 = vpop.f32.mrb[0].mxu0
      %554 = vmatprep.mubr.f32.mxu0 0.0
      %555 = vmatmul.mubr.f32.gmra.mrb[0].mxu0 %v341
      %v556 = vpop.f32.mrb[0].mxu0
      %v557 = vadd.f32 0.0, %v556
      %v558 = vpop.f32.mrb[0].mxu0
      %559 = vmatprep.mubr.f32.mxu0 0.0
      %560 = vmatmul.mubr.f32.gmra.mrb[0].mxu0 %v344
      %v561 = vpop.f32.mrb[0].mxu0
      %v562 = vadd.f32 0.0, %v561
      %v563 = vpop.f32.mrb[0].mxu0
      %564 = vmatprep.mubr.f32.mxu0 0.0
      %565 = vmatmul.mubr.f32.gmra.mrb[0].mxu0 %v347
      %v566 = vpop.f32.mrb[0].mxu0
      %v567 = vadd.f32 0.0, %v566
      %v568 = vpop.f32.mrb[0].mxu0
      %569 = vmatprep.mubr.f32.mxu0 0.0
      %570 = vmatmul.mubr.f32.gmra.mrb[0].mxu0 %v350
      %v571 = vpop.f32.mrb[0].mxu0
      %v572 = vadd.f32 0.0, %v571
      %v573 = vpop.f32.mrb[0].mxu0
      %574 = vmatprep.mubr.f32.mxu0 0.0
      %575 = vmatmul.mubr.f32.gmra.mrb[0].mxu0 %v353
      %v576 = vpop.f32.mrb[0].mxu0
      %v577 = vadd.f32 0.0, %v576
      %v578 = vpop.f32.mrb[0].mxu0
      %579 = vdwg.mxu0
      %v580 = vld [vmem:[%s4] sm:$0xff]
      %v581 = vld [vmem:[%s4 + $0x8] sm:$0xff]
      %vm582 = vcmask 130048
      %v583 = vsel %vm582, %v422, 0.0
      %v584 = vsel %vm582, %v427, 0.0
      %v585 = vadd.f32 %v583, %v584
      %v586 = vsel %vm582, %v432, 0.0
      %v587 = vadd.f32 %v585, %v586
      %v588 = vsel %vm582, %v437, 0.0
      %v589 = vadd.f32 %v587, %v588
      %v590 = vsel %vm582, %v442, 0.0
      %v591 = vadd.f32 %v589, %v590
      %v592 = vsel %vm582, %v447, 0.0
      %v593 = vadd.f32 %v591, %v592
      %v594 = vsel %vm582, %v452, 0.0
      %v595 = vadd.f32 %v593, %v594
      %v596 = vsel %vm582, %v457, 0.0
      %v597 = vadd.f32 %v595, %v596
      %v598 = vsel %vm582, %v462, 0.0
      %v599 = vadd.f32 %v597, %v598
      %v600 = vsel %vm582, %v467, 0.0
      %v601 = vadd.f32 %v599, %v600
      %v602 = vsel %vm582, %v472, 0.0
      %v603 = vadd.f32 %v601, %v602
      %v604 = vsel %vm582, %v477, 0.0
      %v605 = vadd.f32 %v603, %v604
      %v606 = vsel %vm582, %v482, 0.0
      %v607 = vadd.f32 %v605, %v606
      %v608 = vsel %vm582, %v487, 0.0
      %v609 = vadd.f32 %v607, %v608
      %v610 = vsel %vm582, %v492, 0.0
      %v611 = vadd.f32 %v609, %v610
      %v612 = vsel %vm582, %v497, 0.0
      %v613 = vadd.f32 %v611, %v612
      %v614 = vsel %vm582, %v502, 0.0
      %v615 = vadd.f32 %v613, %v614
      %v616 = vsel %vm582, %v507, 0.0
      %v617 = vadd.f32 %v615, %v616
      %v618 = vsel %vm582, %v512, 0.0
      %v619 = vadd.f32 %v617, %v618
      %v620 = vsel %vm582, %v517, 0.0
      %v621 = vadd.f32 %v619, %v620
      %v622 = vsel %vm582, %v522, 0.0
      %v623 = vadd.f32 %v621, %v622
      %v624 = vsel %vm582, %v527, 0.0
      %v625 = vadd.f32 %v623, %v624
      %v626 = vsel %vm582, %v532, 0.0
      %v627 = vadd.f32 %v625, %v626
      %v628 = vsel %vm582, %v537, 0.0
      %v629 = vadd.f32 %v627, %v628
      %v630 = vsel %vm582, %v542, 0.0
      %v631 = vadd.f32 %v629, %v630
      %v632 = vsel %vm582, %v547, 0.0
      %v633 = vadd.f32 %v631, %v632
      %v634 = vsel %vm582, %v552, 0.0
      %v635 = vadd.f32 %v633, %v634
      %v636 = vsel %vm582, %v557, 0.0
      %v637 = vadd.f32 %v635, %v636
      %v638 = vsel %vm582, %v562, 0.0
      %v639 = vadd.f32 %v637, %v638
      %v640 = vsel %vm582, %v567, 0.0
      %v641 = vadd.f32 %v639, %v640
      %v642 = vsel %vm582, %v572, 0.0
      %v643 = vadd.f32 %v641, %v642
      %v644 = vsel %vm582, %v577, 0.0
      %v645 = vadd.f32 %v643, %v644
      %v646 = vrot.slane %v645, 4
      %v647 = vadd.f32 %v645, %v646
      %v648 = vrot.slane %v647, 2
      %v649 = vadd.f32 %v647, %v648
      %v650 = vrot.slane %v649, 1
      %v651 = vadd.f32 %v649, %v650
      %v653 = vsel %vm582, %v651, 0
      %655 = vmatprep.subr.mxu0 0.0
      %656 = vmatpush1.msra.mxu0 %v580
      %657 = vmatprep.subr.mxu0 0.0
      %658 = vmatpush1.msra.mxu0 %v581
      %659 = vmatprep.subr.mxu0 0.0
      %660 = vmatpush1.msra.mxu0 0.0
      %661 = vmatprep.subr.mxu0 0.0
      %662 = vmatpush1.msra.mxu0 0.0
      %663 = vmatprep.subr.mxu0 0.0
      %664 = vmatpush1.msra.mxu0 0.0
      %665 = vmatprep.subr.mxu0 0.0
      %666 = vmatpush1.msra.mxu0 0.0
      %667 = vmatprep.subr.mxu0 0.0
      %668 = vmatpush1.msra.mxu0 0.0
      %669 = vmatprep.subr.mxu0 0.0
      %670 = vmatpush1.msra.mxu0 0.0
      %671 = vmatprep.subr.mxu0 0.0
      %672 = vmatpush1.msra.mxu0 0.0
      %673 = vmatprep.subr.mxu0 0.0
      %674 = vmatpush1.msra.mxu0 0.0
      %675 = vmatprep.subr.mxu0 0.0
      %676 = vmatpush1.msra.mxu0 0.0
      %677 = vmatprep.subr.mxu0 0.0
      %678 = vmatpush1.msra.mxu0 0.0
      %679 = vmatprep.subr.mxu0 0.0
      %680 = vmatpush1.msra.mxu0 0.0
      %681 = vmatprep.subr.mxu0 0.0
      %682 = vmatpush1.msra.mxu0 0.0
      %683 = vmatprep.subr.mxu0 0.0
      %684 = vmatpush1.msra.mxu0 0.0
      %685 = vmatprep.subr.mxu0 0.0
      %686 = vmatpush1.msra.mxu0 0.0
      %687 = vmatprep.subr.mxu0 0.0
      %688 = vmatpush1.msra.mxu0 0.0
      %689 = vmatprep.subr.mxu0 0.0
      %690 = vmatpush1.msra.mxu0 0.0
      %691 = vmatprep.subr.mxu0 0.0
      %692 = vmatpush1.msra.mxu0 0.0
      %693 = vmatprep.subr.mxu0 0.0
      %694 = vmatpush1.msra.mxu0 0.0
      %695 = vmatprep.subr.mxu0 0.0
      %696 = vmatpush1.msra.mxu0 0.0
      %697 = vmatprep.subr.mxu0 0.0
      %698 = vmatpush1.msra.mxu0 0.0
      %699 = vmatprep.subr.mxu0 0.0
      %700 = vmatpush1.msra.mxu0 0.0
      %701 = vmatprep.subr.mxu0 0.0
      %702 = vmatpush1.msra.mxu0 0.0
      %703 = vmatprep.subr.mxu0 0.0
      %704 = vmatpush1.msra.mxu0 0.0
      %705 = vmatprep.subr.mxu0 0.0
      %706 = vmatpush1.msra.mxu0 0.0
      %707 = vmatprep.subr.mxu0 0.0
      %708 = vmatpush1.msra.mxu0 0.0
      %709 = vmatprep.subr.mxu0 0.0
      %710 = vmatpush1.msra.mxu0 0.0
      %711 = vmatprep.subr.mxu0 0.0
      %712 = vmatpush1.msra.mxu0 0.0
      %713 = vmatprep.subr.mxu0 0.0
      %714 = vmatpush1.msra.mxu0 0.0
      %715 = vmatprep.subr.mxu0 0.0
      %716 = vmatpush1.msra.mxu0 0.0
      %717 = vmatprep.subr.mxu0 0.0
      %718 = vmatpush1.msra.mxu0 0.0
      %719 = vmatprep.mubr.f32.mxu0 0.0
      %720 = vmatmul.mubr.f32.gmra.mrb[0].mxu0 %v653
      %v721 = vpop.f32.mrb[0].mxu0
      %v722 = vadd.f32 0.0, %v721
      %v723 = vpop.f32.mrb[0].mxu0
      %724 = vdwg.mxu0
      %v725 = vmul.f32 %v722, 0.00048828125
      %v726 = vlaneseq
      %v727 = vshrl.u32 %v726, 7
      %v728 = vsub.s32 0, %v727
      %v729 = vrot.slane %v725, %v728
      %v730 = vsub.f32 %v422, %v729
      %v731 = vsub.f32 %v427, %v729
      %v732 = vsub.f32 %v432, %v729
      %v733 = vsub.f32 %v437, %v729
      %v734 = vsub.f32 %v442, %v729
      %v735 = vsub.f32 %v447, %v729
      %v736 = vsub.f32 %v452, %v729
      %v737 = vsub.f32 %v457, %v729
      %v738 = vsub.f32 %v462, %v729
      %v739 = vsub.f32 %v467, %v729
      %v740 = vsub.f32 %v472, %v729
      %v741 = vsub.f32 %v477, %v729
      %v742 = vsub.f32 %v482, %v729
      %v743 = vsub.f32 %v487, %v729
      %v744 = vsub.f32 %v492, %v729
      %v745 = vsub.f32 %v497, %v729
      %v746 = vsub.f32 %v502, %v729
      %v747 = vsub.f32 %v507, %v729
      %v748 = vsub.f32 %v512, %v729
      %v749 = vsub.f32 %v517, %v729
      %v750 = vsub.f32 %v522, %v729
      %v751 = vsub.f32 %v527, %v729
      %v752 = vsub.f32 %v532, %v729
      %v753 = vsub.f32 %v537, %v729
      %v754 = vsub.f32 %v542, %v729
      %v755 = vsub.f32 %v547, %v729
      %v756 = vsub.f32 %v552, %v729
      %v757 = vsub.f32 %v557, %v729
      %v758 = vsub.f32 %v562, %v729
      %v759 = vsub.f32 %v567, %v729
      %v760 = vsub.f32 %v572, %v729
      %v761 = vsub.f32 %v577, %v729
      %v762 = vmul.f32 %v730, %v730
      %v763 = vmul.f32 %v731, %v731
      %v764 = vmul.f32 %v732, %v732
      %v765 = vmul.f32 %v733, %v733
      %v766 = vmul.f32 %v734, %v734
      %v767 = vmul.f32 %v735, %v735
      %v768 = vmul.f32 %v736, %v736
      %v769 = vmul.f32 %v737, %v737
      %v770 = vmul.f32 %v738, %v738
      %v771 = vmul.f32 %v739, %v739
      %v772 = vmul.f32 %v740, %v740
      %v773 = vmul.f32 %v741, %v741
      %v774 = vmul.f32 %v742, %v742
      %v775 = vmul.f32 %v743, %v743
      %v776 = vmul.f32 %v744, %v744
      %v777 = vmul.f32 %v745, %v745
      %v778 = vmul.f32 %v746, %v746
      %v779 = vmul.f32 %v747, %v747
      %v780 = vmul.f32 %v748, %v748
      %v781 = vmul.f32 %v749, %v749
      %v782 = vmul.f32 %v750, %v750
      %v783 = vmul.f32 %v751, %v751
      %v784 = vmul.f32 %v752, %v752
      %v785 = vmul.f32 %v753, %v753
      %v786 = vmul.f32 %v754, %v754
      %v787 = vmul.f32 %v755, %v755
      %v788 = vmul.f32 %v756, %v756
      %v789 = vmul.f32 %v757, %v757
      %v790 = vmul.f32 %v758, %v758
      %v791 = vmul.f32 %v759, %v759
      %v792 = vmul.f32 %v760, %v760
      %v793 = vmul.f32 %v761, %v761
      %v794 = vsel %vm582, %v762, 0.0
      %v795 = vsel %vm582, %v763, 0.0
      %v796 = vadd.f32 %v794, %v795
      %v797 = vsel %vm582, %v764, 0.0
      %v798 = vadd.f32 %v796, %v797
      %v799 = vsel %vm582, %v765, 0.0
      %v800 = vadd.f32 %v798, %v799
      %v801 = vsel %vm582, %v766, 0.0
      %v802 = vadd.f32 %v800, %v801
      %v803 = vsel %vm582, %v767, 0.0
      %v804 = vadd.f32 %v802, %v803
      %v805 = vsel %vm582, %v768, 0.0
      %v806 = vadd.f32 %v804, %v805
      %v807 = vsel %vm582, %v769, 0.0
      %v808 = vadd.f32 %v806, %v807
      %v809 = vsel %vm582, %v770, 0.0
      %v810 = vadd.f32 %v808, %v809
      %v811 = vsel %vm582, %v771, 0.0
      %v812 = vadd.f32 %v810, %v811
      %v813 = vsel %vm582, %v772, 0.0
      %v814 = vadd.f32 %v812, %v813
      %v815 = vsel %vm582, %v773, 0.0
      %v816 = vadd.f32 %v814, %v815
      %v817 = vsel %vm582, %v774, 0.0
      %v818 = vadd.f32 %v816, %v817
      %v819 = vsel %vm582, %v775, 0.0
      %v820 = vadd.f32 %v818, %v819
      %v821 = vsel %vm582, %v776, 0.0
      %v822 = vadd.f32 %v820, %v821
      %v823 = vsel %vm582, %v777, 0.0
      %v824 = vadd.f32 %v822, %v823
      %v825 = vsel %vm582, %v778, 0.0
      %v826 = vadd.f32 %v824, %v825
      %v827 = vsel %vm582, %v779, 0.0
      %v828 = vadd.f32 %v826, %v827
      %v829 = vsel %vm582, %v780, 0.0
      %v830 = vadd.f32 %v828, %v829
      %v831 = vsel %vm582, %v781, 0.0
      %v832 = vadd.f32 %v830, %v831
      %v833 = vsel %vm582, %v782, 0.0
      %v834 = vadd.f32 %v832, %v833
      %v835 = vsel %vm582, %v783, 0.0
      %v836 = vadd.f32 %v834, %v835
      %v837 = vsel %vm582, %v784, 0.0
      %v838 = vadd.f32 %v836, %v837
      %v839 = vsel %vm582, %v785, 0.0
      %v840 = vadd.f32 %v838, %v839
      %v841 = vsel %vm582, %v786, 0.0
      %v842 = vadd.f32 %v840, %v841
      %v843 = vsel %vm582, %v787, 0.0
      %v844 = vadd.f32 %v842, %v843
      %v845 = vsel %vm582, %v788, 0.0
      %v846 = vadd.f32 %v844, %v845
      %v847 = vsel %vm582, %v789, 0.0
      %v848 = vadd.f32 %v846, %v847
      %v849 = vsel %vm582, %v790, 0.0
      %v850 = vadd.f32 %v848, %v849
      %v851 = vsel %vm582, %v791, 0.0
      %v852 = vadd.f32 %v850, %v851
      %v853 = vsel %vm582, %v792, 0.0
      %v854 = vadd.f32 %v852, %v853
      %v855 = vsel %vm582, %v793, 0.0
      %v856 = vadd.f32 %v854, %v855
      %v857 = vrot.slane %v856, 4
      %v858 = vadd.f32 %v856, %v857
      %v859 = vrot.slane %v858, 2
      %v860 = vadd.f32 %v858, %v859
      %v861 = vrot.slane %v860, 1
      %v862 = vadd.f32 %v860, %v861
      %v864 = vsel %vm582, %v862, 0
      %866 = vmatprep.subr.mxu0 0.0
      %867 = vmatpush1.msra.mxu0 %v580
      %868 = vmatprep.subr.mxu0 0.0
      %869 = vmatpush1.msra.mxu0 %v581
      %870 = vmatprep.subr.mxu0 0.0
      %871 = vmatpush1.msra.mxu0 0.0
      %872 = vmatprep.subr.mxu0 0.0
      %873 = vmatpush1.msra.mxu0 0.0
      %874 = vmatprep.subr.mxu0 0.0
      %875 = vmatpush1.msra.mxu0 0.0
      %876 = vmatprep.subr.mxu0 0.0
      %877 = vmatpush1.msra.mxu0 0.0
      %878 = vmatprep.subr.mxu0 0.0
      %879 = vmatpush1.msra.mxu0 0.0
      %880 = vmatprep.subr.mxu0 0.0
      %881 = vmatpush1.msra.mxu0 0.0
      %882 = vmatprep.subr.mxu0 0.0
      %883 = vmatpush1.msra.mxu0 0.0
      %884 = vmatprep.subr.mxu0 0.0
      %885 = vmatpush1.msra.mxu0 0.0
      %886 = vmatprep.subr.mxu0 0.0
      %887 = vmatpush1.msra.mxu0 0.0
      %888 = vmatprep.subr.mxu0 0.0
      %889 = vmatpush1.msra.mxu0 0.0
      %890 = vmatprep.subr.mxu0 0.0
      %891 = vmatpush1.msra.mxu0 0.0
      %892 = vmatprep.subr.mxu0 0.0
      %893 = vmatpush1.msra.mxu0 0.0
      %894 = vmatprep.subr.mxu0 0.0
      %895 = vmatpush1.msra.mxu0 0.0
      %896 = vmatprep.subr.mxu0 0.0
      %897 = vmatpush1.msra.mxu0 0.0
      %898 = vmatprep.subr.mxu0 0.0
      %899 = vmatpush1.msra.mxu0 0.0
      %900 = vmatprep.subr.mxu0 0.0
      %901 = vmatpush1.msra.mxu0 0.0
      %902 = vmatprep.subr.mxu0 0.0
      %903 = vmatpush1.msra.mxu0 0.0
      %904 = vmatprep.subr.mxu0 0.0
      %905 = vmatpush1.msra.mxu0 0.0
      %906 = vmatprep.subr.mxu0 0.0
      %907 = vmatpush1.msra.mxu0 0.0
      %908 = vmatprep.subr.mxu0 0.0
      %909 = vmatpush1.msra.mxu0 0.0
      %910 = vmatprep.subr.mxu0 0.0
      %911 = vmatpush1.msra.mxu0 0.0
      %912 = vmatprep.subr.mxu0 0.0
      %913 = vmatpush1.msra.mxu0 0.0
      %914 = vmatprep.subr.mxu0 0.0
      %915 = vmatpush1.msra.mxu0 0.0
      %916 = vmatprep.subr.mxu0 0.0
      %917 = vmatpush1.msra.mxu0 0.0
      %918 = vmatprep.subr.mxu0 0.0
      %919 = vmatpush1.msra.mxu0 0.0
      %920 = vmatprep.subr.mxu0 0.0
      %921 = vmatpush1.msra.mxu0 0.0
      %922 = vmatprep.subr.mxu0 0.0
      %923 = vmatpush1.msra.mxu0 0.0
      %924 = vmatprep.subr.mxu0 0.0
      %925 = vmatpush1.msra.mxu0 0.0
      %926 = vmatprep.subr.mxu0 0.0
      %927 = vmatpush1.msra.mxu0 0.0
      %928 = vmatprep.subr.mxu0 0.0
      %929 = vmatpush1.msra.mxu0 0.0
      %930 = vmatprep.mubr.f32.mxu0 0.0
      %931 = vmatmul.mubr.f32.gmra.mrb[0].mxu0 %v864
      %v932 = vpop.f32.mrb[0].mxu0
      %v933 = vadd.f32 0.0, %v932
      %v934 = vpop.f32.mrb[0].mxu0
      %935 = vdwg.mxu0
      %v936 = vmul.f32 %v933, 0.00048828125
      %v937 = vadd.f32 %v936, 1e-05
      %v938 = vrsqrt.pop %v937
      %v939 = vlaneseq
      %v940 = vshrl.u32 %v939, 7
      %v941 = vsub.s32 0, %v940
      %v942 = vrot.slane %v938, %v941
      %v943 = vmul.f32 %v730, %v942
      %v944 = vmul.f32 %v731, %v942
      %v945 = vmul.f32 %v732, %v942
      %v946 = vmul.f32 %v733, %v942
      %v947 = vmul.f32 %v734, %v942
      %v948 = vmul.f32 %v735, %v942
      %v949 = vmul.f32 %v736, %v942
      %v950 = vmul.f32 %v737, %v942
      %v951 = vmul.f32 %v738, %v942
      %v952 = vmul.f32 %v739, %v942
      %v953 = vmul.f32 %v740, %v942
      %v954 = vmul.f32 %v741, %v942
      %v955 = vmul.f32 %v742, %v942
      %v956 = vmul.f32 %v743, %v942
      %v957 = vmul.f32 %v744, %v942
      %v958 = vmul.f32 %v745, %v942
      %v959 = vmul.f32 %v746, %v942
      %v960 = vmul.f32 %v747, %v942
      %v961 = vmul.f32 %v748, %v942
      %v962 = vmul.f32 %v749, %v942
      %v963 = vmul.f32 %v750, %v942
      %v964 = vmul.f32 %v751, %v942
      %v965 = vmul.f32 %v752, %v942
      %v966 = vmul.f32 %v753, %v942
      %v967 = vmul.f32 %v754, %v942
      %v968 = vmul.f32 %v755, %v942
      %v969 = vmul.f32 %v756, %v942
      %v970 = vmul.f32 %v757, %v942
      %v971 = vmul.f32 %v758, %v942
      %v972 = vmul.f32 %v759, %v942
      %v973 = vmul.f32 %v760, %v942
      %v974 = vmul.f32 %v761, %v942
      %v975 = vld [vmem:[%s2] sm:$0x1]
      %v977 = vlaneseq
      %v978 = vshrl.u32 %v977, 7
      %v979 = vsub.s32 0, %v978
      %v980 = vrot.slane %v975, %v979
      %v982 = vmul.f32 %v943, %v980
      %v983 = vmul.f32 %v944, %v980
      %v984 = vmul.f32 %v945, %v980
      %v985 = vmul.f32 %v946, %v980
      %v986 = vmul.f32 %v947, %v980
      %v987 = vmul.f32 %v948, %v980
      %v988 = vmul.f32 %v949, %v980
      %v989 = vmul.f32 %v950, %v980
      %v990 = vmul.f32 %v951, %v980
      %v991 = vmul.f32 %v952, %v980
      %v992 = vmul.f32 %v953, %v980
      %v993 = vmul.f32 %v954, %v980
      %v994 = vmul.f32 %v955, %v980
      %v995 = vmul.f32 %v956, %v980
      %v996 = vmul.f32 %v957, %v980
      %v997 = vmul.f32 %v958, %v980
      %v998 = vmul.f32 %v959, %v980
      %v999 = vmul.f32 %v960, %v980
      %v1000 = vmul.f32 %v961, %v980
      %v1001 = vmul.f32 %v962, %v980
      %v1002 = vmul.f32 %v963, %v980
      %v1003 = vmul.f32 %v964, %v980
      %v1004 = vmul.f32 %v965, %v980
      %v1005 = vmul.f32 %v966, %v980
      %v1006 = vmul.f32 %v967, %v980
      %v1007 = vmul.f32 %v968, %v980
      %v1008 = vmul.f32 %v969, %v980
      %v1009 = vmul.f32 %v970, %v980
      %v1010 = vmul.f32 %v971, %v980
      %v1011 = vmul.f32 %v972, %v980
      %v1012 = vmul.f32 %v973, %v980
      %v1013 = vmul.f32 %v974, %v980
      %v1014 = vld [vmem:[%s3] sm:$0x1]
      %v1016 = vlaneseq
      %v1017 = vshrl.u32 %v1016, 7
      %v1018 = vsub.s32 0, %v1017
      %v1019 = vrot.slane %v1014, %v1018
      %v1021 = vadd.f32 %v982, %v1019
      %v1022 = vadd.f32 %v983, %v1019
      %v1023 = vadd.f32 %v984, %v1019
      %v1024 = vadd.f32 %v985, %v1019
      %v1025 = vadd.f32 %v986, %v1019
      %v1026 = vadd.f32 %v987, %v1019
      %v1027 = vadd.f32 %v988, %v1019
      %v1028 = vadd.f32 %v989, %v1019
      %v1029 = vadd.f32 %v990, %v1019
      %v1030 = vadd.f32 %v991, %v1019
      %v1031 = vadd.f32 %v992, %v1019
      %v1032 = vadd.f32 %v993, %v1019
      %v1033 = vadd.f32 %v994, %v1019
      %v1034 = vadd.f32 %v995, %v1019
      %v1035 = vadd.f32 %v996, %v1019
      %v1036 = vadd.f32 %v997, %v1019
      %v1037 = vadd.f32 %v998, %v1019
      %v1038 = vadd.f32 %v999, %v1019
      %v1039 = vadd.f32 %v1000, %v1019
      %v1040 = vadd.f32 %v1001, %v1019
      %v1041 = vadd.f32 %v1002, %v1019
      %v1042 = vadd.f32 %v1003, %v1019
      %v1043 = vadd.f32 %v1004, %v1019
      %v1044 = vadd.f32 %v1005, %v1019
      %v1045 = vadd.f32 %v1006, %v1019
      %v1046 = vadd.f32 %v1007, %v1019
      %v1047 = vadd.f32 %v1008, %v1019
      %v1048 = vadd.f32 %v1009, %v1019
      %v1049 = vadd.f32 %v1010, %v1019
      %v1050 = vadd.f32 %v1011, %v1019
      %v1051 = vadd.f32 %v1012, %v1019
      %v1052 = vadd.f32 %v1013, %v1019
      %v1053 = vmax.f32 %v1021, 0.0
      %v1054 = vmax.f32 %v1022, 0.0
      %v1055 = vmax.f32 %v1023, 0.0
      %v1056 = vmax.f32 %v1024, 0.0
      %v1057 = vmax.f32 %v1025, 0.0
      %v1058 = vmax.f32 %v1026, 0.0
      %v1059 = vmax.f32 %v1027, 0.0
      %v1060 = vmax.f32 %v1028, 0.0
      %v1061 = vmax.f32 %v1029, 0.0
      %v1062 = vmax.f32 %v1030, 0.0
      %v1063 = vmax.f32 %v1031, 0.0
      %v1064 = vmax.f32 %v1032, 0.0
      %v1065 = vmax.f32 %v1033, 0.0
      %v1066 = vmax.f32 %v1034, 0.0
      %v1067 = vmax.f32 %v1035, 0.0
      %v1068 = vmax.f32 %v1036, 0.0
      %v1069 = vmax.f32 %v1037, 0.0
      %v1070 = vmax.f32 %v1038, 0.0
      %v1071 = vmax.f32 %v1039, 0.0
      %v1072 = vmax.f32 %v1040, 0.0
      %v1073 = vmax.f32 %v1041, 0.0
      %v1074 = vmax.f32 %v1042, 0.0
      %v1075 = vmax.f32 %v1043, 0.0
      %v1076 = vmax.f32 %v1044, 0.0
      %v1077 = vmax.f32 %v1045, 0.0
      %v1078 = vmax.f32 %v1046, 0.0
      %v1079 = vmax.f32 %v1047, 0.0
      %v1080 = vmax.f32 %v1048, 0.0
      %v1081 = vmax.f32 %v1049, 0.0
      %v1082 = vmax.f32 %v1050, 0.0
      %v1083 = vmax.f32 %v1051, 0.0
      %v1084 = vmax.f32 %v1052, 0.0
      %1085 = vst.msk [vmem:[%s224] sm:$0xff] %vm582, %v1053
      %1086 = vst.msk [vmem:[%s224 + $0x8] sm:$0xff] %vm582, %v1054
      %1087 = vst.msk [vmem:[%s224 + $0x10] sm:$0xff] %vm582, %v1055
      %1088 = vst.msk [vmem:[%s224 + $0x18] sm:$0xff] %vm582, %v1056
      %1089 = vst.msk [vmem:[%s224 + $0x20] sm:$0xff] %vm582, %v1057
      %1090 = vst.msk [vmem:[%s224 + $0x28] sm:$0xff] %vm582, %v1058
      %1091 = vst.msk [vmem:[%s224 + $0x30] sm:$0xff] %vm582, %v1059
      %1092 = vst.msk [vmem:[%s224 + $0x38] sm:$0xff] %vm582, %v1060
      %1093 = vst.msk [vmem:[%s224 + $0x40] sm:$0xff] %vm582, %v1061
      %1094 = vst.msk [vmem:[%s224 + $0x48] sm:$0xff] %vm582, %v1062
      %1095 = vst.msk [vmem:[%s224 + $0x50] sm:$0xff] %vm582, %v1063
      %1096 = vst.msk [vmem:[%s224 + $0x58] sm:$0xff] %vm582, %v1064
      %1097 = vst.msk [vmem:[%s224 + $0x60] sm:$0xff] %vm582, %v1065
      %1098 = vst.msk [vmem:[%s224 + $0x68] sm:$0xff] %vm582, %v1066
      %1099 = vst.msk [vmem:[%s224 + $0x70] sm:$0xff] %vm582, %v1067
      %1100 = vst.msk [vmem:[%s224 + $0x78] sm:$0xff] %vm582, %v1068
      %1101 = vst.msk [vmem:[%s224 + $0x80] sm:$0xff] %vm582, %v1069
      %1102 = vst.msk [vmem:[%s224 + $0x88] sm:$0xff] %vm582, %v1070
      %1103 = vst.msk [vmem:[%s224 + $0x90] sm:$0xff] %vm582, %v1071
      %1104 = vst.msk [vmem:[%s224 + $0x98] sm:$0xff] %vm582, %v1072
      %1105 = vst.msk [vmem:[%s224 + $0xa0] sm:$0xff] %vm582, %v1073
      %1106 = vst.msk [vmem:[%s224 + $0xa8] sm:$0xff] %vm582, %v1074
      %1107 = vst.msk [vmem:[%s224 + $0xb0] sm:$0xff] %vm582, %v1075
      %1108 = vst.msk [vmem:[%s224 + $0xb8] sm:$0xff] %vm582, %v1076
      %1109 = vst.msk [vmem:[%s224 + $0xc0] sm:$0xff] %vm582, %v1077
      %1110 = vst.msk [vmem:[%s224 + $0xc8] sm:$0xff] %vm582, %v1078
      %1111 = vst.msk [vmem:[%s224 + $0xd0] sm:$0xff] %vm582, %v1079
      %1112 = vst.msk [vmem:[%s224 + $0xd8] sm:$0xff] %vm582, %v1080
      %1113 = vst.msk [vmem:[%s224 + $0xe0] sm:$0xff] %vm582, %v1081
      %1114 = vst.msk [vmem:[%s224 + $0xe8] sm:$0xff] %vm582, %v1082
      %1115 = vst.msk [vmem:[%s224 + $0xf0] sm:$0xff] %vm582, %v1083
      %1116 = vst.msk [vmem:[%s224 + $0xf8] sm:$0xff] %vm582, %v1084
      %p1117 = scmp.lt.s32.totalorder %s16, 1
      %s1118 = scalar_select %p1117, %s16, 1
      %s1119 = smul.addr %s1118, 32
      %s1120 = smul.addr %s1119, 8
      %s1121 = scalar_lea.vmem %s5, %s1120
      // Predicated region
      $region41: #{_lambda_.4} parent=39 // pred_check
        %p1122 = pneg %p144
      $region42: #{_lambda_.4} parent=39 // pred_check_branch
        %1124 = sbr.rel (%p1122) target = $region44
      $region43: #{_lambda_.4} parent=39 // pred_region
        _
      $region44: #{_lambda_.4} parent=39 // pred_fallthru
        _
    $region40: #{_lambda_.4} parent=5 // pred_fallthru
      _
    %p1125 = scmp.le.s32.totalorder 2, %s11
    // Predicated region
    $region45: #{_lambda_.4} parent=5 // pred_check
      %p1126 = pneg %p1125
    $region46: #{_lambda_.4} parent=5 // pred_check_branch
      %1128 = sbr.rel (%p1126) target = $region48
    $region47: #{_lambda_.4} parent=5 // pred_region
      %s1129 = ssub.s32 %s11, 2
      // Predicated region
      $region49: #{_lambda_.4} parent=47 // pred_check
        %p1130 = pneg %p150
      $region50: #{_lambda_.4} parent=47 // pred_check_branch
        %1132 = sbr.rel (%p1130) target = $region52
      $region51: #{_lambda_.4} parent=47 // pred_region
        %p1133 = scmp.lt.s32.totalorder %s17, 1
        %s1134 = scalar_select %p1133, %s17, 1
        %s1135 = smul.addr %s1134, 32
        %s1136 = smul.addr %s1135, 8
        %s1137 = scalar_lea.vmem %s5, %s1136
      $region52: #{_lambda_.4} parent=47 // pred_fallthru
        _
    $region48: #{_lambda_.4} parent=5 // pred_fallthru
      _
  $region6: #{_lambda_.4} parent=0 // loop_footer
    %s15 = sadd.s32 1, %s11
  $region7: #{_lambda_.4} parent=0 // loop_footer_branch
    %10 = sbr.rel target = $region3
  $region8: #{_lambda_.4} parent=0 // loop_exit
    _

// kernel: _lambda_.6
$region0: #{_lambda_.6}
  #allocation0 [shape = 'u32[]', space=smem, size = 0x4, offset = 0x4, fixed_abs, tag = 'smem constant byte address 0x4 - core index']
  #allocation1 [shape = 'u32[144,128]{1,0:T(1,128)}', space=vmem, size = 0x12000, scoped, tag = 'internal scratch']
  %s0 = inlined_call_operand.vmem [shape: f32[2,64,8], index: 0, kind: input, shape index: {}]
  %s1 = inlined_call_operand.vmem [shape: f32[8,16], index: 1, kind: input, shape index: {}]
  %s2 = inlined_call_operand.vmem [shape: f32[1,16], index: 2, kind: input, shape index: {}]
  %s3 = inlined_call_operand.vmem [shape: f32[1,16], index: 3, kind: input, shape index: {}]
  %s4 = inlined_call_operand.vmem [shape: f32[16,16], index: 4, kind: input, shape index: {}]
  %s5 = inlined_call_operand.vmem [shape: f32[2,64,16], index: 5, kind: output, shape index: {}]
  %s6 = sld [smem:[#allocation0]]
  $region53: #{_lambda_.6} parent=0
    _
  %s8 = ssub.s32 1, %s6
  %s9 = scalar_select 0, %s8, %s6
  loop: start=0, step=1, limit=4
  $region2: #{_lambda_.6} parent=0 // loop_pre_header
    _
  $region3: #{_lambda_.6} parent=0 // loop_header
    %s11 = sphi 0, %s15
    %p12 = scmp.ge.s32.totalorder %s11, 4
    %s21 = sphi 0, %s23
    %s24 = sphi 0, %s21
    %s25 = sphi 0, %s24
    %s41 = sphi 0, %s25
    %s45 = sphi 0, %s45
    %s47 = sphi 0, %s45
    %s48 = sphi 0, %s47
    %s62 = sphi 0, %s48
    %s66 = sphi 0, %s66
    %s68 = sphi 0, %s66
    %s69 = sphi 0, %s68
    %s83 = sphi 0, %s69
    %s87 = sphi 0, %s87
    %s89 = sphi 0, %s87
    %s90 = sphi 0, %s89
    %s104 = sphi 0, %s90
    %s108 = sphi 0, %s108
    %s110 = sphi 0, %s108
    %s111 = sphi 0, %s110
    %s125 = sphi 0, %s111
    %s131 = sphi 0, %s133
    %s134 = sphi 0, %s131
    %s135 = sphi 0, %s134
    %s151 = sphi 0, %s135
  $region4: #{_lambda_.6} parent=0 // loop_header_branch
    %14 = sbr.rel (%p12) target = $region8
  $region5: #{_lambda_.6} parent=0 // loop_body
    %s16 = ssub.s32 %s11, 1
    %s17 = ssub.s32 %s11, 2
    %s18 = sadd.s32 %s11, 1
    %s19 = ssub.s32 %s11, %s18
    %p20 = scmp.eq.s32.totalorder %s19, 0
    %s22 = sadd.s32 %s21, 1
    %s23 = scalar_select %p20, %s21, %s22
    %p26 = pneg %p20
    %p27 = scmp.eq.s32.totalorder %s11, 1
    %p28 = por %p26, %p27
    %p29 = scmp.ne.s32.totalorder %s21, %s24
    %p30 = scmp.eq.s32.totalorder %s11, 0
    %p31 = por %p29, %p30
    %p32 = scmp.ne.s32.totalorder %s21, %s24
    %p33 = scmp.eq.s32.totalorder %s16, 1
    %p34 = por %p32, %p33
    %p35 = scmp.ne.s32.totalorder %s24, %s25
    %p36 = scmp.eq.s32.totalorder %s16, 0
    %p37 = por %p35, %p36
    %p38 = scmp.ne.s32.totalorder %s24, %s25
    %p39 = scmp.eq.s32.totalorder %s17, 1
    %p40 = por %p38, %p39
    %p42 = scmp.ne.s32.totalorder %s25, %s41
    %p43 = scmp.eq.s32.totalorder %s17, 0
    %p44 = por %p42, %p43
    %s46 = sadd.s32 %s45, 1
    %p49 = scmp.eq.s32.totalorder %s11, 1
    %p50 = scmp.ne.s32.totalorder %s45, %s47
    %p51 = scmp.eq.s32.totalorder %s11, 0
    %p52 = por %p50, %p51
    %p53 = scmp.ne.s32.totalorder %s45, %s47
    %p54 = scmp.eq.s32.totalorder %s16, 1
    %p55 = por %p53, %p54
    %p56 = scmp.ne.s32.totalorder %s47, %s48
    %p57 = scmp.eq.s32.totalorder %s16, 0
    %p58 = por %p56, %p57
    %p59 = scmp.ne.s32.totalorder %s47, %s48
    %p60 = scmp.eq.s32.totalorder %s17, 1
    %p61 = por %p59, %p60
    %p63 = scmp.ne.s32.totalorder %s48, %s62
    %p64 = scmp.eq.s32.totalorder %s17, 0
    %p65 = por %p63, %p64
    %s67 = sadd.s32 %s66, 1
    %p70 = scmp.eq.s32.totalorder %s11, 1
    %p71 = scmp.ne.s32.totalorder %s66, %s68
    %p72 = scmp.eq.s32.totalorder %s11, 0
    %p73 = por %p71, %p72
    %p74 = scmp.ne.s32.totalorder %s66, %s68
    %p75 = scmp.eq.s32.totalorder %s16, 1
    %p76 = por %p74, %p75
    %p77 = scmp.ne.s32.totalorder %s68, %s69
    %p78 = scmp.eq.s32.totalorder %s16, 0
    %p79 = por %p77, %p78
    %p80 = scmp.ne.s32.totalorder %s68, %s69
    %p81 = scmp.eq.s32.totalorder %s17, 1
    %p82 = por %p80, %p81
    %p84 = scmp.ne.s32.totalorder %s69, %s83
    %p85 = scmp.eq.s32.totalorder %s17, 0
    %p86 = por %p84, %p85
    %s88 = sadd.s32 %s87, 1
    %p91 = scmp.eq.s32.totalorder %s11, 1
    %p92 = scmp.ne.s32.totalorder %s87, %s89
    %p93 = scmp.eq.s32.totalorder %s11, 0
    %p94 = por %p92, %p93
    %p95 = scmp.ne.s32.totalorder %s87, %s89
    %p96 = scmp.eq.s32.totalorder %s16, 1
    %p97 = por %p95, %p96
    %p98 = scmp.ne.s32.totalorder %s89, %s90
    %p99 = scmp.eq.s32.totalorder %s16, 0
    %p100 = por %p98, %p99
    %p101 = scmp.ne.s32.totalorder %s89, %s90
    %p102 = scmp.eq.s32.totalorder %s17, 1
    %p103 = por %p101, %p102
    %p105 = scmp.ne.s32.totalorder %s90, %s104
    %p106 = scmp.eq.s32.totalorder %s17, 0
    %p107 = por %p105, %p106
    %s109 = sadd.s32 %s108, 1
    %p112 = scmp.eq.s32.totalorder %s11, 1
    %p113 = scmp.ne.s32.totalorder %s108, %s110
    %p114 = scmp.eq.s32.totalorder %s11, 0
    %p115 = por %p113, %p114
    %p116 = scmp.ne.s32.totalorder %s108, %s110
    %p117 = scmp.eq.s32.totalorder %s16, 1
    %p118 = por %p116, %p117
    %p119 = scmp.ne.s32.totalorder %s110, %s111
    %p120 = scmp.eq.s32.totalorder %s16, 0
    %p121 = por %p119, %p120
    %p122 = scmp.ne.s32.totalorder %s110, %s111
    %p123 = scmp.eq.s32.totalorder %s17, 1
    %p124 = por %p122, %p123
    %p126 = scmp.ne.s32.totalorder %s111, %s125
    %p127 = scmp.eq.s32.totalorder %s17, 0
    %p128 = por %p126, %p127
    %s129 = ssub.s32 %s11, %s18
    %p130 = scmp.eq.s32.totalorder %s129, 0
    %s132 = sadd.s32 %s131, 1
    %s133 = scalar_select %p130, %s131, %s132
    %p136 = pneg %p130
    %p137 = scmp.eq.s32.totalorder %s11, 1
    %p138 = por %p136, %p137
    %p139 = scmp.ne.s32.totalorder %s131, %s134
    %p140 = scmp.eq.s32.totalorder %s11, 0
    %p141 = por %p139, %p140
    %p142 = scmp.ne.s32.totalorder %s131, %s134
    %p143 = scmp.eq.s32.totalorder %s16, 1
    %p144 = por %p142, %p143
    %p145 = scmp.ne.s32.totalorder %s134, %s135
    %p146 = scmp.eq.s32.totalorder %s16, 0
    %p147 = por %p145, %p146
    %p148 = scmp.ne.s32.totalorder %s134, %s135
    %p149 = scmp.eq.s32.totalorder %s17, 1
    %p150 = por %p148, %p149
    %p152 = scmp.ne.s32.totalorder %s135, %s151
    %p153 = scmp.eq.s32.totalorder %s17, 0
    %p154 = por %p152, %p153
    %p155 = scmp.le.s32.totalorder 1, %s11
    %p156 = scmp.lt.s32.totalorder %s11, 3
    %p157 = pnand %p155, %p156
    %p158 = pneg %p157
    // Predicated region
    $region9: #{_lambda_.6} parent=5 // pred_check
      _
    $region10: #{_lambda_.6} parent=5 // pred_check_branch
      %160 = sbr.rel (%p157) target = $region12
    $region11: #{_lambda_.6} parent=5 // pred_region
      %s161 = ssub.s32 %s11, 1
      // Predicated region
      $region13: #{_lambda_.6} parent=11 // pred_check
        %p162 = pneg %p58
      $region14: #{_lambda_.6} parent=11 // pred_check_branch
        %164 = sbr.rel (%p162) target = $region16
      $region15: #{_lambda_.6} parent=11 // pred_region
        _
      $region16: #{_lambda_.6} parent=11 // pred_fallthru
        _
      // Predicated region
      $region17: #{_lambda_.6} parent=11 // pred_check
        %p165 = pneg %p79
      $region18: #{_lambda_.6} parent=11 // pred_check_branch
        %167 = sbr.rel (%p165) target = $region20
      $region19: #{_lambda_.6} parent=11 // pred_region
        _
      $region20: #{_lambda_.6} parent=11 // pred_fallthru
        _
      // Predicated region
      $region21: #{_lambda_.6} parent=11 // pred_check
        %p168 = pneg %p100
      $region22: #{_lambda_.6} parent=11 // pred_check_branch
        %170 = sbr.rel (%p168) target = $region24
      $region23: #{_lambda_.6} parent=11 // pred_region
        _
      $region24: #{_lambda_.6} parent=11 // pred_fallthru
        _
      // Predicated region
      $region25: #{_lambda_.6} parent=11 // pred_check
        %p171 = pneg %p121
      $region26: #{_lambda_.6} parent=11 // pred_check_branch
        %173 = sbr.rel (%p171) target = $region28
      $region27: #{_lambda_.6} parent=11 // pred_region
        _
      $region28: #{_lambda_.6} parent=11 // pred_fallthru
        _
    $region12: #{_lambda_.6} parent=5 // pred_fallthru
      _
    %p174 = scmp.lt.s32.totalorder %s11, 2
    // Predicated region
    $region29: #{_lambda_.6} parent=5 // pred_check
      %p175 = pneg %p174
    $region30: #{_lambda_.6} parent=5 // pred_check_branch
      %177 = sbr.rel (%p175) target = $region32
    $region31: #{_lambda_.6} parent=5 // pred_region
      // Predicated region
      $region33: #{_lambda_.6} parent=31 // pred_check
        %p178 = pneg %p31
      $region34: #{_lambda_.6} parent=31 // pred_check_branch
        %180 = sbr.rel (%p178) target = $region36
      $region35: #{_lambda_.6} parent=31 // pred_region
        %p181 = scmp.lt.s32.totalorder %s11, 1
        %s182 = scalar_select %p181, %s11, 1
        %s183 = smul.addr %s182, 8
        %s184 = smul.addr %s183, 8
        %s185 = scalar_lea.vmem %s0, %s184
      $region36: #{_lambda_.6} parent=31 // pred_fallthru
        _
    $region32: #{_lambda_.6} parent=5 // pred_fallthru
      _
    %p186 = scmp.le.s32.totalorder 1, %s11
    %p187 = scmp.lt.s32.totalorder %s11, 3
    %p188 = pnand %p186, %p187
    %p189 = pneg %p188
    // Predicated region
    $region37: #{_lambda_.6} parent=5 // pred_check
      _
    $region38: #{_lambda_.6} parent=5 // pred_check_branch
      %191 = sbr.rel (%p188) target = $region40
    $region39: #{_lambda_.6} parent=5 // pred_region
      %s192 = ssub.s32 %s11, 1
      %p193 = scmp.lt.s32.totalorder %s16, 1
      %s194 = scalar_select %p193, %s16, 1
      %s195 = smul.addr %s194, 8
      %s196 = smul.addr %s195, 8
      %s197 = scalar_lea.vmem %s0, %s196
      %p198 = pneg %p37
      %p199 = pneg %p34
      %p200 = pneg %p58
      %p201 = pneg %p55
      %p202 = pneg %p79
      %p203 = pneg %p76
      %p204 = pneg %p100
      %p205 = pneg %p97
      %p206 = pneg %p121
      %p207 = pneg %p118
      %p208 = pneg %p147
      %p209 = pneg %p144
      %p210 = scmp.lt.s32.totalorder %s16, 1
      %s211 = scalar_select %p210, %s16, 1
      %s212 = smul.addr %s211, 8
      %s213 = smul.addr %s212, 8
      %s214 = scalar_lea.vmem %s5, %s213
      %p215 = scmp.lt.s32.totalorder %s16, 1
      %s216 = scalar_select %p215, %s16, 1
      %s217 = smul.addr %s216, 8
      %s218 = smul.addr %s217, 8
      %s219 = scalar_lea.vmem %s0, %s218
      %p220 = scmp.lt.s32.totalorder %s16, 1
      %s221 = scalar_select %p220, %s16, 1
      %s222 = smul.addr %s221, 8
      %s223 = smul.addr %s222, 8
      %s224 = scalar_lea.vmem %s5, %s223
      %v225 = vld [vmem:[%s219] sm:$0xff]
      %v226 = vld [vmem:[%s219 + $0x8] sm:$0xff]
      %v227 = vld [vmem:[%s219 + $0x10] sm:$0xff]
      %v228 = vld [vmem:[%s219 + $0x18] sm:$0xff]
      %v229 = vld [vmem:[%s219 + $0x20] sm:$0xff]
      %v230 = vld [vmem:[%s219 + $0x28] sm:$0xff]
      %v231 = vld [vmem:[%s219 + $0x30] sm:$0xff]
      %v232 = vld [vmem:[%s219 + $0x38] sm:$0xff]
      %v233 = vld [vmem:[%s1] sm:$0xff]
      %vm234 = vcmask 64512
      %v236 = vsel %vm234, %v225, 0
      %v239 = vsel %vm234, %v226, 0
      %v242 = vsel %vm234, %v227, 0
      %v245 = vsel %vm234, %v228, 0
      %v248 = vsel %vm234, %v229, 0
      %v251 = vsel %vm234, %v230, 0
      %v254 = vsel %vm234, %v231, 0
      %v257 = vsel %vm234, %v232, 0
      %259 = vmatprep.subr.mxu0 0.0
      %260 = vmatpush1.msra.mxu0 %v233
      %261 = vmatprep.subr.mxu0 0.0
      %262 = vmatpush1.msra.mxu0 0.0
      %263 = vmatprep.subr.mxu0 0.0
      %264 = vmatpush1.msra.mxu0 0.0
      %265 = vmatprep.subr.mxu0 0.0
      %266 = vmatpush1.msra.mxu0 0.0
      %267 = vmatprep.subr.mxu0 0.0
      %268 = vmatpush1.msra.mxu0 0.0
      %269 = vmatprep.subr.mxu0 0.0
      %270 = vmatpush1.msra.mxu0 0.0
      %271 = vmatprep.subr.mxu0 0.0
      %272 = vmatpush1.msra.mxu0 0.0
      %273 = vmatprep.subr.mxu0 0.0
      %274 = vmatpush1.msra.mxu0 0.0
      %275 = vmatprep.subr.mxu0 0.0
      %276 = vmatpush1.msra.mxu0 0.0
      %277 = vmatprep.subr.mxu0 0.0
      %278 = vmatpush1.msra.mxu0 0.0
      %279 = vmatprep.subr.mxu0 0.0
      %280 = vmatpush1.msra.mxu0 0.0
      %281 = vmatprep.subr.mxu0 0.0
      %282 = vmatpush1.msra.mxu0 0.0
      %283 = vmatprep.subr.mxu0 0.0
      %284 = vmatpush1.msra.mxu0 0.0
      %285 = vmatprep.subr.mxu0 0.0
      %286 = vmatpush1.msra.mxu0 0.0
      %287 = vmatprep.subr.mxu0 0.0
      %288 = vmatpush1.msra.mxu0 0.0
      %289 = vmatprep.subr.mxu0 0.0
      %290 = vmatpush1.msra.mxu0 0.0
      %291 = vmatprep.subr.mxu0 0.0
      %292 = vmatpush1.msra.mxu0 0.0
      %293 = vmatprep.subr.mxu0 0.0
      %294 = vmatpush1.msra.mxu0 0.0
      %295 = vmatprep.subr.mxu0 0.0
      %296 = vmatpush1.msra.mxu0 0.0
      %297 = vmatprep.subr.mxu0 0.0
      %298 = vmatpush1.msra.mxu0 0.0
      %299 = vmatprep.subr.mxu0 0.0
      %300 = vmatpush1.msra.mxu0 0.0
      %301 = vmatprep.subr.mxu0 0.0
      %302 = vmatpush1.msra.mxu0 0.0
      %303 = vmatprep.subr.mxu0 0.0
      %304 = vmatpush1.msra.mxu0 0.0
      %305 = vmatprep.subr.mxu0 0.0
      %306 = vmatpush1.msra.mxu0 0.0
      %307 = vmatprep.subr.mxu0 0.0
      %308 = vmatpush1.msra.mxu0 0.0
      %309 = vmatprep.subr.mxu0 0.0
      %310 = vmatpush1.msra.mxu0 0.0
      %311 = vmatprep.subr.mxu0 0.0
      %312 = vmatpush1.msra.mxu0 0.0
      %313 = vmatprep.subr.mxu0 0.0
      %314 = vmatpush1.msra.mxu0 0.0
      %315 = vmatprep.subr.mxu0 0.0
      %316 = vmatpush1.msra.mxu0 0.0
      %317 = vmatprep.subr.mxu0 0.0
      %318 = vmatpush1.msra.mxu0 0.0
      %319 = vmatprep.subr.mxu0 0.0
      %320 = vmatpush1.msra.mxu0 0.0
      %321 = vmatprep.subr.mxu0 0.0
      %322 = vmatpush1.msra.mxu0 0.0
      %323 = vmatprep.mubr.f32.mxu0 0.0
      %324 = vmatmul.mubr.f32.gmra.mrb[0].mxu0 %v236
      %v325 = vpop.f32.mrb[0].mxu0
      %v326 = vadd.f32 0.0, %v325
      %v327 = vpop.f32.mrb[0].mxu0
      %328 = vmatprep.mubr.f32.mxu0 0.0
      %329 = vmatmul.mubr.f32.gmra.mrb[0].mxu0 %v239
      %v330 = vpop.f32.mrb[0].mxu0
      %v331 = vadd.f32 0.0, %v330
      %v332 = vpop.f32.mrb[0].mxu0
      %333 = vmatprep.mubr.f32.mxu0 0.0
      %334 = vmatmul.mubr.f32.gmra.mrb[0].mxu0 %v242
      %v335 = vpop.f32.mrb[0].mxu0
      %v336 = vadd.f32 0.0, %v335
      %v337 = vpop.f32.mrb[0].mxu0
      %338 = vmatprep.mubr.f32.mxu0 0.0
      %339 = vmatmul.mubr.f32.gmra.mrb[0].mxu0 %v245
      %v340 = vpop.f32.mrb[0].mxu0
      %v341 = vadd.f32 0.0, %v340
      %v342 = vpop.f32.mrb[0].mxu0
      %343 = vmatprep.mubr.f32.mxu0 0.0
      %344 = vmatmul.mubr.f32.gmra.mrb[0].mxu0 %v248
      %v345 = vpop.f32.mrb[0].mxu0
      %v346 = vadd.f32 0.0, %v345
      %v347 = vpop.f32.mrb[0].mxu0
      %348 = vmatprep.mubr.f32.mxu0 0.0
      %349 = vmatmul.mubr.f32.gmra.mrb[0].mxu0 %v251
      %v350 = vpop.f32.mrb[0].mxu0
      %v351 = vadd.f32 0.0, %v350
      %v352 = vpop.f32.mrb[0].mxu0
      %353 = vmatprep.mubr.f32.mxu0 0.0
      %354 = vmatmul.mubr.f32.gmra.mrb[0].mxu0 %v254
      %v355 = vpop.f32.mrb[0].mxu0
      %v356 = vadd.f32 0.0, %v355
      %v357 = vpop.f32.mrb[0].mxu0
      %358 = vmatprep.mubr.f32.mxu0 0.0
      %359 = vmatmul.mubr.f32.gmra.mrb[0].mxu0 %v257
      %v360 = vpop.f32.mrb[0].mxu0
      %v361 = vadd.f32 0.0, %v360
      %v362 = vpop.f32.mrb[0].mxu0
      %363 = vdwg.mxu0
      %v364 = vld [vmem:[%s4] sm:$0xff]
      %v365 = vld [vmem:[%s4 + $0x8] sm:$0xff]
      %vm366 = vcmask 130048
      %v367 = vsel %vm366, %v326, 0.0
      %v368 = vsel %vm366, %v331, 0.0
      %v369 = vadd.f32 %v367, %v368
      %v370 = vsel %vm366, %v336, 0.0
      %v371 = vadd.f32 %v369, %v370
      %v372 = vsel %vm366, %v341, 0.0
      %v373 = vadd.f32 %v371, %v372
      %v374 = vsel %vm366, %v346, 0.0
      %v375 = vadd.f32 %v373, %v374
      %v376 = vsel %vm366, %v351, 0.0
      %v377 = vadd.f32 %v375, %v376
      %v378 = vsel %vm366, %v356, 0.0
      %v379 = vadd.f32 %v377, %v378
      %v380 = vsel %vm366, %v361, 0.0
      %v381 = vadd.f32 %v379, %v380
      %v382 = vrot.slane %v381, 4
      %v383 = vadd.f32 %v381, %v382
      %v384 = vrot.slane %v383, 2
      %v385 = vadd.f32 %v383, %v384
      %v386 = vrot.slane %v385, 1
      %v387 = vadd.f32 %v385, %v386
      %v389 = vsel %vm366, %v387, 0
      %391 = vmatprep.subr.mxu0 0.0
      %392 = vmatpush1.msra.mxu0 %v364
      %393 = vmatprep.subr.mxu0 0.0
      %394 = vmatpush1.msra.mxu0 %v365
      %395 = vmatprep.subr.mxu0 0.0
      %396 = vmatpush1.msra.mxu0 0.0
      %397 = vmatprep.subr.mxu0 0.0
      %398 = vmatpush1.msra.mxu0 0.0
      %399 = vmatprep.subr.mxu0 0.0
      %400 = vmatpush1.msra.mxu0 0.0
      %401 = vmatprep.subr.mxu0 0.0
      %402 = vmatpush1.msra.mxu0 0.0
      %403 = vmatprep.subr.mxu0 0.0
      %404 = vmatpush1.msra.mxu0 0.0
      %405 = vmatprep.subr.mxu0 0.0
      %406 = vmatpush1.msra.mxu0 0.0
      %407 = vmatprep.subr.mxu0 0.0
      %408 = vmatpush1.msra.mxu0 0.0
      %409 = vmatprep.subr.mxu0 0.0
      %410 = vmatpush1.msra.mxu0 0.0
      %411 = vmatprep.subr.mxu0 0.0
      %412 = vmatpush1.msra.mxu0 0.0
      %413 = vmatprep.subr.mxu0 0.0
      %414 = vmatpush1.msra.mxu0 0.0
      %415 = vmatprep.subr.mxu0 0.0
      %416 = vmatpush1.msra.mxu0 0.0
      %417 = vmatprep.subr.mxu0 0.0
      %418 = vmatpush1.msra.mxu0 0.0
      %419 = vmatprep.subr.mxu0 0.0
      %420 = vmatpush1.msra.mxu0 0.0
      %421 = vmatprep.subr.mxu0 0.0
      %422 = vmatpush1.msra.mxu0 0.0
      %423 = vmatprep.subr.mxu0 0.0
      %424 = vmatpush1.msra.mxu0 0.0
      %425 = vmatprep.subr.mxu0 0.0
      %426 = vmatpush1.msra.mxu0 0.0
      %427 = vmatprep.subr.mxu0 0.0
      %428 = vmatpush1.msra.mxu0 0.0
      %429 = vmatprep.subr.mxu0 0.0
      %430 = vmatpush1.msra.mxu0 0.0
      %431 = vmatprep.subr.mxu0 0.0
      %432 = vmatpush1.msra.mxu0 0.0
      %433 = vmatprep.subr.mxu0 0.0
      %434 = vmatpush1.msra.mxu0 0.0
      %435 = vmatprep.subr.mxu0 0.0
      %436 = vmatpush1.msra.mxu0 0.0
      %437 = vmatprep.subr.mxu0 0.0
      %438 = vmatpush1.msra.mxu0 0.0
      %439 = vmatprep.subr.mxu0 0.0
      %440 = vmatpush1.msra.mxu0 0.0
      %441 = vmatprep.subr.mxu0 0.0
      %442 = vmatpush1.msra.mxu0 0.0
      %443 = vmatprep.subr.mxu0 0.0
      %444 = vmatpush1.msra.mxu0 0.0
      %445 = vmatprep.subr.mxu0 0.0
      %446 = vmatpush1.msra.mxu0 0.0
      %447 = vmatprep.subr.mxu0 0.0
      %448 = vmatpush1.msra.mxu0 0.0
      %449 = vmatprep.subr.mxu0 0.0
      %450 = vmatpush1.msra.mxu0 0.0
      %451 = vmatprep.subr.mxu0 0.0
      %452 = vmatpush1.msra.mxu0 0.0
      %453 = vmatprep.subr.mxu0 0.0
      %454 = vmatpush1.msra.mxu0 0.0
      %455 = vmatprep.mubr.f32.mxu0 0.0
      %456 = vmatmul.mubr.f32.gmra.mrb[0].mxu0 %v389
      %v457 = vpop.f32.mrb[0].mxu0
      %v458 = vadd.f32 0.0, %v457
      %v459 = vpop.f32.mrb[0].mxu0
      %460 = vdwg.mxu0
      %v461 = vmul.f32 %v458, 0.001953125
      %v462 = vlaneseq
      %v463 = vshrl.u32 %v462, 7
      %v464 = vsub.s32 0, %v463
      %v465 = vrot.slane %v461, %v464
      %v466 = vsub.f32 %v326, %v465
      %v467 = vsub.f32 %v331, %v465
      %v468 = vsub.f32 %v336, %v465
      %v469 = vsub.f32 %v341, %v465
      %v470 = vsub.f32 %v346, %v465
      %v471 = vsub.f32 %v351, %v465
      %v472 = vsub.f32 %v356, %v465
      %v473 = vsub.f32 %v361, %v465
      %v474 = vmul.f32 %v466, %v466
      %v475 = vmul.f32 %v467, %v467
      %v476 = vmul.f32 %v468, %v468
      %v477 = vmul.f32 %v469, %v469
      %v478 = vmul.f32 %v470, %v470
      %v479 = vmul.f32 %v471, %v471
      %v480 = vmul.f32 %v472, %v472
      %v481 = vmul.f32 %v473, %v473
      %v482 = vsel %vm366, %v474, 0.0
      %v483 = vsel %vm366, %v475, 0.0
      %v484 = vadd.f32 %v482, %v483
      %v485 = vsel %vm366, %v476, 0.0
      %v486 = vadd.f32 %v484, %v485
      %v487 = vsel %vm366, %v477, 0.0
      %v488 = vadd.f32 %v486, %v487
      %v489 = vsel %vm366, %v478, 0.0
      %v490 = vadd.f32 %v488, %v489
      %v491 = vsel %vm366, %v479, 0.0
      %v492 = vadd.f32 %v490, %v491
      %v493 = vsel %vm366, %v480, 0.0
      %v494 = vadd.f32 %v492, %v493
      %v495 = vsel %vm366, %v481, 0.0
      %v496 = vadd.f32 %v494, %v495
      %v497 = vrot.slane %v496, 4
      %v498 = vadd.f32 %v496, %v497
      %v499 = vrot.slane %v498, 2
      %v500 = vadd.f32 %v498, %v499
      %v501 = vrot.slane %v500, 1
      %v502 = vadd.f32 %v500, %v501
      %v504 = vsel %vm366, %v502, 0
      %506 = vmatprep.subr.mxu0 0.0
      %507 = vmatpush1.msra.mxu0 %v364
      %508 = vmatprep.subr.mxu0 0.0
      %509 = vmatpush1.msra.mxu0 %v365
      %510 = vmatprep.subr.mxu0 0.0
      %511 = vmatpush1.msra.mxu0 0.0
      %512 = vmatprep.subr.mxu0 0.0
      %513 = vmatpush1.msra.mxu0 0.0
      %514 = vmatprep.subr.mxu0 0.0
      %515 = vmatpush1.msra.mxu0 0.0
      %516 = vmatprep.subr.mxu0 0.0
      %517 = vmatpush1.msra.mxu0 0.0
      %518 = vmatprep.subr.mxu0 0.0
      %519 = vmatpush1.msra.mxu0 0.0
      %520 = vmatprep.subr.mxu0 0.0
      %521 = vmatpush1.msra.mxu0 0.0
      %522 = vmatprep.subr.mxu0 0.0
      %523 = vmatpush1.msra.mxu0 0.0
      %524 = vmatprep.subr.mxu0 0.0
      %525 = vmatpush1.msra.mxu0 0.0
      %526 = vmatprep.subr.mxu0 0.0
      %527 = vmatpush1.msra.mxu0 0.0
      %528 = vmatprep.subr.mxu0 0.0
      %529 = vmatpush1.msra.mxu0 0.0
      %530 = vmatprep.subr.mxu0 0.0
      %531 = vmatpush1.msra.mxu0 0.0
      %532 = vmatprep.subr.mxu0 0.0
      %533 = vmatpush1.msra.mxu0 0.0
      %534 = vmatprep.subr.mxu0 0.0
      %535 = vmatpush1.msra.mxu0 0.0
      %536 = vmatprep.subr.mxu0 0.0
      %537 = vmatpush1.msra.mxu0 0.0
      %538 = vmatprep.subr.mxu0 0.0
      %539 = vmatpush1.msra.mxu0 0.0
      %540 = vmatprep.subr.mxu0 0.0
      %541 = vmatpush1.msra.mxu0 0.0
      %542 = vmatprep.subr.mxu0 0.0
      %543 = vmatpush1.msra.mxu0 0.0
      %544 = vmatprep.subr.mxu0 0.0
      %545 = vmatpush1.msra.mxu0 0.0
      %546 = vmatprep.subr.mxu0 0.0
      %547 = vmatpush1.msra.mxu0 0.0
      %548 = vmatprep.subr.mxu0 0.0
      %549 = vmatpush1.msra.mxu0 0.0
      %550 = vmatprep.subr.mxu0 0.0
      %551 = vmatpush1.msra.mxu0 0.0
      %552 = vmatprep.subr.mxu0 0.0
      %553 = vmatpush1.msra.mxu0 0.0
      %554 = vmatprep.subr.mxu0 0.0
      %555 = vmatpush1.msra.mxu0 0.0
      %556 = vmatprep.subr.mxu0 0.0
      %557 = vmatpush1.msra.mxu0 0.0
      %558 = vmatprep.subr.mxu0 0.0
      %559 = vmatpush1.msra.mxu0 0.0
      %560 = vmatprep.subr.mxu0 0.0
      %561 = vmatpush1.msra.mxu0 0.0
      %562 = vmatprep.subr.mxu0 0.0
      %563 = vmatpush1.msra.mxu0 0.0
      %564 = vmatprep.subr.mxu0 0.0
      %565 = vmatpush1.msra.mxu0 0.0
      %566 = vmatprep.subr.mxu0 0.0
      %567 = vmatpush1.msra.mxu0 0.0
      %568 = vmatprep.subr.mxu0 0.0
      %569 = vmatpush1.msra.mxu0 0.0
      %570 = vmatprep.mubr.f32.mxu0 0.0
      %571 = vmatmul.mubr.f32.gmra.mrb[0].mxu0 %v504
      %v572 = vpop.f32.mrb[0].mxu0
      %v573 = vadd.f32 0.0, %v572
      %v574 = vpop.f32.mrb[0].mxu0
      %575 = vdwg.mxu0
      %v576 = vmul.f32 %v573, 0.001953125
      %v577 = vadd.f32 %v576, 1e-05
      %v578 = vrsqrt.pop %v577
      %v579 = vlaneseq
      %v580 = vshrl.u32 %v579, 7
      %v581 = vsub.s32 0, %v580
      %v582 = vrot.slane %v578, %v581
      %v583 = vmul.f32 %v466, %v582
      %v584 = vmul.f32 %v467, %v582
      %v585 = vmul.f32 %v468, %v582
      %v586 = vmul.f32 %v469, %v582
      %v587 = vmul.f32 %v470, %v582
      %v588 = vmul.f32 %v471, %v582
      %v589 = vmul.f32 %v472, %v582
      %v590 = vmul.f32 %v473, %v582
      %v591 = vld [vmem:[%s2] sm:$0x1]
      %v593 = vlaneseq
      %v594 = vshrl.u32 %v593, 7
      %v595 = vsub.s32 0, %v594
      %v596 = vrot.slane %v591, %v595
      %v598 = vmul.f32 %v583, %v596
      %v599 = vmul.f32 %v584, %v596
      %v600 = vmul.f32 %v585, %v596
      %v601 = vmul.f32 %v586, %v596
      %v602 = vmul.f32 %v587, %v596
      %v603 = vmul.f32 %v588, %v596
      %v604 = vmul.f32 %v589, %v596
      %v605 = vmul.f32 %v590, %v596
      %v606 = vld [vmem:[%s3] sm:$0x1]
      %v608 = vlaneseq
      %v609 = vshrl.u32 %v608, 7
      %v610 = vsub.s32 0, %v609
      %v611 = vrot.slane %v606, %v610
      %v613 = vadd.f32 %v598, %v611
      %v614 = vadd.f32 %v599, %v611
      %v615 = vadd.f32 %v600, %v611
      %v616 = vadd.f32 %v601, %v611
      %v617 = vadd.f32 %v602, %v611
      %v618 = vadd.f32 %v603, %v611
      %v619 = vadd.f32 %v604, %v611
      %v620 = vadd.f32 %v605, %v611
      %621 = vst.msk [vmem:[%s224] sm:$0xff] %vm366, %v613
      %622 = vst.msk [vmem:[%s224 + $0x8] sm:$0xff] %vm366, %v614
      %623 = vst.msk [vmem:[%s224 + $0x10] sm:$0xff] %vm366, %v615
      %624 = vst.msk [vmem:[%s224 + $0x18] sm:$0xff] %vm366, %v616
      %625 = vst.msk [vmem:[%s224 + $0x20] sm:$0xff] %vm366, %v617
      %626 = vst.msk [vmem:[%s224 + $0x28] sm:$0xff] %vm366, %v618
      %627 = vst.msk [vmem:[%s224 + $0x30] sm:$0xff] %vm366, %v619
      %628 = vst.msk [vmem:[%s224 + $0x38] sm:$0xff] %vm366, %v620
      %p629 = scmp.lt.s32.totalorder %s16, 1
      %s630 = scalar_select %p629, %s16, 1
      %s631 = smul.addr %s630, 8
      %s632 = smul.addr %s631, 8
      %s633 = scalar_lea.vmem %s5, %s632
      // Predicated region
      $region41: #{_lambda_.6} parent=39 // pred_check
        %p634 = pneg %p144
      $region42: #{_lambda_.6} parent=39 // pred_check_branch
        %636 = sbr.rel (%p634) target = $region44
      $region43: #{_lambda_.6} parent=39 // pred_region
        _
      $region44: #{_lambda_.6} parent=39 // pred_fallthru
        _
    $region40: #{_lambda_.6} parent=5 // pred_fallthru
      _
    %p637 = scmp.le.s32.totalorder 2, %s11
    // Predicated region
    $region45: #{_lambda_.6} parent=5 // pred_check
      %p638 = pneg %p637
    $region46: #{_lambda_.6} parent=5 // pred_check_branch
      %640 = sbr.rel (%p638) target = $region48
    $region47: #{_lambda_.6} parent=5 // pred_region
      %s641 = ssub.s32 %s11, 2
      // Predicated region
      $region49: #{_lambda_.6} parent=47 // pred_check
        %p642 = pneg %p150
      $region50: #{_lambda_.6} parent=47 // pred_check_branch
        %644 = sbr.rel (%p642) target = $region52
      $region51: #{_lambda_.6} parent=47 // pred_region
        %p645 = scmp.lt.s32.totalorder %s17, 1
        %s646 = scalar_select %p645, %s17, 1
        %s647 = smul.addr %s646, 8
        %s648 = smul.addr %s647, 8
        %s649 = scalar_lea.vmem %s5, %s648
      $region52: #{_lambda_.6} parent=47 // pred_fallthru
        _
    $region48: #{_lambda_.6} parent=5 // pred_fallthru
      _
  $region6: #{_lambda_.6} parent=0 // loop_footer
    %s15 = sadd.s32 1, %s11
  $region7: #{_lambda_.6} parent=0 // loop_footer_branch
    %10 = sbr.rel target = $region3
  $region8: #{_lambda_.6} parent=0 // loop_exit
    _

// kernel: _lambda_.7
$region0: #{_lambda_.7}
  #allocation0 [shape = 'u32[]', space=smem, size = 0x4, offset = 0x4, fixed_abs, tag = 'smem constant byte address 0x4 - core index']
  #allocation1 [shape = 'u32[144,128]{1,0:T(1,128)}', space=vmem, size = 0x12000, scoped, tag = 'internal scratch']
  %s0 = inlined_call_operand.vmem [shape: f32[2,64,16], index: 0, kind: input, shape index: {}]
  %s1 = inlined_call_operand.vmem [shape: f32[16,16], index: 1, kind: input, shape index: {}]
  %s2 = inlined_call_operand.vmem [shape: f32[1,16], index: 2, kind: input, shape index: {}]
  %s3 = inlined_call_operand.vmem [shape: f32[1,16], index: 3, kind: input, shape index: {}]
  %s4 = inlined_call_operand.vmem [shape: f32[16,16], index: 4, kind: input, shape index: {}]
  %s5 = inlined_call_operand.vmem [shape: f32[2,64,16], index: 5, kind: input, shape index: {}]
  %s6 = inlined_call_operand.hbm [shape: f32[2,64,16], index: 6, kind: output, shape index: {}]
  %s7 = sld [smem:[#allocation0]]
  $region57: #{_lambda_.7} parent=0
    _
  %s9 = ssub.s32 1, %s7
  %s10 = scalar_select 0, %s9, %s7
  $region1: #{_lambda_.7} parent=0
    #allocation2 [shape = 'u8[65536]{0}', space=vmem, size = 0x10000, scoped, tag = 'output window, operand 0']
    #allocation3 [shape = 's32[2]{0}', space=sflag, size = 0x8, scoped, tag = 'scoped memory for _lambda_.7']
    %11 = vsyncpa [#allocation3], 0
    %s12 = scalar_lea.sflag [#allocation3], 1
    %13 = vsyncpa %s12, 0
    loop: start=0, step=1, limit=4
    $region2: #{_lambda_.7} parent=1 // loop_pre_header
      _
    $region3: #{_lambda_.7} parent=1 // loop_header
      %s15 = sphi 0, %s19
      %p16 = scmp.ge.s32.totalorder %s15, 4
      %s25 = sphi 0, %s27
      %s28 = sphi 0, %s25
      %s29 = sphi 0, %s28
      %s45 = sphi 0, %s29
      %s49 = sphi 0, %s49
      %s51 = sphi 0, %s49
      %s52 = sphi 0, %s51
      %s66 = sphi 0, %s52
      %s70 = sphi 0, %s70
      %s72 = sphi 0, %s70
      %s73 = sphi 0, %s72
      %s87 = sphi 0, %s73
      %s91 = sphi 0, %s91
      %s93 = sphi 0, %s91
      %s94 = sphi 0, %s93
      %s108 = sphi 0, %s94
      %s112 = sphi 0, %s112
      %s114 = sphi 0, %s112
      %s115 = sphi 0, %s114
      %s129 = sphi 0, %s115
      %s135 = sphi 0, %s137
      %s138 = sphi 0, %s135
      %s139 = sphi 0, %s138
      %s155 = sphi 0, %s139
      %s161 = sphi 0, %s163
      %s164 = sphi 0, %s161
      %s165 = sphi 0, %s164
      %s181 = sphi 0, %s165
    $region4: #{_lambda_.7} parent=1 // loop_header_branch
      %18 = sbr.rel (%p16) target = $region8
    $region5: #{_lambda_.7} parent=1 // loop_body
      %s20 = ssub.s32 %s15, 1
      %s21 = ssub.s32 %s15, 2
      %s22 = sadd.s32 %s15, 1
      %s23 = ssub.s32 %s15, %s22
      %p24 = scmp.eq.s32.totalorder %s23, 0
      %s26 = sadd.s32 %s25, 1
      %s27 = scalar_select %p24, %s25, %s26
      %p30 = pneg %p24
      %p31 = scmp.eq.s32.totalorder %s15, 1
      %p32 = por %p30, %p31
      %p33 = scmp.ne.s32.totalorder %s25, %s28
      %p34 = scmp.eq.s32.totalorder %s15, 0
      %p35 = por %p33, %p34
      %p36 = scmp.ne.s32.totalorder %s25, %s28
      %p37 = scmp.eq.s32.totalorder %s20, 1
      %p38 = por %p36, %p37
      %p39 = scmp.ne.s32.totalorder %s28, %s29
      %p40 = scmp.eq.s32.totalorder %s20, 0
      %p41 = por %p39, %p40
      %p42 = scmp.ne.s32.totalorder %s28, %s29
      %p43 = scmp.eq.s32.totalorder %s21, 1
      %p44 = por %p42, %p43
      %p46 = scmp.ne.s32.totalorder %s29, %s45
      %p47 = scmp.eq.s32.totalorder %s21, 0
      %p48 = por %p46, %p47
      %s50 = sadd.s32 %s49, 1
      %p53 = scmp.eq.s32.totalorder %s15, 1
      %p54 = scmp.ne.s32.totalorder %s49, %s51
      %p55 = scmp.eq.s32.totalorder %s15, 0
      %p56 = por %p54, %p55
      %p57 = scmp.ne.s32.totalorder %s49, %s51
      %p58 = scmp.eq.s32.totalorder %s20, 1
      %p59 = por %p57, %p58
      %p60 = scmp.ne.s32.totalorder %s51, %s52
      %p61 = scmp.eq.s32.totalorder %s20, 0
      %p62 = por %p60, %p61
      %p63 = scmp.ne.s32.totalorder %s51, %s52
      %p64 = scmp.eq.s32.totalorder %s21, 1
      %p65 = por %p63, %p64
      %p67 = scmp.ne.s32.totalorder %s52, %s66
      %p68 = scmp.eq.s32.totalorder %s21, 0
      %p69 = por %p67, %p68
      %s71 = sadd.s32 %s70, 1
      %p74 = scmp.eq.s32.totalorder %s15, 1
      %p75 = scmp.ne.s32.totalorder %s70, %s72
      %p76 = scmp.eq.s32.totalorder %s15, 0
      %p77 = por %p75, %p76
      %p78 = scmp.ne.s32.totalorder %s70, %s72
      %p79 = scmp.eq.s32.totalorder %s20, 1
      %p80 = por %p78, %p79
      %p81 = scmp.ne.s32.totalorder %s72, %s73
      %p82 = scmp.eq.s32.totalorder %s20, 0
      %p83 = por %p81, %p82
      %p84 = scmp.ne.s32.totalorder %s72, %s73
      %p85 = scmp.eq.s32.totalorder %s21, 1
      %p86 = por %p84, %p85
      %p88 = scmp.ne.s32.totalorder %s73, %s87
      %p89 = scmp.eq.s32.totalorder %s21, 0
      %p90 = por %p88, %p89
      %s92 = sadd.s32 %s91, 1
      %p95 = scmp.eq.s32.totalorder %s15, 1
      %p96 = scmp.ne.s32.totalorder %s91, %s93
      %p97 = scmp.eq.s32.totalorder %s15, 0
      %p98 = por %p96, %p97
      %p99 = scmp.ne.s32.totalorder %s91, %s93
      %p100 = scmp.eq.s32.totalorder %s20, 1
      %p101 = por %p99, %p100
      %p102 = scmp.ne.s32.totalorder %s93, %s94
      %p103 = scmp.eq.s32.totalorder %s20, 0
      %p104 = por %p102, %p103
      %p105 = scmp.ne.s32.totalorder %s93, %s94
      %p106 = scmp.eq.s32.totalorder %s21, 1
      %p107 = por %p105, %p106
      %p109 = scmp.ne.s32.totalorder %s94, %s108
      %p110 = scmp.eq.s32.totalorder %s21, 0
      %p111 = por %p109, %p110
      %s113 = sadd.s32 %s112, 1
      %p116 = scmp.eq.s32.totalorder %s15, 1
      %p117 = scmp.ne.s32.totalorder %s112, %s114
      %p118 = scmp.eq.s32.totalorder %s15, 0
      %p119 = por %p117, %p118
      %p120 = scmp.ne.s32.totalorder %s112, %s114
      %p121 = scmp.eq.s32.totalorder %s20, 1
      %p122 = por %p120, %p121
      %p123 = scmp.ne.s32.totalorder %s114, %s115
      %p124 = scmp.eq.s32.totalorder %s20, 0
      %p125 = por %p123, %p124
      %p126 = scmp.ne.s32.totalorder %s114, %s115
      %p127 = scmp.eq.s32.totalorder %s21, 1
      %p128 = por %p126, %p127
      %p130 = scmp.ne.s32.totalorder %s115, %s129
      %p131 = scmp.eq.s32.totalorder %s21, 0
      %p132 = por %p130, %p131
      %s133 = ssub.s32 %s15, %s22
      %p134 = scmp.eq.s32.totalorder %s133, 0
      %s136 = sadd.s32 %s135, 1
      %s137 = scalar_select %p134, %s135, %s136
      %p140 = pneg %p134
      %p141 = scmp.eq.s32.totalorder %s15, 1
      %p142 = por %p140, %p141
      %p143 = scmp.ne.s32.totalorder %s135, %s138
      %p144 = scmp.eq.s32.totalorder %s15, 0
      %p145 = por %p143, %p144
      %p146 = scmp.ne.s32.totalorder %s135, %s138
      %p147 = scmp.eq.s32.totalorder %s20, 1
      %p148 = por %p146, %p147
      %p149 = scmp.ne.s32.totalorder %s138, %s139
      %p150 = scmp.eq.s32.totalorder %s20, 0
      %p151 = por %p149, %p150
      %p152 = scmp.ne.s32.totalorder %s138, %s139
      %p153 = scmp.eq.s32.totalorder %s21, 1
      %p154 = por %p152, %p153
      %p156 = scmp.ne.s32.totalorder %s139, %s155
      %p157 = scmp.eq.s32.totalorder %s21, 0
      %p158 = por %p156, %p157
      %s159 = ssub.s32 %s15, %s22
      %p160 = scmp.eq.s32.totalorder %s159, 0
      %s162 = sadd.s32 %s161, 1
      %s163 = scalar_select %p160, %s161, %s162
      %p166 = pneg %p160
      %p167 = scmp.eq.s32.totalorder %s15, 1
      %p168 = por %p166, %p167
      %p169 = scmp.ne.s32.totalorder %s161, %s164
      %p170 = scmp.eq.s32.totalorder %s15, 0
      %p171 = por %p169, %p170
      %p172 = scmp.ne.s32.totalorder %s161, %s164
      %p173 = scmp.eq.s32.totalorder %s20, 1
      %p174 = por %p172, %p173
      %p175 = scmp.ne.s32.totalorder %s164, %s165
      %p176 = scmp.eq.s32.totalorder %s20, 0
      %p177 = por %p175, %p176
      %p178 = scmp.ne.s32.totalorder %s164, %s165
      %p179 = scmp.eq.s32.totalorder %s21, 1
      %p180 = por %p178, %p179
      %p182 = scmp.ne.s32.totalorder %s165, %s181
      %p183 = scmp.eq.s32.totalorder %s21, 0
      %p184 = por %p182, %p183
      %p185 = scmp.le.s32.totalorder 1, %s15
      %p186 = scmp.lt.s32.totalorder %s15, 3
      %p187 = pnand %p185, %p186
      %p188 = pneg %p187
      // Predicated region
      $region9: #{_lambda_.7} parent=5 // pred_check
        _
      $region10: #{_lambda_.7} parent=5 // pred_check_branch
        %190 = sbr.rel (%p187) target = $region12
      $region11: #{_lambda_.7} parent=5 // pred_region
        %s191 = ssub.s32 %s15, 1
        // Predicated region
        $region13: #{_lambda_.7} parent=11 // pred_check
          %p192 = pneg %p62
        $region14: #{_lambda_.7} parent=11 // pred_check_branch
          %194 = sbr.rel (%p192) target = $region16
        $region15: #{_lambda_.7} parent=11 // pred_region
          _
        $region16: #{_lambda_.7} parent=11 // pred_fallthru
          _
        // Predicated region
        $region17: #{_lambda_.7} parent=11 // pred_check
          %p195 = pneg %p83
        $region18: #{_lambda_.7} parent=11 // pred_check_branch
          %197 = sbr.rel (%p195) target = $region20
        $region19: #{_lambda_.7} parent=11 // pred_region
          _
        $region20: #{_lambda_.7} parent=11 // pred_fallthru
          _
        // Predicated region
        $region21: #{_lambda_.7} parent=11 // pred_check
          %p198 = pneg %p104
        $region22: #{_lambda_.7} parent=11 // pred_check_branch
          %200 = sbr.rel (%p198) target = $region24
        $region23: #{_lambda_.7} parent=11 // pred_region
          _
        $region24: #{_lambda_.7} parent=11 // pred_fallthru
          _
        // Predicated region
        $region25: #{_lambda_.7} parent=11 // pred_check
          %p201 = pneg %p125
        $region26: #{_lambda_.7} parent=11 // pred_check_branch
          %203 = sbr.rel (%p201) target = $region28
        $region27: #{_lambda_.7} parent=11 // pred_region
          _
        $region28: #{_lambda_.7} parent=11 // pred_fallthru
          _
      $region12: #{_lambda_.7} parent=5 // pred_fallthru
        _
      %p204 = scmp.lt.s32.totalorder %s15, 2
      // Predicated region
      $region29: #{_lambda_.7} parent=5 // pred_check
        %p205 = pneg %p204
      $region30: #{_lambda_.7} parent=5 // pred_check_branch
        %207 = sbr.rel (%p205) target = $region32
      $region31: #{_lambda_.7} parent=5 // pred_region
        // Predicated region
        $region33: #{_lambda_.7} parent=31 // pred_check
          %p208 = pneg %p35
        $region34: #{_lambda_.7} parent=31 // pred_check_branch
          %210 = sbr.rel (%p208) target = $region36
        $region35: #{_lambda_.7} parent=31 // pred_region
          %p211 = scmp.lt.s32.totalorder %s15, 1
          %s212 = scalar_select %p211, %s15, 1
          %s213 = smul.addr %s212, 8
          %s214 = smul.addr %s213, 8
          %s215 = scalar_lea.vmem %s0, %s214
        $region36: #{_lambda_.7} parent=31 // pred_fallthru
          _
        // Predicated region
        $region37: #{_lambda_.7} parent=31 // pred_check
          %p216 = pneg %p145
        $region38: #{_lambda_.7} parent=31 // pred_check_branch
          %218 = sbr.rel (%p216) target = $region40
        $region39: #{_lambda_.7} parent=31 // pred_region
          %p219 = scmp.lt.s32.totalorder %s15, 1
          %s220 = scalar_select %p219, %s15, 1
          %s221 = smul.addr %s220, 8
          %s222 = smul.addr %s221, 8
          %s223 = scalar_lea.vmem %s5, %s222
        $region40: #{_lambda_.7} parent=31 // pred_fallthru
          _
      $region32: #{_lambda_.7} parent=5 // pred_fallthru
        _
      %p224 = scmp.le.s32.totalorder 1, %s15
      %p225 = scmp.lt.s32.totalorder %s15, 3
      %p226 = pnand %p224, %p225
      %p227 = pneg %p226
      // Predicated region
      $region41: #{_lambda_.7} parent=5 // pred_check
        _
      $region42: #{_lambda_.7} parent=5 // pred_check_branch
        %229 = sbr.rel (%p226) target = $region44
      $region43: #{_lambda_.7} parent=5 // pred_region
        %s230 = ssub.s32 %s15, 1
        %p231 = scmp.lt.s32.totalorder %s20, 1
        %s232 = scalar_select %p231, %s20, 1
        %s233 = smul.addr %s232, 8
        %s234 = smul.addr %s233, 8
        %s235 = scalar_lea.vmem %s0, %s234
        %p236 = pneg %p41
        %p237 = pneg %p38
        %p238 = pneg %p62
        %p239 = pneg %p59
        %p240 = pneg %p83
        %p241 = pneg %p80
        %p242 = pneg %p104
        %p243 = pneg %p101
        %p244 = pneg %p125
        %p245 = pneg %p122
        %p246 = scmp.lt.s32.totalorder %s20, 1
        %s247 = scalar_select %p246, %s20, 1
        %s248 = smul.addr %s247, 8
        %s249 = smul.addr %s248, 8
        %s250 = scalar_lea.vmem %s5, %s249
        %p251 = pneg %p151
        %p252 = pneg %p148
        %p253 = pneg %p177
        %p254 = pneg %p174
        %s255 = sand.u32 %s164, 1
        %s256 = scalar_lea.sflag [#allocation3], %s255
        %s257 = sand.u32 %s164, 1
        %s258 = smul.addr %s257, 64
        %s259 = scalar_lea.vmem [#allocation2], %s258
        %p260 = scmp.lt.s32.totalorder %s20, 1
        %s261 = scalar_select %p260, %s20, 1
        %s262 = smul.addr %s261, 8
        %s263 = smul.addr %s262, 8
        %s264 = scalar_lea.vmem %s0, %s263
        %p265 = scmp.lt.s32.totalorder %s20, 1
        %s266 = scalar_select %p265, %s20, 1
        %s267 = smul.addr %s266, 8
        %s268 = smul.addr %s267, 8
        %s269 = scalar_lea.vmem %s5, %s268
        %v270 = vld [vmem:[%s264] sm:$0xff]
        %v271 = vld [vmem:[%s264 + $0x8] sm:$0xff]
        %v272 = vld [vmem:[%s264 + $0x10] sm:$0xff]
        %v273 = vld [vmem:[%s264 + $0x18] sm:$0xff]
        %v274 = vld [vmem:[%s264 + $0x20] sm:$0xff]
        %v275 = vld [vmem:[%s264 + $0x28] sm:$0xff]
        %v276 = vld [vmem:[%s264 + $0x30] sm:$0xff]
        %v277 = vld [vmem:[%s264 + $0x38] sm:$0xff]
        %v278 = vld [vmem:[%s1] sm:$0xff]
        %v279 = vld [vmem:[%s1 + $0x8] sm:$0xff]
        %vm280 = vcmask 130048
        %v282 = vsel %vm280, %v270, 0
        %v285 = vsel %vm280, %v271, 0
        %v288 = vsel %vm280, %v272, 0
        %v291 = vsel %vm280, %v273, 0
        %v294 = vsel %vm280, %v274, 0
        %v297 = vsel %vm280, %v275, 0
        %v300 = vsel %vm280, %v276, 0
        %v303 = vsel %vm280, %v277, 0
        %305 = vmatprep.subr.mxu0 0.0
        %306 = vmatpush1.msra.mxu0 %v278
        %307 = vmatprep.subr.mxu0 0.0
        %308 = vmatpush1.msra.mxu0 %v279
        %309 = vmatprep.subr.mxu0 0.0
        %310 = vmatpush1.msra.mxu0 0.0
        %311 = vmatprep.subr.mxu0 0.0
        %312 = vmatpush1.msra.mxu0 0.0
        %313 = vmatprep.subr.mxu0 0.0
        %314 = vmatpush1.msra.mxu0 0.0
        %315 = vmatprep.subr.mxu0 0.0
        %316 = vmatpush1.msra.mxu0 0.0
        %317 = vmatprep.subr.mxu0 0.0
        %318 = vmatpush1.msra.mxu0 0.0
        %319 = vmatprep.subr.mxu0 0.0
        %320 = vmatpush1.msra.mxu0 0.0
        %321 = vmatprep.subr.mxu0 0.0
        %322 = vmatpush1.msra.mxu0 0.0
        %323 = vmatprep.subr.mxu0 0.0
        %324 = vmatpush1.msra.mxu0 0.0
        %325 = vmatprep.subr.mxu0 0.0
        %326 = vmatpush1.msra.mxu0 0.0
        %327 = vmatprep.subr.mxu0 0.0
        %328 = vmatpush1.msra.mxu0 0.0
        %329 = vmatprep.subr.mxu0 0.0
        %330 = vmatpush1.msra.mxu0 0.0
        %331 = vmatprep.subr.mxu0 0.0
        %332 = vmatpush1.msra.mxu0 0.0
        %333 = vmatprep.subr.mxu0 0.0
        %334 = vmatpush1.msra.mxu0 0.0
        %335 = vmatprep.subr.mxu0 0.0
        %336 = vmatpush1.msra.mxu0 0.0
        %337 = vmatprep.subr.mxu0 0.0
        %338 = vmatpush1.msra.mxu0 0.0
        %339 = vmatprep.subr.mxu0 0.0
        %340 = vmatpush1.msra.mxu0 0.0
        %341 = vmatprep.subr.mxu0 0.0
        %342 = vmatpush1.msra.mxu0 0.0
        %343 = vmatprep.subr.mxu0 0.0
        %344 = vmatpush1.msra.mxu0 0.0
        %345 = vmatprep.subr.mxu0 0.0
        %346 = vmatpush1.msra.mxu0 0.0
        %347 = vmatprep.subr.mxu0 0.0
        %348 = vmatpush1.msra.mxu0 0.0
        %349 = vmatprep.subr.mxu0 0.0
        %350 = vmatpush1.msra.mxu0 0.0
        %351 = vmatprep.subr.mxu0 0.0
        %352 = vmatpush1.msra.mxu0 0.0
        %353 = vmatprep.subr.mxu0 0.0
        %354 = vmatpush1.msra.mxu0 0.0
        %355 = vmatprep.subr.mxu0 0.0
        %356 = vmatpush1.msra.mxu0 0.0
        %357 = vmatprep.subr.mxu0 0.0
        %358 = vmatpush1.msra.mxu0 0.0
        %359 = vmatprep.subr.mxu0 0.0
        %360 = vmatpush1.msra.mxu0 0.0
        %361 = vmatprep.subr.mxu0 0.0
        %362 = vmatpush1.msra.mxu0 0.0
        %363 = vmatprep.subr.mxu0 0.0
        %364 = vmatpush1.msra.mxu0 0.0
        %365 = vmatprep.subr.mxu0 0.0
        %366 = vmatpush1.msra.mxu0 0.0
        %367 = vmatprep.subr.mxu0 0.0
        %368 = vmatpush1.msra.mxu0 0.0
        %369 = vmatprep.mubr.f32.mxu0 0.0
        %370 = vmatmul.mubr.f32.gmra.mrb[0].mxu0 %v282
        %v371 = vpop.f32.mrb[0].mxu0
        %v372 = vadd.f32 0.0, %v371
        %v373 = vpop.f32.mrb[0].mxu0
        %374 = vmatprep.mubr.f32.mxu0 0.0
        %375 = vmatmul.mubr.f32.gmra.mrb[0].mxu0 %v285
        %v376 = vpop.f32.mrb[0].mxu0
        %v377 = vadd.f32 0.0, %v376
        %v378 = vpop.f32.mrb[0].mxu0
        %379 = vmatprep.mubr.f32.mxu0 0.0
        %380 = vmatmul.mubr.f32.gmra.mrb[0].mxu0 %v288
        %v381 = vpop.f32.mrb[0].mxu0
        %v382 = vadd.f32 0.0, %v381
        %v383 = vpop.f32.mrb[0].mxu0
        %384 = vmatprep.mubr.f32.mxu0 0.0
        %385 = vmatmul.mubr.f32.gmra.mrb[0].mxu0 %v291
        %v386 = vpop.f32.mrb[0].mxu0
        %v387 = vadd.f32 0.0, %v386
        %v388 = vpop.f32.mrb[0].mxu0
        %389 = vmatprep.mubr.f32.mxu0 0.0
        %390 = vmatmul.mubr.f32.gmra.mrb[0].mxu0 %v294
        %v391 = vpop.f32.mrb[0].mxu0
        %v392 = vadd.f32 0.0, %v391
        %v393 = vpop.f32.mrb[0].mxu0
        %394 = vmatprep.mubr.f32.mxu0 0.0
        %395 = vmatmul.mubr.f32.gmra.mrb[0].mxu0 %v297
        %v396 = vpop.f32.mrb[0].mxu0
        %v397 = vadd.f32 0.0, %v396
        %v398 = vpop.f32.mrb[0].mxu0
        %399 = vmatprep.mubr.f32.mxu0 0.0
        %400 = vmatmul.mubr.f32.gmra.mrb[0].mxu0 %v300
        %v401 = vpop.f32.mrb[0].mxu0
        %v402 = vadd.f32 0.0, %v401
        %v403 = vpop.f32.mrb[0].mxu0
        %404 = vmatprep.mubr.f32.mxu0 0.0
        %405 = vmatmul.mubr.f32.gmra.mrb[0].mxu0 %v303
        %v406 = vpop.f32.mrb[0].mxu0
        %v407 = vadd.f32 0.0, %v406
        %v408 = vpop.f32.mrb[0].mxu0
        %409 = vdwg.mxu0
        %v410 = vld [vmem:[%s4] sm:$0xff]
        %v411 = vld [vmem:[%s4 + $0x8] sm:$0xff]
        %v412 = vsel %vm280, %v372, 0.0
        %v413 = vsel %vm280, %v377, 0.0
        %v414 = vadd.f32 %v412, %v413
        %v415 = vsel %vm280, %v382, 0.0
        %v416 = vadd.f32 %v414, %v415
        %v417 = vsel %vm280, %v387, 0.0
        %v418 = vadd.f32 %v416, %v417
        %v419 = vsel %vm280, %v392, 0.0
        %v420 = vadd.f32 %v418, %v419
        %v421 = vsel %vm280, %v397, 0.0
        %v422 = vadd.f32 %v420, %v421
        %v423 = vsel %vm280, %v402, 0.0
        %v424 = vadd.f32 %v422, %v423
        %v425 = vsel %vm280, %v407, 0.0
        %v426 = vadd.f32 %v424, %v425
        %v427 = vrot.slane %v426, 4
        %v428 = vadd.f32 %v426, %v427
        %v429 = vrot.slane %v428, 2
        %v430 = vadd.f32 %v428, %v429
        %v431 = vrot.slane %v430, 1
        %v432 = vadd.f32 %v430, %v431
        %v434 = vsel %vm280, %v432, 0
        %436 = vmatprep.subr.mxu0 0.0
        %437 = vmatpush1.msra.mxu0 %v410
        %438 = vmatprep.subr.mxu0 0.0
        %439 = vmatpush1.msra.mxu0 %v411
        %440 = vmatprep.subr.mxu0 0.0
        %441 = vmatpush1.msra.mxu0 0.0
        %442 = vmatprep.subr.mxu0 0.0
        %443 = vmatpush1.msra.mxu0 0.0
        %444 = vmatprep.subr.mxu0 0.0
        %445 = vmatpush1.msra.mxu0 0.0
        %446 = vmatprep.subr.mxu0 0.0
        %447 = vmatpush1.msra.mxu0 0.0
        %448 = vmatprep.subr.mxu0 0.0
        %449 = vmatpush1.msra.mxu0 0.0
        %450 = vmatprep.subr.mxu0 0.0
        %451 = vmatpush1.msra.mxu0 0.0
        %452 = vmatprep.subr.mxu0 0.0
        %453 = vmatpush1.msra.mxu0 0.0
        %454 = vmatprep.subr.mxu0 0.0
        %455 = vmatpush1.msra.mxu0 0.0
        %456 = vmatprep.subr.mxu0 0.0
        %457 = vmatpush1.msra.mxu0 0.0
        %458 = vmatprep.subr.mxu0 0.0
        %459 = vmatpush1.msra.mxu0 0.0
        %460 = vmatprep.subr.mxu0 0.0
        %461 = vmatpush1.msra.mxu0 0.0
        %462 = vmatprep.subr.mxu0 0.0
        %463 = vmatpush1.msra.mxu0 0.0
        %464 = vmatprep.subr.mxu0 0.0
        %465 = vmatpush1.msra.mxu0 0.0
        %466 = vmatprep.subr.mxu0 0.0
        %467 = vmatpush1.msra.mxu0 0.0
        %468 = vmatprep.subr.mxu0 0.0
        %469 = vmatpush1.msra.mxu0 0.0
        %470 = vmatprep.subr.mxu0 0.0
        %471 = vmatpush1.msra.mxu0 0.0
        %472 = vmatprep.subr.mxu0 0.0
        %473 = vmatpush1.msra.mxu0 0.0
        %474 = vmatprep.subr.mxu0 0.0
        %475 = vmatpush1.msra.mxu0 0.0
        %476 = vmatprep.subr.mxu0 0.0
        %477 = vmatpush1.msra.mxu0 0.0
        %478 = vmatprep.subr.mxu0 0.0
        %479 = vmatpush1.msra.mxu0 0.0
        %480 = vmatprep.subr.mxu0 0.0
        %481 = vmatpush1.msra.mxu0 0.0
        %482 = vmatprep.subr.mxu0 0.0
        %483 = vmatpush1.msra.mxu0 0.0
        %484 = vmatprep.subr.mxu0 0.0
        %485 = vmatpush1.msra.mxu0 0.0
        %486 = vmatprep.subr.mxu0 0.0
        %487 = vmatpush1.msra.mxu0 0.0
        %488 = vmatprep.subr.mxu0 0.0
        %489 = vmatpush1.msra.mxu0 0.0
        %490 = vmatprep.subr.mxu0 0.0
        %491 = vmatpush1.msra.mxu0 0.0
        %492 = vmatprep.subr.mxu0 0.0
        %493 = vmatpush1.msra.mxu0 0.0
        %494 = vmatprep.subr.mxu0 0.0
        %495 = vmatpush1.msra.mxu0 0.0
        %496 = vmatprep.subr.mxu0 0.0
        %497 = vmatpush1.msra.mxu0 0.0
        %498 = vmatprep.subr.mxu0 0.0
        %499 = vmatpush1.msra.mxu0 0.0
        %500 = vmatprep.mubr.f32.mxu0 0.0
        %501 = vmatmul.mubr.f32.gmra.mrb[0].mxu0 %v434
        %v502 = vpop.f32.mrb[0].mxu0
        %v503 = vadd.f32 0.0, %v502
        %v504 = vpop.f32.mrb[0].mxu0
        %505 = vdwg.mxu0
        %v506 = vmul.f32 %v503, 0.001953125
        %v507 = vlaneseq
        %v508 = vshrl.u32 %v507, 7
        %v509 = vsub.s32 0, %v508
        %v510 = vrot.slane %v506, %v509
        %v511 = vsub.f32 %v372, %v510
        %v512 = vsub.f32 %v377, %v510
        %v513 = vsub.f32 %v382, %v510
        %v514 = vsub.f32 %v387, %v510
        %v515 = vsub.f32 %v392, %v510
        %v516 = vsub.f32 %v397, %v510
        %v517 = vsub.f32 %v402, %v510
        %v518 = vsub.f32 %v407, %v510
        %v519 = vmul.f32 %v511, %v511
        %v520 = vmul.f32 %v512, %v512
        %v521 = vmul.f32 %v513, %v513
        %v522 = vmul.f32 %v514, %v514
        %v523 = vmul.f32 %v515, %v515
        %v524 = vmul.f32 %v516, %v516
        %v525 = vmul.f32 %v517, %v517
        %v526 = vmul.f32 %v518, %v518
        %v527 = vsel %vm280, %v519, 0.0
        %v528 = vsel %vm280, %v520, 0.0
        %v529 = vadd.f32 %v527, %v528
        %v530 = vsel %vm280, %v521, 0.0
        %v531 = vadd.f32 %v529, %v530
        %v532 = vsel %vm280, %v522, 0.0
        %v533 = vadd.f32 %v531, %v532
        %v534 = vsel %vm280, %v523, 0.0
        %v535 = vadd.f32 %v533, %v534
        %v536 = vsel %vm280, %v524, 0.0
        %v537 = vadd.f32 %v535, %v536
        %v538 = vsel %vm280, %v525, 0.0
        %v539 = vadd.f32 %v537, %v538
        %v540 = vsel %vm280, %v526, 0.0
        %v541 = vadd.f32 %v539, %v540
        %v542 = vrot.slane %v541, 4
        %v543 = vadd.f32 %v541, %v542
        %v544 = vrot.slane %v543, 2
        %v545 = vadd.f32 %v543, %v544
        %v546 = vrot.slane %v545, 1
        %v547 = vadd.f32 %v545, %v546
        %v549 = vsel %vm280, %v547, 0
        %551 = vmatprep.subr.mxu0 0.0
        %552 = vmatpush1.msra.mxu0 %v410
        %553 = vmatprep.subr.mxu0 0.0
        %554 = vmatpush1.msra.mxu0 %v411
        %555 = vmatprep.subr.mxu0 0.0
        %556 = vmatpush1.msra.mxu0 0.0
        %557 = vmatprep.subr.mxu0 0.0
        %558 = vmatpush1.msra.mxu0 0.0
        %559 = vmatprep.subr.mxu0 0.0
        %560 = vmatpush1.msra.mxu0 0.0
        %561 = vmatprep.subr.mxu0 0.0
        %562 = vmatpush1.msra.mxu0 0.0
        %563 = vmatprep.subr.mxu0 0.0
        %564 = vmatpush1.msra.mxu0 0.0
        %565 = vmatprep.subr.mxu0 0.0
        %566 = vmatpush1.msra.mxu0 0.0
        %567 = vmatprep.subr.mxu0 0.0
        %568 = vmatpush1.msra.mxu0 0.0
        %569 = vmatprep.subr.mxu0 0.0
        %570 = vmatpush1.msra.mxu0 0.0
        %571 = vmatprep.subr.mxu0 0.0
        %572 = vmatpush1.msra.mxu0 0.0
        %573 = vmatprep.subr.mxu0 0.0
        %574 = vmatpush1.msra.mxu0 0.0
        %575 = vmatprep.subr.mxu0 0.0
        %576 = vmatpush1.msra.mxu0 0.0
        %577 = vmatprep.subr.mxu0 0.0
        %578 = vmatpush1.msra.mxu0 0.0
        %579 = vmatprep.subr.mxu0 0.0
        %580 = vmatpush1.msra.mxu0 0.0
        %581 = vmatprep.subr.mxu0 0.0
        %582 = vmatpush1.msra.mxu0 0.0
        %583 = vmatprep.subr.mxu0 0.0
        %584 = vmatpush1.msra.mxu0 0.0
        %585 = vmatprep.subr.mxu0 0.0
        %586 = vmatpush1.msra.mxu0 0.0
        %587 = vmatprep.subr.mxu0 0.0
        %588 = vmatpush1.msra.mxu0 0.0
        %589 = vmatprep.subr.mxu0 0.0
        %590 = vmatpush1.msra.mxu0 0.0
        %591 = vmatprep.subr.mxu0 0.0
        %592 = vmatpush1.msra.mxu0 0.0
        %593 = vmatprep.subr.mxu0 0.0
        %594 = vmatpush1.msra.mxu0 0.0
        %595 = vmatprep.subr.mxu0 0.0
        %596 = vmatpush1.msra.mxu0 0.0
        %597 = vmatprep.subr.mxu0 0.0
        %598 = vmatpush1.msra.mxu0 0.0
        %599 = vmatprep.subr.mxu0 0.0
        %600 = vmatpush1.msra.mxu0 0.0
        %601 = vmatprep.subr.mxu0 0.0
        %602 = vmatpush1.msra.mxu0 0.0
        %603 = vmatprep.subr.mxu0 0.0
        %604 = vmatpush1.msra.mxu0 0.0
        %605 = vmatprep.subr.mxu0 0.0
        %606 = vmatpush1.msra.mxu0 0.0
        %607 = vmatprep.subr.mxu0 0.0
        %608 = vmatpush1.msra.mxu0 0.0
        %609 = vmatprep.subr.mxu0 0.0
        %610 = vmatpush1.msra.mxu0 0.0
        %611 = vmatprep.subr.mxu0 0.0
        %612 = vmatpush1.msra.mxu0 0.0
        %613 = vmatprep.subr.mxu0 0.0
        %614 = vmatpush1.msra.mxu0 0.0
        %615 = vmatprep.mubr.f32.mxu0 0.0
        %616 = vmatmul.mubr.f32.gmra.mrb[0].mxu0 %v549
        %v617 = vpop.f32.mrb[0].mxu0
        %v618 = vadd.f32 0.0, %v617
        %v619 = vpop.f32.mrb[0].mxu0
        %620 = vdwg.mxu0
        %v621 = vmul.f32 %v618, 0.001953125
        %v622 = vadd.f32 %v621, 1e-05
        %v623 = vrsqrt.pop %v622
        %v624 = vlaneseq
        %v625 = vshrl.u32 %v624, 7
        %v626 = vsub.s32 0, %v625
        %v627 = vrot.slane %v623, %v626
        %v628 = vmul.f32 %v511, %v627
        %v629 = vmul.f32 %v512, %v627
        %v630 = vmul.f32 %v513, %v627
        %v631 = vmul.f32 %v514, %v627
        %v632 = vmul.f32 %v515, %v627
        %v633 = vmul.f32 %v516, %v627
        %v634 = vmul.f32 %v517, %v627
        %v635 = vmul.f32 %v518, %v627
        %v636 = vld [vmem:[%s2] sm:$0x1]
        %v638 = vlaneseq
        %v639 = vshrl.u32 %v638, 7
        %v640 = vsub.s32 0, %v639
        %v641 = vrot.slane %v636, %v640
        %v643 = vmul.f32 %v628, %v641
        %v644 = vmul.f32 %v629, %v641
        %v645 = vmul.f32 %v630, %v641
        %v646 = vmul.f32 %v631, %v641
        %v647 = vmul.f32 %v632, %v641
        %v648 = vmul.f32 %v633, %v641
        %v649 = vmul.f32 %v634, %v641
        %v650 = vmul.f32 %v635, %v641
        %v651 = vld [vmem:[%s3] sm:$0x1]
        %v653 = vlaneseq
        %v654 = vshrl.u32 %v653, 7
        %v655 = vsub.s32 0, %v654
        %v656 = vrot.slane %v651, %v655
        %v658 = vadd.f32 %v643, %v656
        %v659 = vadd.f32 %v644, %v656
        %v660 = vadd.f32 %v645, %v656
        %v661 = vadd.f32 %v646, %v656
        %v662 = vadd.f32 %v647, %v656
        %v663 = vadd.f32 %v648, %v656
        %v664 = vadd.f32 %v649, %v656
        %v665 = vadd.f32 %v650, %v656
        %v666 = vld [vmem:[%s269] sm:$0xff]
        %v667 = vld [vmem:[%s269 + $0x8] sm:$0xff]
        %v668 = vld [vmem:[%s269 + $0x10] sm:$0xff]
        %v669 = vld [vmem:[%s269 + $0x18] sm:$0xff]
        %v670 = vld [vmem:[%s269 + $0x20] sm:$0xff]
        %v671 = vld [vmem:[%s269 + $0x28] sm:$0xff]
        %v672 = vld [vmem:[%s269 + $0x30] sm:$0xff]
        %v673 = vld [vmem:[%s269 + $0x38] sm:$0xff]
        %v674 = vadd.f32 %v658, %v666
        %v675 = vadd.f32 %v659, %v667
        %v676 = vadd.f32 %v660, %v668
        %v677 = vadd.f32 %v661, %v669
        %v678 = vadd.f32 %v662, %v670
        %v679 = vadd.f32 %v663, %v671
        %v680 = vadd.f32 %v664, %v672
        %v681 = vadd.f32 %v665, %v673
        %v682 = vmax.f32 %v674, 0.0
        %v683 = vmax.f32 %v675, 0.0
        %v684 = vmax.f32 %v676, 0.0
        %v685 = vmax.f32 %v677, 0.0
        %v686 = vmax.f32 %v678, 0.0
        %v687 = vmax.f32 %v679, 0.0
        %v688 = vmax.f32 %v680, 0.0
        %v689 = vmax.f32 %v681, 0.0
        %690 = vst.msk [vmem:[%s259] sm:$0xff] %vm280, %v682
        %691 = vst.msk [vmem:[%s259 + $0x8] sm:$0xff] %vm280, %v683
        %692 = vst.msk [vmem:[%s259 + $0x10] sm:$0xff] %vm280, %v684
        %693 = vst.msk [vmem:[%s259 + $0x18] sm:$0xff] %vm280, %v685
        %694 = vst.msk [vmem:[%s259 + $0x20] sm:$0xff] %vm280, %v686
        %695 = vst.msk [vmem:[%s259 + $0x28] sm:$0xff] %vm280, %v687
        %696 = vst.msk [vmem:[%s259 + $0x30] sm:$0xff] %vm280, %v688
        %697 = vst.msk [vmem:[%s259 + $0x38] sm:$0xff] %vm280, %v689
        %s698 = sand.u32 %s164, 1
        %s699 = scalar_lea.sflag [#allocation3], %s698
        %s700 = sand.u32 %s164, 1
        %s701 = smul.addr %s700, 64
        %s702 = scalar_lea.vmem [#allocation2], %s701
        // Predicated region
        $region45: #{_lambda_.7} parent=43 // pred_check
          %p703 = pneg %p174
        $region46: #{_lambda_.7} parent=43 // pred_check_branch
          %705 = sbr.rel (%p703) target = $region48
        $region47: #{_lambda_.7} parent=43 // pred_region
          %s707 = ssub.s32 1024, 1024
          %708 = vsyncadd %s699, %s707
          %s709 = smul.addr %s20, 8
          %s710 = smul.addr %s709, 128
          %s711 = scalar_lea.hbm %s6, %s710
          %s712 = sshll.u32 %s702, 4
          %s713 = int_to_ptr.vmem [resolvable:$true] %s712
          %718 = dma.vmem_to_hbm [thread:$0]  %s713, 1024, %s711, %s699, 128, 128, 8
        $region48: #{_lambda_.7} parent=43 // pred_fallthru
          _
      $region44: #{_lambda_.7} parent=5 // pred_fallthru
        _
      %p719 = scmp.le.s32.totalorder 2, %s15
      // Predicated region
      $region49: #{_lambda_.7} parent=5 // pred_check
        %p720 = pneg %p719
      $region50: #{_lambda_.7} parent=5 // pred_check_branch
        %722 = sbr.rel (%p720) target = $region52
      $region51: #{_lambda_.7} parent=5 // pred_region
        %s723 = ssub.s32 %s15, 2
        // Predicated region
        $region53: #{_lambda_.7} parent=51 // pred_check
          %p724 = pneg %p180
        $region54: #{_lambda_.7} parent=51 // pred_check_branch
          %726 = sbr.rel (%p724) target = $region56
        $region55: #{_lambda_.7} parent=51 // pred_region
          %s727 = sand.u32 %s165, 1
          %s728 = scalar_lea.sflag [#allocation3], %s727
          %s729 = sand.u32 %s165, 1
          %s730 = smul.addr %s729, 64
          %s731 = scalar_lea.vmem [#allocation2], %s730
          %732 = dma.done %s728, 1024
        $region56: #{_lambda_.7} parent=51 // pred_fallthru
          _
      $region52: #{_lambda_.7} parent=5 // pred_fallthru
        _
    $region6: #{_lambda_.7} parent=1 // loop_footer
      %s19 = sadd.s32 1, %s15
    $region7: #{_lambda_.7} parent=1 // loop_footer_branch
      %14 = sbr.rel target = $region3
    $region8: #{_lambda_.7} parent=1 // loop_exit
      _
    %733 = vsyncpa [#allocation3], 1
    %s734 = scalar_lea.sflag [#allocation3], 1
    %735 = vsyncpa %s734, 1

// kernel: _lambda_.5
$region0: #{_lambda_.5}
  #allocation0 [shape = 'u32[]', space=smem, size = 0x4, offset = 0x4, fixed_abs, tag = 'smem constant byte address 0x4 - core index']
  #allocation1 [shape = 'u32[144,128]{1,0:T(1,128)}', space=vmem, size = 0x12000, scoped, tag = 'internal scratch']
  #allocation2 [shape = 'f32[71,16]{1,0:T(8,128)}', space=vmem, size = 0x9000, scoped, tag = 'scratch operand']
  %s0 = inlined_call_operand.vmem [shape: f32[2,4,81,16], index: 0, kind: input, shape index: {}]
  %s1 = inlined_call_operand.vmem [shape: f32[9,16,16], index: 1, kind: input, shape index: {}]
  %s2 = inlined_call_operand.vmem [shape: f32[71,1], index: 2, kind: input, shape index: {}]
  %s3 = inlined_call_operand.vmem [shape: f32[1,16], index: 3, kind: input, shape index: {}]
  %s4 = inlined_call_operand.vmem [shape: f32[1,16], index: 4, kind: input, shape index: {}]
  %s5 = inlined_call_operand.vmem [shape: f32[16,16], index: 5, kind: input, shape index: {}]
  %s6 = inlined_call_operand.vmem [shape: f32[2,8,8,16], index: 6, kind: output, shape index: {}]
  %s7 = sld [smem:[#allocation0]]
  $region57: #{_lambda_.5} parent=0
    _
  %s9 = ssub.s32 1, %s7
  %s10 = scalar_select 0, %s9, %s7
  loop: start=0, step=1, limit=4
  $region2: #{_lambda_.5} parent=0 // loop_pre_header
    _
  $region3: #{_lambda_.5} parent=0 // loop_header
    %s12 = sphi 0, %s16
    %p13 = scmp.ge.s32.totalorder %s12, 4
    %s22 = sphi 0, %s24
    %s25 = sphi 0, %s22
    %s26 = sphi 0, %s25
    %s42 = sphi 0, %s26
    %s46 = sphi 0, %s46
    %s48 = sphi 0, %s46
    %s49 = sphi 0, %s48
    %s63 = sphi 0, %s49
    %s67 = sphi 0, %s67
    %s69 = sphi 0, %s67
    %s70 = sphi 0, %s69
    %s84 = sphi 0, %s70
    %s88 = sphi 0, %s88
    %s90 = sphi 0, %s88
    %s91 = sphi 0, %s90
    %s105 = sphi 0, %s91
    %s109 = sphi 0, %s109
    %s111 = sphi 0, %s109
    %s112 = sphi 0, %s111
    %s126 = sphi 0, %s112
    %s130 = sphi 0, %s130
    %s132 = sphi 0, %s130
    %s133 = sphi 0, %s132
    %s147 = sphi 0, %s133
    %s153 = sphi 0, %s155
    %s156 = sphi 0, %s153
    %s157 = sphi 0, %s156
    %s173 = sphi 0, %s157
  $region4: #{_lambda_.5} parent=0 // loop_header_branch
    %15 = sbr.rel (%p13) target = $region8
  $region5: #{_lambda_.5} parent=0 // loop_body
    %s17 = ssub.s32 %s12, 1
    %s18 = ssub.s32 %s12, 2
    %s19 = sadd.s32 %s12, 1
    %s20 = ssub.s32 %s12, %s19
    %p21 = scmp.eq.s32.totalorder %s20, 0
    %s23 = sadd.s32 %s22, 1
    %s24 = scalar_select %p21, %s22, %s23
    %p27 = pneg %p21
    %p28 = scmp.eq.s32.totalorder %s12, 1
    %p29 = por %p27, %p28
    %p30 = scmp.ne.s32.totalorder %s22, %s25
    %p31 = scmp.eq.s32.totalorder %s12, 0
    %p32 = por %p30, %p31
    %p33 = scmp.ne.s32.totalorder %s22, %s25
    %p34 = scmp.eq.s32.totalorder %s17, 1
    %p35 = por %p33, %p34
    %p36 = scmp.ne.s32.totalorder %s25, %s26
    %p37 = scmp.eq.s32.totalorder %s17, 0
    %p38 = por %p36, %p37
    %p39 = scmp.ne.s32.totalorder %s25, %s26
    %p40 = scmp.eq.s32.totalorder %s18, 1
    %p41 = por %p39, %p40
    %p43 = scmp.ne.s32.totalorder %s26, %s42
    %p44 = scmp.eq.s32.totalorder %s18, 0
    %p45 = por %p43, %p44
    %s47 = sadd.s32 %s46, 1
    %p50 = scmp.eq.s32.totalorder %s12, 1
    %p51 = scmp.ne.s32.totalorder %s46, %s48
    %p52 = scmp.eq.s32.totalorder %s12, 0
    %p53 = por %p51, %p52
    %p54 = scmp.ne.s32.totalorder %s46, %s48
    %p55 = scmp.eq.s32.totalorder %s17, 1
    %p56 = por %p54, %p55
    %p57 = scmp.ne.s32.totalorder %s48, %s49
    %p58 = scmp.eq.s32.totalorder %s17, 0
    %p59 = por %p57, %p58
    %p60 = scmp.ne.s32.totalorder %s48, %s49
    %p61 = scmp.eq.s32.totalorder %s18, 1
    %p62 = por %p60, %p61
    %p64 = scmp.ne.s32.totalorder %s49, %s63
    %p65 = scmp.eq.s32.totalorder %s18, 0
    %p66 = por %p64, %p65
    %s68 = sadd.s32 %s67, 1
    %p71 = scmp.eq.s32.totalorder %s12, 1
    %p72 = scmp.ne.s32.totalorder %s67, %s69
    %p73 = scmp.eq.s32.totalorder %s12, 0
    %p74 = por %p72, %p73
    %p75 = scmp.ne.s32.totalorder %s67, %s69
    %p76 = scmp.eq.s32.totalorder %s17, 1
    %p77 = por %p75, %p76
    %p78 = scmp.ne.s32.totalorder %s69, %s70
    %p79 = scmp.eq.s32.totalorder %s17, 0
    %p80 = por %p78, %p79
    %p81 = scmp.ne.s32.totalorder %s69, %s70
    %p82 = scmp.eq.s32.totalorder %s18, 1
    %p83 = por %p81, %p82
    %p85 = scmp.ne.s32.totalorder %s70, %s84
    %p86 = scmp.eq.s32.totalorder %s18, 0
    %p87 = por %p85, %p86
    %s89 = sadd.s32 %s88, 1
    %p92 = scmp.eq.s32.totalorder %s12, 1
    %p93 = scmp.ne.s32.totalorder %s88, %s90
    %p94 = scmp.eq.s32.totalorder %s12, 0
    %p95 = por %p93, %p94
    %p96 = scmp.ne.s32.totalorder %s88, %s90
    %p97 = scmp.eq.s32.totalorder %s17, 1
    %p98 = por %p96, %p97
    %p99 = scmp.ne.s32.totalorder %s90, %s91
    %p100 = scmp.eq.s32.totalorder %s17, 0
    %p101 = por %p99, %p100
    %p102 = scmp.ne.s32.totalorder %s90, %s91
    %p103 = scmp.eq.s32.totalorder %s18, 1
    %p104 = por %p102, %p103
    %p106 = scmp.ne.s32.totalorder %s91, %s105
    %p107 = scmp.eq.s32.totalorder %s18, 0
    %p108 = por %p106, %p107
    %s110 = sadd.s32 %s109, 1
    %p113 = scmp.eq.s32.totalorder %s12, 1
    %p114 = scmp.ne.s32.totalorder %s109, %s111
    %p115 = scmp.eq.s32.totalorder %s12, 0
    %p116 = por %p114, %p115
    %p117 = scmp.ne.s32.totalorder %s109, %s111
    %p118 = scmp.eq.s32.totalorder %s17, 1
    %p119 = por %p117, %p118
    %p120 = scmp.ne.s32.totalorder %s111, %s112
    %p121 = scmp.eq.s32.totalorder %s17, 0
    %p122 = por %p120, %p121
    %p123 = scmp.ne.s32.totalorder %s111, %s112
    %p124 = scmp.eq.s32.totalorder %s18, 1
    %p125 = por %p123, %p124
    %p127 = scmp.ne.s32.totalorder %s112, %s126
    %p128 = scmp.eq.s32.totalorder %s18, 0
    %p129 = por %p127, %p128
    %s131 = sadd.s32 %s130, 1
    %p134 = scmp.eq.s32.totalorder %s12, 1
    %p135 = scmp.ne.s32.totalorder %s130, %s132
    %p136 = scmp.eq.s32.totalorder %s12, 0
    %p137 = por %p135, %p136
    %p138 = scmp.ne.s32.totalorder %s130, %s132
    %p139 = scmp.eq.s32.totalorder %s17, 1
    %p140 = por %p138, %p139
    %p141 = scmp.ne.s32.totalorder %s132, %s133
    %p142 = scmp.eq.s32.totalorder %s17, 0
    %p143 = por %p141, %p142
    %p144 = scmp.ne.s32.totalorder %s132, %s133
    %p145 = scmp.eq.s32.totalorder %s18, 1
    %p146 = por %p144, %p145
    %p148 = scmp.ne.s32.totalorder %s133, %s147
    %p149 = scmp.eq.s32.totalorder %s18, 0
    %p150 = por %p148, %p149
    %s151 = ssub.s32 %s12, %s19
    %p152 = scmp.eq.s32.totalorder %s151, 0
    %s154 = sadd.s32 %s153, 1
    %s155 = scalar_select %p152, %s153, %s154
    %p158 = pneg %p152
    %p159 = scmp.eq.s32.totalorder %s12, 1
    %p160 = por %p158, %p159
    %p161 = scmp.ne.s32.totalorder %s153, %s156
    %p162 = scmp.eq.s32.totalorder %s12, 0
    %p163 = por %p161, %p162
    %p164 = scmp.ne.s32.totalorder %s153, %s156
    %p165 = scmp.eq.s32.totalorder %s17, 1
    %p166 = por %p164, %p165
    %p167 = scmp.ne.s32.totalorder %s156, %s157
    %p168 = scmp.eq.s32.totalorder %s17, 0
    %p169 = por %p167, %p168
    %p170 = scmp.ne.s32.totalorder %s156, %s157
    %p171 = scmp.eq.s32.totalorder %s18, 1
    %p172 = por %p170, %p171
    %p174 = scmp.ne.s32.totalorder %s157, %s173
    %p175 = scmp.eq.s32.totalorder %s18, 0
    %p176 = por %p174, %p175
    %p177 = scmp.le.s32.totalorder 1, %s12
    %p178 = scmp.lt.s32.totalorder %s12, 3
    %p179 = pnand %p177, %p178
    %p180 = pneg %p179
    // Predicated region
    $region9: #{_lambda_.5} parent=5 // pred_check
      _
    $region10: #{_lambda_.5} parent=5 // pred_check_branch
      %182 = sbr.rel (%p179) target = $region12
    $region11: #{_lambda_.5} parent=5 // pred_region
      %s183 = ssub.s32 %s12, 1
      // Predicated region
      $region13: #{_lambda_.5} parent=11 // pred_check
        %p184 = pneg %p59
      $region14: #{_lambda_.5} parent=11 // pred_check_branch
        %186 = sbr.rel (%p184) target = $region16
      $region15: #{_lambda_.5} parent=11 // pred_region
        _
      $region16: #{_lambda_.5} parent=11 // pred_fallthru
        _
      // Predicated region
      $region17: #{_lambda_.5} parent=11 // pred_check
        %p187 = pneg %p80
      $region18: #{_lambda_.5} parent=11 // pred_check_branch
        %189 = sbr.rel (%p187) target = $region20
      $region19: #{_lambda_.5} parent=11 // pred_region
        _
      $region20: #{_lambda_.5} parent=11 // pred_fallthru
        _
      // Predicated region
      $region21: #{_lambda_.5} parent=11 // pred_check
        %p190 = pneg %p101
      $region22: #{_lambda_.5} parent=11 // pred_check_branch
        %192 = sbr.rel (%p190) target = $region24
      $region23: #{_lambda_.5} parent=11 // pred_region
        _
      $region24: #{_lambda_.5} parent=11 // pred_fallthru
        _
      // Predicated region
      $region25: #{_lambda_.5} parent=11 // pred_check
        %p193 = pneg %p122
      $region26: #{_lambda_.5} parent=11 // pred_check_branch
        %195 = sbr.rel (%p193) target = $region28
      $region27: #{_lambda_.5} parent=11 // pred_region
        _
      $region28: #{_lambda_.5} parent=11 // pred_fallthru
        _
      // Predicated region
      $region29: #{_lambda_.5} parent=11 // pred_check
        %p196 = pneg %p143
      $region30: #{_lambda_.5} parent=11 // pred_check_branch
        %198 = sbr.rel (%p196) target = $region32
      $region31: #{_lambda_.5} parent=11 // pred_region
        _
      $region32: #{_lambda_.5} parent=11 // pred_fallthru
        _
    $region12: #{_lambda_.5} parent=5 // pred_fallthru
      _
    %p199 = scmp.lt.s32.totalorder %s12, 2
    // Predicated region
    $region33: #{_lambda_.5} parent=5 // pred_check
      %p200 = pneg %p199
    $region34: #{_lambda_.5} parent=5 // pred_check_branch
      %202 = sbr.rel (%p200) target = $region36
    $region35: #{_lambda_.5} parent=5 // pred_region
      // Predicated region
      $region37: #{_lambda_.5} parent=35 // pred_check
        %p203 = pneg %p32
      $region38: #{_lambda_.5} parent=35 // pred_check_branch
        %205 = sbr.rel (%p203) target = $region40
      $region39: #{_lambda_.5} parent=35 // pred_region
        %p206 = scmp.lt.s32.totalorder %s12, 1
        %s207 = scalar_select %p206, %s12, 1
        %s208 = smul.addr %s207, 44
        %s209 = smul.addr %s208, 8
        %s210 = scalar_lea.vmem %s0, %s209
      $region40: #{_lambda_.5} parent=35 // pred_fallthru
        _
    $region36: #{_lambda_.5} parent=5 // pred_fallthru
      _
    %p211 = scmp.le.s32.totalorder 1, %s12
    %p212 = scmp.lt.s32.totalorder %s12, 3
    %p213 = pnand %p211, %p212
    %p214 = pneg %p213
    // Predicated region
    $region41: #{_lambda_.5} parent=5 // pred_check
      _
    $region42: #{_lambda_.5} parent=5 // pred_check_branch
      %216 = sbr.rel (%p213) target = $region44
    $region43: #{_lambda_.5} parent=5 // pred_region
      %s217 = ssub.s32 %s12, 1
      %p218 = scmp.lt.s32.totalorder %s17, 1
      %s219 = scalar_select %p218, %s17, 1
      %s220 = smul.addr %s219, 44
      %s221 = smul.addr %s220, 8
      %s222 = scalar_lea.vmem %s0, %s221
      %p223 = pneg %p38
      %p224 = pneg %p35
      %p225 = pneg %p59
      %p226 = pneg %p56
      %p227 = pneg %p80
      %p228 = pneg %p77
      %p229 = pneg %p101
      %p230 = pneg %p98
      %p231 = pneg %p122
      %p232 = pneg %p119
      %p233 = pneg %p143
      %p234 = pneg %p140
      %p235 = pneg %p169
      %p236 = pneg %p166
      %p237 = scmp.lt.s32.totalorder %s17, 1
      %s238 = scalar_select %p237, %s17, 1
      %s239 = smul.addr %s238, 8
      %s240 = smul.addr %s239, 8
      %s241 = scalar_lea.vmem %s6, %s240
      %p242 = scmp.lt.s32.totalorder %s17, 1
      %s243 = scalar_select %p242, %s17, 1
      %s244 = smul.addr %s243, 44
      %s245 = smul.addr %s244, 8
      %s246 = scalar_lea.vmem %s0, %s245
      %p247 = scmp.lt.s32.totalorder %s17, 1
      %s248 = scalar_select %p247, %s17, 1
      %s249 = smul.addr %s248, 8
      %s250 = smul.addr %s249, 8
      %s251 = scalar_lea.vmem %s6, %s250
      %vm252 = vcmask 130048
      %253 = vst.msk [vmem:[#allocation2] sm:$0xff] %vm252, 0.0
      %254 = vst.msk [vmem:[#allocation2 + $0x8] sm:$0xff] %vm252, 0.0
      %255 = vst.msk [vmem:[#allocation2 + $0x10] sm:$0xff] %vm252, 0.0
      %256 = vst.msk [vmem:[#allocation2 + $0x18] sm:$0xff] %vm252, 0.0
      %257 = vst.msk [vmem:[#allocation2 + $0x20] sm:$0xff] %vm252, 0.0
      %258 = vst.msk [vmem:[#allocation2 + $0x28] sm:$0xff] %vm252, 0.0
      %259 = vst.msk [vmem:[#allocation2 + $0x30] sm:$0xff] %vm252, 0.0
      %260 = vst.msk [vmem:[#allocation2 + $0x38] sm:$0xff] %vm252, 0.0
      %vm261 = vcmask 129024
      %262 = vst.msk [vmem:[#allocation2 + $0x40] sm:$0x7f] %vm261, 0.0
      %v263 = vld [vmem:[%s246] sm:$0xff]
      %v264 = vld [vmem:[%s246 + $0x8] sm:$0xff]
      %v265 = vld [vmem:[%s246 + $0x10] sm:$0xff]
      %v266 = vld [vmem:[%s246 + $0x18] sm:$0xff]
      %v267 = vld [vmem:[%s246 + $0x20] sm:$0xff]
      %v268 = vld [vmem:[%s246 + $0x28] sm:$0xff]
      %v269 = vld [vmem:[%s246 + $0x30] sm:$0xff]
      %v270 = vld [vmem:[%s246 + $0x38] sm:$0xff]
      %v271 = vld [vmem:[%s246 + $0x40] sm:$0x7f]
      %v272 = vld [vmem:[#allocation2] sm:$0xff]
      %v273 = vld [vmem:[#allocation2 + $0x8] sm:$0xff]
      %v274 = vld [vmem:[#allocation2 + $0x10] sm:$0xff]
      %v275 = vld [vmem:[#allocation2 + $0x18] sm:$0xff]
      %v276 = vld [vmem:[#allocation2 + $0x20] sm:$0xff]
      %v277 = vld [vmem:[#allocation2 + $0x28] sm:$0xff]
      %v278 = vld [vmem:[#allocation2 + $0x30] sm:$0xff]
      %v279 = vld [vmem:[#allocation2 + $0x38] sm:$0xff]
      %v280 = vld [vmem:[#allocation2 + $0x40] sm:$0x7f]
      %v281 = vld [vmem:[%s1] sm:$0xff]
      %v282 = vld [vmem:[%s1 + $0x8] sm:$0xff]
      %v284 = vsel %vm252, %v263, 0
      %v287 = vsel %vm252, %v264, 0
      %v290 = vsel %vm252, %v265, 0
      %v293 = vsel %vm252, %v266, 0
      %v296 = vsel %vm252, %v267, 0
      %v299 = vsel %vm252, %v268, 0
      %v302 = vsel %vm252, %v269, 0
      %v305 = vsel %vm252, %v270, 0
      %v308 = vsel %vm252, %v271, 0
      %310 = vmatprep.subr.mxu0 0.0
      %311 = vmatpush1.msra.mxu0 %v281
      %312 = vmatprep.subr.mxu0 0.0
      %313 = vmatpush1.msra.mxu0 %v282
      %314 = vmatprep.subr.mxu0 0.0
      %315 = vmatpush1.msra.mxu0 0.0
      %316 = vmatprep.subr.mxu0 0.0
      %317 = vmatpush1.msra.mxu0 0.0
      %318 = vmatprep.subr.mxu0 0.0
      %319 = vmatpush1.msra.mxu0 0.0
      %320 = vmatprep.subr.mxu0 0.0
      %321 = vmatpush1.msra.mxu0 0.0
      %322 = vmatprep.subr.mxu0 0.0
      %323 = vmatpush1.msra.mxu0 0.0
      %324 = vmatprep.subr.mxu0 0.0
      %325 = vmatpush1.msra.mxu0 0.0
      %326 = vmatprep.subr.mxu0 0.0
      %327 = vmatpush1.msra.mxu0 0.0
      %328 = vmatprep.subr.mxu0 0.0
      %329 = vmatpush1.msra.mxu0 0.0
      %330 = vmatprep.subr.mxu0 0.0
      %331 = vmatpush1.msra.mxu0 0.0
      %332 = vmatprep.subr.mxu0 0.0
      %333 = vmatpush1.msra.mxu0 0.0
      %334 = vmatprep.subr.mxu0 0.0
      %335 = vmatpush1.msra.mxu0 0.0
      %336 = vmatprep.subr.mxu0 0.0
      %337 = vmatpush1.msra.mxu0 0.0
      %338 = vmatprep.subr.mxu0 0.0
      %339 = vmatpush1.msra.mxu0 0.0
      %340 = vmatprep.subr.mxu0 0.0
      %341 = vmatpush1.msra.mxu0 0.0
      %342 = vmatprep.subr.mxu0 0.0
      %343 = vmatpush1.msra.mxu0 0.0
      %344 = vmatprep.subr.mxu0 0.0
      %345 = vmatpush1.msra.mxu0 0.0
      %346 = vmatprep.subr.mxu0 0.0
      %347 = vmatpush1.msra.mxu0 0.0
      %348 = vmatprep.subr.mxu0 0.0
      %349 = vmatpush1.msra.mxu0 0.0
      %350 = vmatprep.subr.mxu0 0.0
      %351 = vmatpush1.msra.mxu0 0.0
      %352 = vmatprep.subr.mxu0 0.0
      %353 = vmatpush1.msra.mxu0 0.0
      %354 = vmatprep.subr.mxu0 0.0
      %355 = vmatpush1.msra.mxu0 0.0
      %356 = vmatprep.subr.mxu0 0.0
      %357 = vmatpush1.msra.mxu0 0.0
      %358 = vmatprep.subr.mxu0 0.0
      %359 = vmatpush1.msra.mxu0 0.0
      %360 = vmatprep.subr.mxu0 0.0
      %361 = vmatpush1.msra.mxu0 0.0
      %362 = vmatprep.subr.mxu0 0.0
      %363 = vmatpush1.msra.mxu0 0.0
      %364 = vmatprep.subr.mxu0 0.0
      %365 = vmatpush1.msra.mxu0 0.0
      %366 = vmatprep.subr.mxu0 0.0
      %367 = vmatpush1.msra.mxu0 0.0
      %368 = vmatprep.subr.mxu0 0.0
      %369 = vmatpush1.msra.mxu0 0.0
      %370 = vmatprep.subr.mxu0 0.0
      %371 = vmatpush1.msra.mxu0 0.0
      %372 = vmatprep.subr.mxu0 0.0
      %373 = vmatpush1.msra.mxu0 0.0
      %374 = vmatprep.mubr.f32.mxu0 0.0
      %375 = vmatmul.mubr.f32.gmra.mrb[0].mxu0 %v284
      %v376 = vpop.f32.mrb[0].mxu0
      %v377 = vadd.f32 0.0, %v376
      %v378 = vpop.f32.mrb[0].mxu0
      %379 = vmatprep.mubr.f32.mxu0 0.0
      %380 = vmatmul.mubr.f32.gmra.mrb[0].mxu0 %v287
      %v381 = vpop.f32.mrb[0].mxu0
      %v382 = vadd.f32 0.0, %v381
      %v383 = vpop.f32.mrb[0].mxu0
      %384 = vmatprep.mubr.f32.mxu0 0.0
      %385 = vmatmul.mubr.f32.gmra.mrb[0].mxu0 %v290
      %v386 = vpop.f32.mrb[0].mxu0
      %v387 = vadd.f32 0.0, %v386
      %v388 = vpop.f32.mrb[0].mxu0
      %389 = vmatprep.mubr.f32.mxu0 0.0
      %390 = vmatmul.mubr.f32.gmra.mrb[0].mxu0 %v293
      %v391 = vpop.f32.mrb[0].mxu0
      %v392 = vadd.f32 0.0, %v391
      %v393 = vpop.f32.mrb[0].mxu0
      %394 = vmatprep.mubr.f32.mxu0 0.0
      %395 = vmatmul.mubr.f32.gmra.mrb[0].mxu0 %v296
      %v396 = vpop.f32.mrb[0].mxu0
      %v397 = vadd.f32 0.0, %v396
      %v398 = vpop.f32.mrb[0].mxu0
      %399 = vmatprep.mubr.f32.mxu0 0.0
      %400 = vmatmul.mubr.f32.gmra.mrb[0].mxu0 %v299
      %v401 = vpop.f32.mrb[0].mxu0
      %v402 = vadd.f32 0.0, %v401
      %v403 = vpop.f32.mrb[0].mxu0
      %404 = vmatprep.mubr.f32.mxu0 0.0
      %405 = vmatmul.mubr.f32.gmra.mrb[0].mxu0 %v302
      %v406 = vpop.f32.mrb[0].mxu0
      %v407 = vadd.f32 0.0, %v406
      %v408 = vpop.f32.mrb[0].mxu0
      %409 = vmatprep.mubr.f32.mxu0 0.0
      %410 = vmatmul.mubr.f32.gmra.mrb[0].mxu0 %v305
      %v411 = vpop.f32.mrb[0].mxu0
      %v412 = vadd.f32 0.0, %v411
      %v413 = vpop.f32.mrb[0].mxu0
      %414 = vmatprep.mubr.f32.mxu0 0.0
      %415 = vmatmul.mubr.f32.gmra.mrb[0].mxu0 %v308
      %v416 = vpop.f32.mrb[0].mxu0
      %v417 = vadd.f32 0.0, %v416
      %v418 = vpop.f32.mrb[0].mxu0
      %419 = vdwg.mxu0
      %v420 = vadd.f32 %v272, %v377
      %v421 = vadd.f32 %v273, %v382
      %v422 = vadd.f32 %v274, %v387
      %v423 = vadd.f32 %v275, %v392
      %v424 = vadd.f32 %v276, %v397
      %v425 = vadd.f32 %v277, %v402
      %v426 = vadd.f32 %v278, %v407
      %v427 = vadd.f32 %v279, %v412
      %v428 = vadd.f32 %v280, %v417
      %429 = vst.msk [vmem:[#allocation2] sm:$0xff] %vm252, %v420
      %430 = vst.msk [vmem:[#allocation2 + $0x8] sm:$0xff] %vm252, %v421
      %431 = vst.msk [vmem:[#allocation2 + $0x10] sm:$0xff] %vm252, %v422
      %432 = vst.msk [vmem:[#allocation2 + $0x18] sm:$0xff] %vm252, %v423
      %433 = vst.msk [vmem:[#allocation2 + $0x20] sm:$0xff] %vm252, %v424
      %434 = vst.msk [vmem:[#allocation2 + $0x28] sm:$0xff] %vm252, %v425
      %435 = vst.msk [vmem:[#allocation2 + $0x30] sm:$0xff] %vm252, %v426
      %436 = vst.msk [vmem:[#allocation2 + $0x38] sm:$0xff] %vm252, %v427
      %437 = vst.msk [vmem:[#allocation2 + $0x40] sm:$0x7f] %vm261, %v428
      %s438 = scalar_lea.vmem %s246, 88
      %v439 = vld [vmem:[%s438] sm:$0xff]
      %v440 = vld [vmem:[%s438 + $0x8] sm:$0xff]
      %v441 = vld [vmem:[%s438 + $0x10] sm:$0xff]
      %v442 = vld [vmem:[%s438 + $0x18] sm:$0xff]
      %v443 = vld [vmem:[%s438 + $0x20] sm:$0xff]
      %v444 = vld [vmem:[%s438 + $0x28] sm:$0xff]
      %v445 = vld [vmem:[%s438 + $0x30] sm:$0xff]
      %v446 = vld [vmem:[%s438 + $0x38] sm:$0xff]
      %v447 = vld [vmem:[%s438 + $0x40] sm:$0x7f]
      %v448 = vld [vmem:[#allocation2] sm:$0xff]
      %v449 = vld [vmem:[#allocation2 + $0x8] sm:$0xff]
      %v450 = vld [vmem:[#allocation2 + $0x10] sm:$0xff]
      %v451 = vld [vmem:[#allocation2 + $0x18] sm:$0xff]
      %v452 = vld [vmem:[#allocation2 + $0x20] sm:$0xff]
      %v453 = vld [vmem:[#allocation2 + $0x28] sm:$0xff]
      %v454 = vld [vmem:[#allocation2 + $0x30] sm:$0xff]
      %v455 = vld [vmem:[#allocation2 + $0x38] sm:$0xff]
      %v456 = vld [vmem:[#allocation2 + $0x40] sm:$0x7f]
      %s457 = scalar_lea.vmem %s1, 16
      %v458 = vld [vmem:[%s457] sm:$0xff]
      %v459 = vld [vmem:[%s457 + $0x8] sm:$0xff]
      %v461 = vsel %vm252, %v439, 0
      %v464 = vsel %vm252, %v440, 0
      %v467 = vsel %vm252, %v441, 0
      %v470 = vsel %vm252, %v442, 0
      %v473 = vsel %vm252, %v443, 0
      %v476 = vsel %vm252, %v444, 0
      %v479 = vsel %vm252, %v445, 0
      %v482 = vsel %vm252, %v446, 0
      %v485 = vsel %vm252, %v447, 0
      %487 = vmatprep.subr.mxu0 0.0
      %488 = vmatpush1.msra.mxu0 %v458
      %489 = vmatprep.subr.mxu0 0.0
      %490 = vmatpush1.msra.mxu0 %v459
      %491 = vmatprep.subr.mxu0 0.0
      %492 = vmatpush1.msra.mxu0 0.0
      %493 = vmatprep.subr.mxu0 0.0
      %494 = vmatpush1.msra.mxu0 0.0
      %495 = vmatprep.subr.mxu0 0.0
      %496 = vmatpush1.msra.mxu0 0.0
      %497 = vmatprep.subr.mxu0 0.0
      %498 = vmatpush1.msra.mxu0 0.0
      %499 = vmatprep.subr.mxu0 0.0
      %500 = vmatpush1.msra.mxu0 0.0
      %501 = vmatprep.subr.mxu0 0.0
      %502 = vmatpush1.msra.mxu0 0.0
      %503 = vmatprep.subr.mxu0 0.0
      %504 = vmatpush1.msra.mxu0 0.0
      %505 = vmatprep.subr.mxu0 0.0
      %506 = vmatpush1.msra.mxu0 0.0
      %507 = vmatprep.subr.mxu0 0.0
      %508 = vmatpush1.msra.mxu0 0.0
      %509 = vmatprep.subr.mxu0 0.0
      %510 = vmatpush1.msra.mxu0 0.0
      %511 = vmatprep.subr.mxu0 0.0
      %512 = vmatpush1.msra.mxu0 0.0
      %513 = vmatprep.subr.mxu0 0.0
      %514 = vmatpush1.msra.mxu0 0.0
      %515 = vmatprep.subr.mxu0 0.0
      %516 = vmatpush1.msra.mxu0 0.0
      %517 = vmatprep.subr.mxu0 0.0
      %518 = vmatpush1.msra.mxu0 0.0
      %519 = vmatprep.subr.mxu0 0.0
      %520 = vmatpush1.msra.mxu0 0.0
      %521 = vmatprep.subr.mxu0 0.0
      %522 = vmatpush1.msra.mxu0 0.0
      %523 = vmatprep.subr.mxu0 0.0
      %524 = vmatpush1.msra.mxu0 0.0
      %525 = vmatprep.subr.mxu0 0.0
      %526 = vmatpush1.msra.mxu0 0.0
      %527 = vmatprep.subr.mxu0 0.0
      %528 = vmatpush1.msra.mxu0 0.0
      %529 = vmatprep.subr.mxu0 0.0
      %530 = vmatpush1.msra.mxu0 0.0
      %531 = vmatprep.subr.mxu0 0.0
      %532 = vmatpush1.msra.mxu0 0.0
      %533 = vmatprep.subr.mxu0 0.0
      %534 = vmatpush1.msra.mxu0 0.0
      %535 = vmatprep.subr.mxu0 0.0
      %536 = vmatpush1.msra.mxu0 0.0
      %537 = vmatprep.subr.mxu0 0.0
      %538 = vmatpush1.msra.mxu0 0.0
      %539 = vmatprep.subr.mxu0 0.0
      %540 = vmatpush1.msra.mxu0 0.0
      %541 = vmatprep.subr.mxu0 0.0
      %542 = vmatpush1.msra.mxu0 0.0
      %543 = vmatprep.subr.mxu0 0.0
      %544 = vmatpush1.msra.mxu0 0.0
      %545 = vmatprep.subr.mxu0 0.0
      %546 = vmatpush1.msra.mxu0 0.0
      %547 = vmatprep.subr.mxu0 0.0
      %548 = vmatpush1.msra.mxu0 0.0
      %549 = vmatprep.subr.mxu0 0.0
      %550 = vmatpush1.msra.mxu0 0.0
      %551 = vmatprep.mubr.f32.mxu0 0.0
      %552 = vmatmul.mubr.f32.gmra.mrb[0].mxu0 %v461
      %v553 = vpop.f32.mrb[0].mxu0
      %v554 = vadd.f32 0.0, %v553
      %v555 = vpop.f32.mrb[0].mxu0
      %556 = vmatprep.mubr.f32.mxu0 0.0
      %557 = vmatmul.mubr.f32.gmra.mrb[0].mxu0 %v464
      %v558 = vpop.f32.mrb[0].mxu0
      %v559 = vadd.f32 0.0, %v558
      %v560 = vpop.f32.mrb[0].mxu0
      %561 = vmatprep.mubr.f32.mxu0 0.0
      %562 = vmatmul.mubr.f32.gmra.mrb[0].mxu0 %v467
      %v563 = vpop.f32.mrb[0].mxu0
      %v564 = vadd.f32 0.0, %v563
      %v565 = vpop.f32.mrb[0].mxu0
      %566 = vmatprep.mubr.f32.mxu0 0.0
      %567 = vmatmul.mubr.f32.gmra.mrb[0].mxu0 %v470
      %v568 = vpop.f32.mrb[0].mxu0
      %v569 = vadd.f32 0.0, %v568
      %v570 = vpop.f32.mrb[0].mxu0
      %571 = vmatprep.mubr.f32.mxu0 0.0
      %572 = vmatmul.mubr.f32.gmra.mrb[0].mxu0 %v473
      %v573 = vpop.f32.mrb[0].mxu0
      %v574 = vadd.f32 0.0, %v573
      %v575 = vpop.f32.mrb[0].mxu0
      %576 = vmatprep.mubr.f32.mxu0 0.0
      %577 = vmatmul.mubr.f32.gmra.mrb[0].mxu0 %v476
      %v578 = vpop.f32.mrb[0].mxu0
      %v579 = vadd.f32 0.0, %v578
      %v580 = vpop.f32.mrb[0].mxu0
      %581 = vmatprep.mubr.f32.mxu0 0.0
      %582 = vmatmul.mubr.f32.gmra.mrb[0].mxu0 %v479
      %v583 = vpop.f32.mrb[0].mxu0
      %v584 = vadd.f32 0.0, %v583
      %v585 = vpop.f32.mrb[0].mxu0
      %586 = vmatprep.mubr.f32.mxu0 0.0
      %587 = vmatmul.mubr.f32.gmra.mrb[0].mxu0 %v482
      %v588 = vpop.f32.mrb[0].mxu0
      %v589 = vadd.f32 0.0, %v588
      %v590 = vpop.f32.mrb[0].mxu0
      %591 = vmatprep.mubr.f32.mxu0 0.0
      %592 = vmatmul.mubr.f32.gmra.mrb[0].mxu0 %v485
      %v593 = vpop.f32.mrb[0].mxu0
      %v594 = vadd.f32 0.0, %v593
      %v595 = vpop.f32.mrb[0].mxu0
      %596 = vdwg.mxu0
      %v597 = vadd.f32 %v448, %v554
      %v598 = vadd.f32 %v449, %v559
      %v599 = vadd.f32 %v450, %v564
      %v600 = vadd.f32 %v451, %v569
      %v601 = vadd.f32 %v452, %v574
      %v602 = vadd.f32 %v453, %v579
      %v603 = vadd.f32 %v454, %v584
      %v604 = vadd.f32 %v455, %v589
      %v605 = vadd.f32 %v456, %v594
      %606 = vst.msk [vmem:[#allocation2] sm:$0xff] %vm252, %v597
      %607 = vst.msk [vmem:[#allocation2 + $0x8] sm:$0xff] %vm252, %v598
      %608 = vst.msk [vmem:[#allocation2 + $0x10] sm:$0xff] %vm252, %v599
      %609 = vst.msk [vmem:[#allocation2 + $0x18] sm:$0xff] %vm252, %v600
      %610 = vst.msk [vmem:[#allocation2 + $0x20] sm:$0xff] %vm252, %v601
      %611 = vst.msk [vmem:[#allocation2 + $0x28] sm:$0xff] %vm252, %v602
      %612 = vst.msk [vmem:[#allocation2 + $0x30] sm:$0xff] %vm252, %v603
      %613 = vst.msk [vmem:[#allocation2 + $0x38] sm:$0xff] %vm252, %v604
      %614 = vst.msk [vmem:[#allocation2 + $0x40] sm:$0x7f] %vm261, %v605
      %v615 = vld [vmem:[%s246 + $0x1] sm:$0xff]
      %v616 = vld [vmem:[%s246 + $0x9] sm:$0xff]
      %v617 = vld [vmem:[%s246 + $0x11] sm:$0xff]
      %v618 = vld [vmem:[%s246 + $0x19] sm:$0xff]
      %v619 = vld [vmem:[%s246 + $0x21] sm:$0xff]
      %v620 = vld [vmem:[%s246 + $0x29] sm:$0xff]
      %v621 = vld [vmem:[%s246 + $0x31] sm:$0xff]
      %v622 = vld [vmem:[%s246 + $0x39] sm:$0xff]
      %v623 = vld [vmem:[%s246 + $0x41] sm:$0x7f]
      %v624 = vld [vmem:[#allocation2] sm:$0xff]
      %v625 = vld [vmem:[#allocation2 + $0x8] sm:$0xff]
      %v626 = vld [vmem:[#allocation2 + $0x10] sm:$0xff]
      %v627 = vld [vmem:[#allocation2 + $0x18] sm:$0xff]
      %v628 = vld [vmem:[#allocation2 + $0x20] sm:$0xff]
      %v629 = vld [vmem:[#allocation2 + $0x28] sm:$0xff]
      %v630 = vld [vmem:[#allocation2 + $0x30] sm:$0xff]
      %v631 = vld [vmem:[#allocation2 + $0x38] sm:$0xff]
      %v632 = vld [vmem:[#allocation2 + $0x40] sm:$0x7f]
      %s633 = scalar_lea.vmem %s1, 32
      %v634 = vld [vmem:[%s633] sm:$0xff]
      %v635 = vld [vmem:[%s633 + $0x8] sm:$0xff]
      %v637 = vsel %vm252, %v615, 0
      %v640 = vsel %vm252, %v616, 0
      %v643 = vsel %vm252, %v617, 0
      %v646 = vsel %vm252, %v618, 0
      %v649 = vsel %vm252, %v619, 0
      %v652 = vsel %vm252, %v620, 0
      %v655 = vsel %vm252, %v621, 0
      %v658 = vsel %vm252, %v622, 0
      %v661 = vsel %vm252, %v623, 0
      %663 = vmatprep.subr.mxu0 0.0
      %664 = vmatpush1.msra.mxu0 %v634
      %665 = vmatprep.subr.mxu0 0.0
      %666 = vmatpush1.msra.mxu0 %v635
      %667 = vmatprep.subr.mxu0 0.0
      %668 = vmatpush1.msra.mxu0 0.0
      %669 = vmatprep.subr.mxu0 0.0
      %670 = vmatpush1.msra.mxu0 0.0
      %671 = vmatprep.subr.mxu0 0.0
      %672 = vmatpush1.msra.mxu0 0.0
      %673 = vmatprep.subr.mxu0 0.0
      %674 = vmatpush1.msra.mxu0 0.0
      %675 = vmatprep.subr.mxu0 0.0
      %676 = vmatpush1.msra.mxu0 0.0
      %677 = vmatprep.subr.mxu0 0.0
      %678 = vmatpush1.msra.mxu0 0.0
      %679 = vmatprep.subr.mxu0 0.0
      %680 = vmatpush1.msra.mxu0 0.0
      %681 = vmatprep.subr.mxu0 0.0
      %682 = vmatpush1.msra.mxu0 0.0
      %683 = vmatprep.subr.mxu0 0.0
      %684 = vmatpush1.msra.mxu0 0.0
      %685 = vmatprep.subr.mxu0 0.0
      %686 = vmatpush1.msra.mxu0 0.0
      %687 = vmatprep.subr.mxu0 0.0
      %688 = vmatpush1.msra.mxu0 0.0
      %689 = vmatprep.subr.mxu0 0.0
      %690 = vmatpush1.msra.mxu0 0.0
      %691 = vmatprep.subr.mxu0 0.0
      %692 = vmatpush1.msra.mxu0 0.0
      %693 = vmatprep.subr.mxu0 0.0
      %694 = vmatpush1.msra.mxu0 0.0
      %695 = vmatprep.subr.mxu0 0.0
      %696 = vmatpush1.msra.mxu0 0.0
      %697 = vmatprep.subr.mxu0 0.0
      %698 = vmatpush1.msra.mxu0 0.0
      %699 = vmatprep.subr.mxu0 0.0
      %700 = vmatpush1.msra.mxu0 0.0
      %701 = vmatprep.subr.mxu0 0.0
      %702 = vmatpush1.msra.mxu0 0.0
      %703 = vmatprep.subr.mxu0 0.0
      %704 = vmatpush1.msra.mxu0 0.0
      %705 = vmatprep.subr.mxu0 0.0
      %706 = vmatpush1.msra.mxu0 0.0
      %707 = vmatprep.subr.mxu0 0.0
      %708 = vmatpush1.msra.mxu0 0.0
      %709 = vmatprep.subr.mxu0 0.0
      %710 = vmatpush1.msra.mxu0 0.0
      %711 = vmatprep.subr.mxu0 0.0
      %712 = vmatpush1.msra.mxu0 0.0
      %713 = vmatprep.subr.mxu0 0.0
      %714 = vmatpush1.msra.mxu0 0.0
      %715 = vmatprep.subr.mxu0 0.0
      %716 = vmatpush1.msra.mxu0 0.0
      %717 = vmatprep.subr.mxu0 0.0
      %718 = vmatpush1.msra.mxu0 0.0
      %719 = vmatprep.subr.mxu0 0.0
      %720 = vmatpush1.msra.mxu0 0.0
      %721 = vmatprep.subr.mxu0 0.0
      %722 = vmatpush1.msra.mxu0 0.0
      %723 = vmatprep.subr.mxu0 0.0
      %724 = vmatpush1.msra.mxu0 0.0
      %725 = vmatprep.subr.mxu0 0.0
      %726 = vmatpush1.msra.mxu0 0.0
      %727 = vmatprep.mubr.f32.mxu0 0.0
      %728 = vmatmul.mubr.f32.gmra.mrb[0].mxu0 %v637
      %v729 = vpop.f32.mrb[0].mxu0
      %v730 = vadd.f32 0.0, %v729
      %v731 = vpop.f32.mrb[0].mxu0
      %732 = vmatprep.mubr.f32.mxu0 0.0
      %733 = vmatmul.mubr.f32.gmra.mrb[0].mxu0 %v640
      %v734 = vpop.f32.mrb[0].mxu0
      %v735 = vadd.f32 0.0, %v734
      %v736 = vpop.f32.mrb[0].mxu0
      %737 = vmatprep.mubr.f32.mxu0 0.0
      %738 = vmatmul.mubr.f32.gmra.mrb[0].mxu0 %v643
      %v739 = vpop.f32.mrb[0].mxu0
      %v740 = vadd.f32 0.0, %v739
      %v741 = vpop.f32.mrb[0].mxu0
      %742 = vmatprep.mubr.f32.mxu0 0.0
      %743 = vmatmul.mubr.f32.gmra.mrb[0].mxu0 %v646
      %v744 = vpop.f32.mrb[0].mxu0
      %v745 = vadd.f32 0.0, %v744
      %v746 = vpop.f32.mrb[0].mxu0
      %747 = vmatprep.mubr.f32.mxu0 0.0
      %748 = vmatmul.mubr.f32.gmra.mrb[0].mxu0 %v649
      %v749 = vpop.f32.mrb[0].mxu0
      %v750 = vadd.f32 0.0, %v749
      %v751 = vpop.f32.mrb[0].mxu0
      %752 = vmatprep.mubr.f32.mxu0 0.0
      %753 = vmatmul.mubr.f32.gmra.mrb[0].mxu0 %v652
      %v754 = vpop.f32.mrb[0].mxu0
      %v755 = vadd.f32 0.0, %v754
      %v756 = vpop.f32.mrb[0].mxu0
      %757 = vmatprep.mubr.f32.mxu0 0.0
      %758 = vmatmul.mubr.f32.gmra.mrb[0].mxu0 %v655
      %v759 = vpop.f32.mrb[0].mxu0
      %v760 = vadd.f32 0.0, %v759
      %v761 = vpop.f32.mrb[0].mxu0
      %762 = vmatprep.mubr.f32.mxu0 0.0
      %763 = vmatmul.mubr.f32.gmra.mrb[0].mxu0 %v658
      %v764 = vpop.f32.mrb[0].mxu0
      %v765 = vadd.f32 0.0, %v764
      %v766 = vpop.f32.mrb[0].mxu0
      %767 = vmatprep.mubr.f32.mxu0 0.0
      %768 = vmatmul.mubr.f32.gmra.mrb[0].mxu0 %v661
      %v769 = vpop.f32.mrb[0].mxu0
      %v770 = vadd.f32 0.0, %v769
      %v771 = vpop.f32.mrb[0].mxu0
      %772 = vdwg.mxu0
      %v773 = vadd.f32 %v624, %v730
      %v774 = vadd.f32 %v625, %v735
      %v775 = vadd.f32 %v626, %v740
      %v776 = vadd.f32 %v627, %v745
      %v777 = vadd.f32 %v628, %v750
      %v778 = vadd.f32 %v629, %v755
      %v779 = vadd.f32 %v630, %v760
      %v780 = vadd.f32 %v631, %v765
      %v781 = vadd.f32 %v632, %v770
      %782 = vst.msk [vmem:[#allocation2] sm:$0xff] %vm252, %v773
      %783 = vst.msk [vmem:[#allocation2 + $0x8] sm:$0xff] %vm252, %v774
      %784 = vst.msk [vmem:[#allocation2 + $0x10] sm:$0xff] %vm252, %v775
      %785 = vst.msk [vmem:[#allocation2 + $0x18] sm:$0xff] %vm252, %v776
      %786 = vst.msk [vmem:[#allocation2 + $0x20] sm:$0xff] %vm252, %v777
      %787 = vst.msk [vmem:[#allocation2 + $0x28] sm:$0xff] %vm252, %v778
      %788 = vst.msk [vmem:[#allocation2 + $0x30] sm:$0xff] %vm252, %v779
      %789 = vst.msk [vmem:[#allocation2 + $0x38] sm:$0xff] %vm252, %v780
      %790 = vst.msk [vmem:[#allocation2 + $0x40] sm:$0x7f] %vm261, %v781
      %s791 = scalar_lea.vmem %s246, 176
      %v792 = vld [vmem:[%s791] sm:$0xff]
      %v793 = vld [vmem:[%s791 + $0x8] sm:$0xff]
      %v794 = vld [vmem:[%s791 + $0x10] sm:$0xff]
      %v795 = vld [vmem:[%s791 + $0x18] sm:$0xff]
      %v796 = vld [vmem:[%s791 + $0x20] sm:$0xff]
      %v797 = vld [vmem:[%s791 + $0x28] sm:$0xff]
      %v798 = vld [vmem:[%s791 + $0x30] sm:$0xff]
      %v799 = vld [vmem:[%s791 + $0x38] sm:$0xff]
      %v800 = vld [vmem:[%s791 + $0x40] sm:$0x7f]
      %v801 = vld [vmem:[#allocation2] sm:$0xff]
      %v802 = vld [vmem:[#allocation2 + $0x8] sm:$0xff]
      %v803 = vld [vmem:[#allocation2 + $0x10] sm:$0xff]
      %v804 = vld [vmem:[#allocation2 + $0x18] sm:$0xff]
      %v805 = vld [vmem:[#allocation2 + $0x20] sm:$0xff]
      %v806 = vld [vmem:[#allocation2 + $0x28] sm:$0xff]
      %v807 = vld [vmem:[#allocation2 + $0x30] sm:$0xff]
      %v808 = vld [vmem:[#allocation2 + $0x38] sm:$0xff]
      %v809 = vld [vmem:[#allocation2 + $0x40] sm:$0x7f]
      %s810 = scalar_lea.vmem %s1, 48
      %v811 = vld [vmem:[%s810] sm:$0xff]
      %v812 = vld [vmem:[%s810 + $0x8] sm:$0xff]
      %v814 = vsel %vm252, %v792, 0
      %v817 = vsel %vm252, %v793, 0
      %v820 = vsel %vm252, %v794, 0
      %v823 = vsel %vm252, %v795, 0
      %v826 = vsel %vm252, %v796, 0
      %v829 = vsel %vm252, %v797, 0
      %v832 = vsel %vm252, %v798, 0
      %v835 = vsel %vm252, %v799, 0
      %v838 = vsel %vm252, %v800, 0
      %840 = vmatprep.subr.mxu0 0.0
      %841 = vmatpush1.msra.mxu0 %v811
      %842 = vmatprep.subr.mxu0 0.0
      %843 = vmatpush1.msra.mxu0 %v812
      %844 = vmatprep.subr.mxu0 0.0
      %845 = vmatpush1.msra.mxu0 0.0
      %846 = vmatprep.subr.mxu0 0.0
      %847 = vmatpush1.msra.mxu0 0.0
      %848 = vmatprep.subr.mxu0 0.0
      %849 = vmatpush1.msra.mxu0 0.0
      %850 = vmatprep.subr.mxu0 0.0
      %851 = vmatpush1.msra.mxu0 0.0
      %852 = vmatprep.subr.mxu0 0.0
      %853 = vmatpush1.msra.mxu0 0.0
      %854 = vmatprep.subr.mxu0 0.0
      %855 = vmatpush1.msra.mxu0 0.0
      %856 = vmatprep.subr.mxu0 0.0
      %857 = vmatpush1.msra.mxu0 0.0
      %858 = vmatprep.subr.mxu0 0.0
      %859 = vmatpush1.msra.mxu0 0.0
      %860 = vmatprep.subr.mxu0 0.0
      %861 = vmatpush1.msra.mxu0 0.0
      %862 = vmatprep.subr.mxu0 0.0
      %863 = vmatpush1.msra.mxu0 0.0
      %864 = vmatprep.subr.mxu0 0.0
      %865 = vmatpush1.msra.mxu0 0.0
      %866 = vmatprep.subr.mxu0 0.0
      %867 = vmatpush1.msra.mxu0 0.0
      %868 = vmatprep.subr.mxu0 0.0
      %869 = vmatpush1.msra.mxu0 0.0
      %870 = vmatprep.subr.mxu0 0.0
      %871 = vmatpush1.msra.mxu0 0.0
      %872 = vmatprep.subr.mxu0 0.0
      %873 = vmatpush1.msra.mxu0 0.0
      %874 = vmatprep.subr.mxu0 0.0
      %875 = vmatpush1.msra.mxu0 0.0
      %876 = vmatprep.subr.mxu0 0.0
      %877 = vmatpush1.msra.mxu0 0.0
      %878 = vmatprep.subr.mxu0 0.0
      %879 = vmatpush1.msra.mxu0 0.0
      %880 = vmatprep.subr.mxu0 0.0
      %881 = vmatpush1.msra.mxu0 0.0
      %882 = vmatprep.subr.mxu0 0.0
      %883 = vmatpush1.msra.mxu0 0.0
      %884 = vmatprep.subr.mxu0 0.0
      %885 = vmatpush1.msra.mxu0 0.0
      %886 = vmatprep.subr.mxu0 0.0
      %887 = vmatpush1.msra.mxu0 0.0
      %888 = vmatprep.subr.mxu0 0.0
      %889 = vmatpush1.msra.mxu0 0.0
      %890 = vmatprep.subr.mxu0 0.0
      %891 = vmatpush1.msra.mxu0 0.0
      %892 = vmatprep.subr.mxu0 0.0
      %893 = vmatpush1.msra.mxu0 0.0
      %894 = vmatprep.subr.mxu0 0.0
      %895 = vmatpush1.msra.mxu0 0.0
      %896 = vmatprep.subr.mxu0 0.0
      %897 = vmatpush1.msra.mxu0 0.0
      %898 = vmatprep.subr.mxu0 0.0
      %899 = vmatpush1.msra.mxu0 0.0
      %900 = vmatprep.subr.mxu0 0.0
      %901 = vmatpush1.msra.mxu0 0.0
      %902 = vmatprep.subr.mxu0 0.0
      %903 = vmatpush1.msra.mxu0 0.0
      %904 = vmatprep.mubr.f32.mxu0 0.0
      %905 = vmatmul.mubr.f32.gmra.mrb[0].mxu0 %v814
      %v906 = vpop.f32.mrb[0].mxu0
      %v907 = vadd.f32 0.0, %v906
      %v908 = vpop.f32.mrb[0].mxu0
      %909 = vmatprep.mubr.f32.mxu0 0.0
      %910 = vmatmul.mubr.f32.gmra.mrb[0].mxu0 %v817
      %v911 = vpop.f32.mrb[0].mxu0
      %v912 = vadd.f32 0.0, %v911
      %v913 = vpop.f32.mrb[0].mxu0
      %914 = vmatprep.mubr.f32.mxu0 0.0
      %915 = vmatmul.mubr.f32.gmra.mrb[0].mxu0 %v820
      %v916 = vpop.f32.mrb[0].mxu0
      %v917 = vadd.f32 0.0, %v916
      %v918 = vpop.f32.mrb[0].mxu0
      %919 = vmatprep.mubr.f32.mxu0 0.0
      %920 = vmatmul.mubr.f32.gmra.mrb[0].mxu0 %v823
      %v921 = vpop.f32.mrb[0].mxu0
      %v922 = vadd.f32 0.0, %v921
      %v923 = vpop.f32.mrb[0].mxu0
      %924 = vmatprep.mubr.f32.mxu0 0.0
      %925 = vmatmul.mubr.f32.gmra.mrb[0].mxu0 %v826
      %v926 = vpop.f32.mrb[0].mxu0
      %v927 = vadd.f32 0.0, %v926
      %v928 = vpop.f32.mrb[0].mxu0
      %929 = vmatprep.mubr.f32.mxu0 0.0
      %930 = vmatmul.mubr.f32.gmra.mrb[0].mxu0 %v829
      %v931 = vpop.f32.mrb[0].mxu0
      %v932 = vadd.f32 0.0, %v931
      %v933 = vpop.f32.mrb[0].mxu0
      %934 = vmatprep.mubr.f32.mxu0 0.0
      %935 = vmatmul.mubr.f32.gmra.mrb[0].mxu0 %v832
      %v936 = vpop.f32.mrb[0].mxu0
      %v937 = vadd.f32 0.0, %v936
      %v938 = vpop.f32.mrb[0].mxu0
      %939 = vmatprep.mubr.f32.mxu0 0.0
      %940 = vmatmul.mubr.f32.gmra.mrb[0].mxu0 %v835
      %v941 = vpop.f32.mrb[0].mxu0
      %v942 = vadd.f32 0.0, %v941
      %v943 = vpop.f32.mrb[0].mxu0
      %944 = vmatprep.mubr.f32.mxu0 0.0
      %945 = vmatmul.mubr.f32.gmra.mrb[0].mxu0 %v838
      %v946 = vpop.f32.mrb[0].mxu0
      %v947 = vadd.f32 0.0, %v946
      %v948 = vpop.f32.mrb[0].mxu0
      %949 = vdwg.mxu0
      %v950 = vadd.f32 %v801, %v907
      %v951 = vadd.f32 %v802, %v912
      %v952 = vadd.f32 %v803, %v917
      %v953 = vadd.f32 %v804, %v922
      %v954 = vadd.f32 %v805, %v927
      %v955 = vadd.f32 %v806, %v932
      %v956 = vadd.f32 %v807, %v937
      %v957 = vadd.f32 %v808, %v942
      %v958 = vadd.f32 %v809, %v947
      %959 = vst.msk [vmem:[#allocation2] sm:$0xff] %vm252, %v950
      %960 = vst.msk [vmem:[#allocation2 + $0x8] sm:$0xff] %vm252, %v951
      %961 = vst.msk [vmem:[#allocation2 + $0x10] sm:$0xff] %vm252, %v952
      %962 = vst.msk [vmem:[#allocation2 + $0x18] sm:$0xff] %vm252, %v953
      %963 = vst.msk [vmem:[#allocation2 + $0x20] sm:$0xff] %vm252, %v954
      %964 = vst.msk [vmem:[#allocation2 + $0x28] sm:$0xff] %vm252, %v955
      %965 = vst.msk [vmem:[#allocation2 + $0x30] sm:$0xff] %vm252, %v956
      %966 = vst.msk [vmem:[#allocation2 + $0x38] sm:$0xff] %vm252, %v957
      %967 = vst.msk [vmem:[#allocation2 + $0x40] sm:$0x7f] %vm261, %v958
      %s968 = scalar_lea.vmem %s246, 264
      %v969 = vld [vmem:[%s968] sm:$0xff]
      %v970 = vld [vmem:[%s968 + $0x8] sm:$0xff]
      %v971 = vld [vmem:[%s968 + $0x10] sm:$0xff]
      %v972 = vld [vmem:[%s968 + $0x18] sm:$0xff]
      %v973 = vld [vmem:[%s968 + $0x20] sm:$0xff]
      %v974 = vld [vmem:[%s968 + $0x28] sm:$0xff]
      %v975 = vld [vmem:[%s968 + $0x30] sm:$0xff]
      %v976 = vld [vmem:[%s968 + $0x38] sm:$0xff]
      %v977 = vld [vmem:[%s968 + $0x40] sm:$0x7f]
      %v978 = vld [vmem:[#allocation2] sm:$0xff]
      %v979 = vld [vmem:[#allocation2 + $0x8] sm:$0xff]
      %v980 = vld [vmem:[#allocation2 + $0x10] sm:$0xff]
      %v981 = vld [vmem:[#allocation2 + $0x18] sm:$0xff]
      %v982 = vld [vmem:[#allocation2 + $0x20] sm:$0xff]
      %v983 = vld [vmem:[#allocation2 + $0x28] sm:$0xff]
      %v984 = vld [vmem:[#allocation2 + $0x30] sm:$0xff]
      %v985 = vld [vmem:[#allocation2 + $0x38] sm:$0xff]
      %v986 = vld [vmem:[#allocation2 + $0x40] sm:$0x7f]
      %s987 = scalar_lea.vmem %s1, 64
      %v988 = vld [vmem:[%s987] sm:$0xff]
      %v989 = vld [vmem:[%s987 + $0x8] sm:$0xff]
      %v991 = vsel %vm252, %v969, 0
      %v994 = vsel %vm252, %v970, 0
      %v997 = vsel %vm252, %v971, 0
      %v1000 = vsel %vm252, %v972, 0
      %v1003 = vsel %vm252, %v973, 0
      %v1006 = vsel %vm252, %v974, 0
      %v1009 = vsel %vm252, %v975, 0
      %v1012 = vsel %vm252, %v976, 0
      %v1015 = vsel %vm252, %v977, 0
      %1017 = vmatprep.subr.mxu0 0.0
      %1018 = vmatpush1.msra.mxu0 %v988
      %1019 = vmatprep.subr.mxu0 0.0
      %1020 = vmatpush1.msra.mxu0 %v989
      %1021 = vmatprep.subr.mxu0 0.0
      %1022 = vmatpush1.msra.mxu0 0.0
      %1023 = vmatprep.subr.mxu0 0.0
      %1024 = vmatpush1.msra.mxu0 0.0
      %1025 = vmatprep.subr.mxu0 0.0
      %1026 = vmatpush1.msra.mxu0 0.0
      %1027 = vmatprep.subr.mxu0 0.0
      %1028 = vmatpush1.msra.mxu0 0.0
      %1029 = vmatprep.subr.mxu0 0.0
      %1030 = vmatpush1.msra.mxu0 0.0
      %1031 = vmatprep.subr.mxu0 0.0
      %1032 = vmatpush1.msra.mxu0 0.0
      %1033 = vmatprep.subr.mxu0 0.0
      %1034 = vmatpush1.msra.mxu0 0.0
      %1035 = vmatprep.subr.mxu0 0.0
      %1036 = vmatpush1.msra.mxu0 0.0
      %1037 = vmatprep.subr.mxu0 0.0
      %1038 = vmatpush1.msra.mxu0 0.0
      %1039 = vmatprep.subr.mxu0 0.0
      %1040 = vmatpush1.msra.mxu0 0.0
      %1041 = vmatprep.subr.mxu0 0.0
      %1042 = vmatpush1.msra.mxu0 0.0
      %1043 = vmatprep.subr.mxu0 0.0
      %1044 = vmatpush1.msra.mxu0 0.0
      %1045 = vmatprep.subr.mxu0 0.0
      %1046 = vmatpush1.msra.mxu0 0.0
      %1047 = vmatprep.subr.mxu0 0.0
      %1048 = vmatpush1.msra.mxu0 0.0
      %1049 = vmatprep.subr.mxu0 0.0
      %1050 = vmatpush1.msra.mxu0 0.0
      %1051 = vmatprep.subr.mxu0 0.0
      %1052 = vmatpush1.msra.mxu0 0.0
      %1053 = vmatprep.subr.mxu0 0.0
      %1054 = vmatpush1.msra.mxu0 0.0
      %1055 = vmatprep.subr.mxu0 0.0
      %1056 = vmatpush1.msra.mxu0 0.0
      %1057 = vmatprep.subr.mxu0 0.0
      %1058 = vmatpush1.msra.mxu0 0.0
      %1059 = vmatprep.subr.mxu0 0.0
      %1060 = vmatpush1.msra.mxu0 0.0
      %1061 = vmatprep.subr.mxu0 0.0
      %1062 = vmatpush1.msra.mxu0 0.0
      %1063 = vmatprep.subr.mxu0 0.0
      %1064 = vmatpush1.msra.mxu0 0.0
      %1065 = vmatprep.subr.mxu0 0.0
      %1066 = vmatpush1.msra.mxu0 0.0
      %1067 = vmatprep.subr.mxu0 0.0
      %1068 = vmatpush1.msra.mxu0 0.0
      %1069 = vmatprep.subr.mxu0 0.0
      %1070 = vmatpush1.msra.mxu0 0.0
      %1071 = vmatprep.subr.mxu0 0.0
      %1072 = vmatpush1.msra.mxu0 0.0
      %1073 = vmatprep.subr.mxu0 0.0
      %1074 = vmatpush1.msra.mxu0 0.0
      %1075 = vmatprep.subr.mxu0 0.0
      %1076 = vmatpush1.msra.mxu0 0.0
      %1077 = vmatprep.subr.mxu0 0.0
      %1078 = vmatpush1.msra.mxu0 0.0
      %1079 = vmatprep.subr.mxu0 0.0
      %1080 = vmatpush1.msra.mxu0 0.0
      %1081 = vmatprep.mubr.f32.mxu0 0.0
      %1082 = vmatmul.mubr.f32.gmra.mrb[0].mxu0 %v991
      %v1083 = vpop.f32.mrb[0].mxu0
      %v1084 = vadd.f32 0.0, %v1083
      %v1085 = vpop.f32.mrb[0].mxu0
      %1086 = vmatprep.mubr.f32.mxu0 0.0
      %1087 = vmatmul.mubr.f32.gmra.mrb[0].mxu0 %v994
      %v1088 = vpop.f32.mrb[0].mxu0
      %v1089 = vadd.f32 0.0, %v1088
      %v1090 = vpop.f32.mrb[0].mxu0
      %1091 = vmatprep.mubr.f32.mxu0 0.0
      %1092 = vmatmul.mubr.f32.gmra.mrb[0].mxu0 %v997
      %v1093 = vpop.f32.mrb[0].mxu0
      %v1094 = vadd.f32 0.0, %v1093
      %v1095 = vpop.f32.mrb[0].mxu0
      %1096 = vmatprep.mubr.f32.mxu0 0.0
      %1097 = vmatmul.mubr.f32.gmra.mrb[0].mxu0 %v1000
      %v1098 = vpop.f32.mrb[0].mxu0
      %v1099 = vadd.f32 0.0, %v1098
      %v1100 = vpop.f32.mrb[0].mxu0
      %1101 = vmatprep.mubr.f32.mxu0 0.0
      %1102 = vmatmul.mubr.f32.gmra.mrb[0].mxu0 %v1003
      %v1103 = vpop.f32.mrb[0].mxu0
      %v1104 = vadd.f32 0.0, %v1103
      %v1105 = vpop.f32.mrb[0].mxu0
      %1106 = vmatprep.mubr.f32.mxu0 0.0
      %1107 = vmatmul.mubr.f32.gmra.mrb[0].mxu0 %v1006
      %v1108 = vpop.f32.mrb[0].mxu0
      %v1109 = vadd.f32 0.0, %v1108
      %v1110 = vpop.f32.mrb[0].mxu0
      %1111 = vmatprep.mubr.f32.mxu0 0.0
      %1112 = vmatmul.mubr.f32.gmra.mrb[0].mxu0 %v1009
      %v1113 = vpop.f32.mrb[0].mxu0
      %v1114 = vadd.f32 0.0, %v1113
      %v1115 = vpop.f32.mrb[0].mxu0
      %1116 = vmatprep.mubr.f32.mxu0 0.0
      %1117 = vmatmul.mubr.f32.gmra.mrb[0].mxu0 %v1012
      %v1118 = vpop.f32.mrb[0].mxu0
      %v1119 = vadd.f32 0.0, %v1118
      %v1120 = vpop.f32.mrb[0].mxu0
      %1121 = vmatprep.mubr.f32.mxu0 0.0
      %1122 = vmatmul.mubr.f32.gmra.mrb[0].mxu0 %v1015
      %v1123 = vpop.f32.mrb[0].mxu0
      %v1124 = vadd.f32 0.0, %v1123
      %v1125 = vpop.f32.mrb[0].mxu0
      %1126 = vdwg.mxu0
      %v1127 = vadd.f32 %v978, %v1084
      %v1128 = vadd.f32 %v979, %v1089
      %v1129 = vadd.f32 %v980, %v1094
      %v1130 = vadd.f32 %v981, %v1099
      %v1131 = vadd.f32 %v982, %v1104
      %v1132 = vadd.f32 %v983, %v1109
      %v1133 = vadd.f32 %v984, %v1114
      %v1134 = vadd.f32 %v985, %v1119
      %v1135 = vadd.f32 %v986, %v1124
      %1136 = vst.msk [vmem:[#allocation2] sm:$0xff] %vm252, %v1127
      %1137 = vst.msk [vmem:[#allocation2 + $0x8] sm:$0xff] %vm252, %v1128
      %1138 = vst.msk [vmem:[#allocation2 + $0x10] sm:$0xff] %vm252, %v1129
      %1139 = vst.msk [vmem:[#allocation2 + $0x18] sm:$0xff] %vm252, %v1130
      %1140 = vst.msk [vmem:[#allocation2 + $0x20] sm:$0xff] %vm252, %v1131
      %1141 = vst.msk [vmem:[#allocation2 + $0x28] sm:$0xff] %vm252, %v1132
      %1142 = vst.msk [vmem:[#allocation2 + $0x30] sm:$0xff] %vm252, %v1133
      %1143 = vst.msk [vmem:[#allocation2 + $0x38] sm:$0xff] %vm252, %v1134
      %1144 = vst.msk [vmem:[#allocation2 + $0x40] sm:$0x7f] %vm261, %v1135
      %v1145 = vld [vmem:[%s791 + $0x1] sm:$0xff]
      %v1146 = vld [vmem:[%s791 + $0x9] sm:$0xff]
      %v1147 = vld [vmem:[%s791 + $0x11] sm:$0xff]
      %v1148 = vld [vmem:[%s791 + $0x19] sm:$0xff]
      %v1149 = vld [vmem:[%s791 + $0x21] sm:$0xff]
      %v1150 = vld [vmem:[%s791 + $0x29] sm:$0xff]
      %v1151 = vld [vmem:[%s791 + $0x31] sm:$0xff]
      %v1152 = vld [vmem:[%s791 + $0x39] sm:$0xff]
      %v1153 = vld [vmem:[%s791 + $0x41] sm:$0x7f]
      %v1154 = vld [vmem:[#allocation2] sm:$0xff]
      %v1155 = vld [vmem:[#allocation2 + $0x8] sm:$0xff]
      %v1156 = vld [vmem:[#allocation2 + $0x10] sm:$0xff]
      %v1157 = vld [vmem:[#allocation2 + $0x18] sm:$0xff]
      %v1158 = vld [vmem:[#allocation2 + $0x20] sm:$0xff]
      %v1159 = vld [vmem:[#allocation2 + $0x28] sm:$0xff]
      %v1160 = vld [vmem:[#allocation2 + $0x30] sm:$0xff]
      %v1161 = vld [vmem:[#allocation2 + $0x38] sm:$0xff]
      %v1162 = vld [vmem:[#allocation2 + $0x40] sm:$0x7f]
      %s1163 = scalar_lea.vmem %s1, 80
      %v1164 = vld [vmem:[%s1163] sm:$0xff]
      %v1165 = vld [vmem:[%s1163 + $0x8] sm:$0xff]
      %v1167 = vsel %vm252, %v1145, 0
      %v1170 = vsel %vm252, %v1146, 0
      %v1173 = vsel %vm252, %v1147, 0
      %v1176 = vsel %vm252, %v1148, 0
      %v1179 = vsel %vm252, %v1149, 0
      %v1182 = vsel %vm252, %v1150, 0
      %v1185 = vsel %vm252, %v1151, 0
      %v1188 = vsel %vm252, %v1152, 0
      %v1191 = vsel %vm252, %v1153, 0
      %1193 = vmatprep.subr.mxu0 0.0
      %1194 = vmatpush1.msra.mxu0 %v1164
      %1195 = vmatprep.subr.mxu0 0.0
      %1196 = vmatpush1.msra.mxu0 %v1165
      %1197 = vmatprep.subr.mxu0 0.0
      %1198 = vmatpush1.msra.mxu0 0.0
      %1199 = vmatprep.subr.mxu0 0.0
      %1200 = vmatpush1.msra.mxu0 0.0
      %1201 = vmatprep.subr.mxu0 0.0
      %1202 = vmatpush1.msra.mxu0 0.0
      %1203 = vmatprep.subr.mxu0 0.0
      %1204 = vmatpush1.msra.mxu0 0.0
      %1205 = vmatprep.subr.mxu0 0.0
      %1206 = vmatpush1.msra.mxu0 0.0
      %1207 = vmatprep.subr.mxu0 0.0
      %1208 = vmatpush1.msra.mxu0 0.0
      %1209 = vmatprep.subr.mxu0 0.0
      %1210 = vmatpush1.msra.mxu0 0.0
      %1211 = vmatprep.subr.mxu0 0.0
      %1212 = vmatpush1.msra.mxu0 0.0
      %1213 = vmatprep.subr.mxu0 0.0
      %1214 = vmatpush1.msra.mxu0 0.0
      %1215 = vmatprep.subr.mxu0 0.0
      %1216 = vmatpush1.msra.mxu0 0.0
      %1217 = vmatprep.subr.mxu0 0.0
      %1218 = vmatpush1.msra.mxu0 0.0
      %1219 = vmatprep.subr.mxu0 0.0
      %1220 = vmatpush1.msra.mxu0 0.0
      %1221 = vmatprep.subr.mxu0 0.0
      %1222 = vmatpush1.msra.mxu0 0.0
      %1223 = vmatprep.subr.mxu0 0.0
      %1224 = vmatpush1.msra.mxu0 0.0
      %1225 = vmatprep.subr.mxu0 0.0
      %1226 = vmatpush1.msra.mxu0 0.0
      %1227 = vmatprep.subr.mxu0 0.0
      %1228 = vmatpush1.msra.mxu0 0.0
      %1229 = vmatprep.subr.mxu0 0.0
      %1230 = vmatpush1.msra.mxu0 0.0
      %1231 = vmatprep.subr.mxu0 0.0
      %1232 = vmatpush1.msra.mxu0 0.0
      %1233 = vmatprep.subr.mxu0 0.0
      %1234 = vmatpush1.msra.mxu0 0.0
      %1235 = vmatprep.subr.mxu0 0.0
      %1236 = vmatpush1.msra.mxu0 0.0
      %1237 = vmatprep.subr.mxu0 0.0
      %1238 = vmatpush1.msra.mxu0 0.0
      %1239 = vmatprep.subr.mxu0 0.0
      %1240 = vmatpush1.msra.mxu0 0.0
      %1241 = vmatprep.subr.mxu0 0.0
      %1242 = vmatpush1.msra.mxu0 0.0
      %1243 = vmatprep.subr.mxu0 0.0
      %1244 = vmatpush1.msra.mxu0 0.0
      %1245 = vmatprep.subr.mxu0 0.0
      %1246 = vmatpush1.msra.mxu0 0.0
      %1247 = vmatprep.subr.mxu0 0.0
      %1248 = vmatpush1.msra.mxu0 0.0
      %1249 = vmatprep.subr.mxu0 0.0
      %1250 = vmatpush1.msra.mxu0 0.0
      %1251 = vmatprep.subr.mxu0 0.0
      %1252 = vmatpush1.msra.mxu0 0.0
      %1253 = vmatprep.subr.mxu0 0.0
      %1254 = vmatpush1.msra.mxu0 0.0
      %1255 = vmatprep.subr.mxu0 0.0
      %1256 = vmatpush1.msra.mxu0 0.0
      %1257 = vmatprep.mubr.f32.mxu0 0.0
      %1258 = vmatmul.mubr.f32.gmra.mrb[0].mxu0 %v1167
      %v1259 = vpop.f32.mrb[0].mxu0
      %v1260 = vadd.f32 0.0, %v1259
      %v1261 = vpop.f32.mrb[0].mxu0
      %1262 = vmatprep.mubr.f32.mxu0 0.0
      %1263 = vmatmul.mubr.f32.gmra.mrb[0].mxu0 %v1170
      %v1264 = vpop.f32.mrb[0].mxu0
      %v1265 = vadd.f32 0.0, %v1264
      %v1266 = vpop.f32.mrb[0].mxu0
      %1267 = vmatprep.mubr.f32.mxu0 0.0
      %1268 = vmatmul.mubr.f32.gmra.mrb[0].mxu0 %v1173
      %v1269 = vpop.f32.mrb[0].mxu0
      %v1270 = vadd.f32 0.0, %v1269
      %v1271 = vpop.f32.mrb[0].mxu0
      %1272 = vmatprep.mubr.f32.mxu0 0.0
      %1273 = vmatmul.mubr.f32.gmra.mrb[0].mxu0 %v1176
      %v1274 = vpop.f32.mrb[0].mxu0
      %v1275 = vadd.f32 0.0, %v1274
      %v1276 = vpop.f32.mrb[0].mxu0
      %1277 = vmatprep.mubr.f32.mxu0 0.0
      %1278 = vmatmul.mubr.f32.gmra.mrb[0].mxu0 %v1179
      %v1279 = vpop.f32.mrb[0].mxu0
      %v1280 = vadd.f32 0.0, %v1279
      %v1281 = vpop.f32.mrb[0].mxu0
      %1282 = vmatprep.mubr.f32.mxu0 0.0
      %1283 = vmatmul.mubr.f32.gmra.mrb[0].mxu0 %v1182
      %v1284 = vpop.f32.mrb[0].mxu0
      %v1285 = vadd.f32 0.0, %v1284
      %v1286 = vpop.f32.mrb[0].mxu0
      %1287 = vmatprep.mubr.f32.mxu0 0.0
      %1288 = vmatmul.mubr.f32.gmra.mrb[0].mxu0 %v1185
      %v1289 = vpop.f32.mrb[0].mxu0
      %v1290 = vadd.f32 0.0, %v1289
      %v1291 = vpop.f32.mrb[0].mxu0
      %1292 = vmatprep.mubr.f32.mxu0 0.0
      %1293 = vmatmul.mubr.f32.gmra.mrb[0].mxu0 %v1188
      %v1294 = vpop.f32.mrb[0].mxu0
      %v1295 = vadd.f32 0.0, %v1294
      %v1296 = vpop.f32.mrb[0].mxu0
      %1297 = vmatprep.mubr.f32.mxu0 0.0
      %1298 = vmatmul.mubr.f32.gmra.mrb[0].mxu0 %v1191
      %v1299 = vpop.f32.mrb[0].mxu0
      %v1300 = vadd.f32 0.0, %v1299
      %v1301 = vpop.f32.mrb[0].mxu0
      %1302 = vdwg.mxu0
      %v1303 = vadd.f32 %v1154, %v1260
      %v1304 = vadd.f32 %v1155, %v1265
      %v1305 = vadd.f32 %v1156, %v1270
      %v1306 = vadd.f32 %v1157, %v1275
      %v1307 = vadd.f32 %v1158, %v1280
      %v1308 = vadd.f32 %v1159, %v1285
      %v1309 = vadd.f32 %v1160, %v1290
      %v1310 = vadd.f32 %v1161, %v1295
      %v1311 = vadd.f32 %v1162, %v1300
      %1312 = vst.msk [vmem:[#allocation2] sm:$0xff] %vm252, %v1303
      %1313 = vst.msk [vmem:[#allocation2 + $0x8] sm:$0xff] %vm252, %v1304
      %1314 = vst.msk [vmem:[#allocation2 + $0x10] sm:$0xff] %vm252, %v1305
      %1315 = vst.msk [vmem:[#allocation2 + $0x18] sm:$0xff] %vm252, %v1306
      %1316 = vst.msk [vmem:[#allocation2 + $0x20] sm:$0xff] %vm252, %v1307
      %1317 = vst.msk [vmem:[#allocation2 + $0x28] sm:$0xff] %vm252, %v1308
      %1318 = vst.msk [vmem:[#allocation2 + $0x30] sm:$0xff] %vm252, %v1309
      %1319 = vst.msk [vmem:[#allocation2 + $0x38] sm:$0xff] %vm252, %v1310
      %1320 = vst.msk [vmem:[#allocation2 + $0x40] sm:$0x7f] %vm261, %v1311
      %v1321 = vld [vmem:[%s246 + $0x9] sm:$0xff]
      %v1322 = vld [vmem:[%s246 + $0x11] sm:$0xff]
      %v1323 = vld [vmem:[%s246 + $0x19] sm:$0xff]
      %v1324 = vld [vmem:[%s246 + $0x21] sm:$0xff]
      %v1325 = vld [vmem:[%s246 + $0x29] sm:$0xff]
      %v1326 = vld [vmem:[%s246 + $0x31] sm:$0xff]
      %v1327 = vld [vmem:[%s246 + $0x39] sm:$0xff]
      %v1328 = vld [vmem:[%s246 + $0x41] sm:$0xff]
      %v1329 = vld [vmem:[%s246 + $0x49] sm:$0x7f]
      %v1330 = vld [vmem:[#allocation2] sm:$0xff]
      %v1331 = vld [vmem:[#allocation2 + $0x8] sm:$0xff]
      %v1332 = vld [vmem:[#allocation2 + $0x10] sm:$0xff]
      %v1333 = vld [vmem:[#allocation2 + $0x18] sm:$0xff]
      %v1334 = vld [vmem:[#allocation2 + $0x20] sm:$0xff]
      %v1335 = vld [vmem:[#allocation2 + $0x28] sm:$0xff]
      %v1336 = vld [vmem:[#allocation2 + $0x30] sm:$0xff]
      %v1337 = vld [vmem:[#allocation2 + $0x38] sm:$0xff]
      %v1338 = vld [vmem:[#allocation2 + $0x40] sm:$0x7f]
      %s1339 = scalar_lea.vmem %s1, 96
      %v1340 = vld [vmem:[%s1339] sm:$0xff]
      %v1341 = vld [vmem:[%s1339 + $0x8] sm:$0xff]
      %v1343 = vsel %vm252, %v1321, 0
      %v1346 = vsel %vm252, %v1322, 0
      %v1349 = vsel %vm252, %v1323, 0
      %v1352 = vsel %vm252, %v1324, 0
      %v1355 = vsel %vm252, %v1325, 0
      %v1358 = vsel %vm252, %v1326, 0
      %v1361 = vsel %vm252, %v1327, 0
      %v1364 = vsel %vm252, %v1328, 0
      %v1367 = vsel %vm252, %v1329, 0
      %1369 = vmatprep.subr.mxu0 0.0
      %1370 = vmatpush1.msra.mxu0 %v1340
      %1371 = vmatprep.subr.mxu0 0.0
      %1372 = vmatpush1.msra.mxu0 %v1341
      %1373 = vmatprep.subr.mxu0 0.0
      %1374 = vmatpush1.msra.mxu0 0.0
      %1375 = vmatprep.subr.mxu0 0.0
      %1376 = vmatpush1.msra.mxu0 0.0
      %1377 = vmatprep.subr.mxu0 0.0
      %1378 = vmatpush1.msra.mxu0 0.0
      %1379 = vmatprep.subr.mxu0 0.0
      %1380 = vmatpush1.msra.mxu0 0.0
      %1381 = vmatprep.subr.mxu0 0.0
      %1382 = vmatpush1.msra.mxu0 0.0
      %1383 = vmatprep.subr.mxu0 0.0
      %1384 = vmatpush1.msra.mxu0 0.0
      %1385 = vmatprep.subr.mxu0 0.0
      %1386 = vmatpush1.msra.mxu0 0.0
      %1387 = vmatprep.subr.mxu0 0.0
      %1388 = vmatpush1.msra.mxu0 0.0
      %1389 = vmatprep.subr.mxu0 0.0
      %1390 = vmatpush1.msra.mxu0 0.0
      %1391 = vmatprep.subr.mxu0 0.0
      %1392 = vmatpush1.msra.mxu0 0.0
      %1393 = vmatprep.subr.mxu0 0.0
      %1394 = vmatpush1.msra.mxu0 0.0
      %1395 = vmatprep.subr.mxu0 0.0
      %1396 = vmatpush1.msra.mxu0 0.0
      %1397 = vmatprep.subr.mxu0 0.0
      %1398 = vmatpush1.msra.mxu0 0.0
      %1399 = vmatprep.subr.mxu0 0.0
      %1400 = vmatpush1.msra.mxu0 0.0
      %1401 = vmatprep.subr.mxu0 0.0
      %1402 = vmatpush1.msra.mxu0 0.0
      %1403 = vmatprep.subr.mxu0 0.0
      %1404 = vmatpush1.msra.mxu0 0.0
      %1405 = vmatprep.subr.mxu0 0.0
      %1406 = vmatpush1.msra.mxu0 0.0
      %1407 = vmatprep.subr.mxu0 0.0
      %1408 = vmatpush1.msra.mxu0 0.0
      %1409 = vmatprep.subr.mxu0 0.0
      %1410 = vmatpush1.msra.mxu0 0.0
      %1411 = vmatprep.subr.mxu0 0.0
      %1412 = vmatpush1.msra.mxu0 0.0
      %1413 = vmatprep.subr.mxu0 0.0
      %1414 = vmatpush1.msra.mxu0 0.0
      %1415 = vmatprep.subr.mxu0 0.0
      %1416 = vmatpush1.msra.mxu0 0.0
      %1417 = vmatprep.subr.mxu0 0.0
      %1418 = vmatpush1.msra.mxu0 0.0
      %1419 = vmatprep.subr.mxu0 0.0
      %1420 = vmatpush1.msra.mxu0 0.0
      %1421 = vmatprep.subr.mxu0 0.0
      %1422 = vmatpush1.msra.mxu0 0.0
      %1423 = vmatprep.subr.mxu0 0.0
      %1424 = vmatpush1.msra.mxu0 0.0
      %1425 = vmatprep.subr.mxu0 0.0
      %1426 = vmatpush1.msra.mxu0 0.0
      %1427 = vmatprep.subr.mxu0 0.0
      %1428 = vmatpush1.msra.mxu0 0.0
      %1429 = vmatprep.subr.mxu0 0.0
      %1430 = vmatpush1.msra.mxu0 0.0
      %1431 = vmatprep.subr.mxu0 0.0
      %1432 = vmatpush1.msra.mxu0 0.0
      %1433 = vmatprep.mubr.f32.mxu0 0.0
      %1434 = vmatmul.mubr.f32.gmra.mrb[0].mxu0 %v1343
      %v1435 = vpop.f32.mrb[0].mxu0
      %v1436 = vadd.f32 0.0, %v1435
      %v1437 = vpop.f32.mrb[0].mxu0
      %1438 = vmatprep.mubr.f32.mxu0 0.0
      %1439 = vmatmul.mubr.f32.gmra.mrb[0].mxu0 %v1346
      %v1440 = vpop.f32.mrb[0].mxu0
      %v1441 = vadd.f32 0.0, %v1440
      %v1442 = vpop.f32.mrb[0].mxu0
      %1443 = vmatprep.mubr.f32.mxu0 0.0
      %1444 = vmatmul.mubr.f32.gmra.mrb[0].mxu0 %v1349
      %v1445 = vpop.f32.mrb[0].mxu0
      %v1446 = vadd.f32 0.0, %v1445
      %v1447 = vpop.f32.mrb[0].mxu0
      %1448 = vmatprep.mubr.f32.mxu0 0.0
      %1449 = vmatmul.mubr.f32.gmra.mrb[0].mxu0 %v1352
      %v1450 = vpop.f32.mrb[0].mxu0
      %v1451 = vadd.f32 0.0, %v1450
      %v1452 = vpop.f32.mrb[0].mxu0
      %1453 = vmatprep.mubr.f32.mxu0 0.0
      %1454 = vmatmul.mubr.f32.gmra.mrb[0].mxu0 %v1355
      %v1455 = vpop.f32.mrb[0].mxu0
      %v1456 = vadd.f32 0.0, %v1455
      %v1457 = vpop.f32.mrb[0].mxu0
      %1458 = vmatprep.mubr.f32.mxu0 0.0
      %1459 = vmatmul.mubr.f32.gmra.mrb[0].mxu0 %v1358
      %v1460 = vpop.f32.mrb[0].mxu0
      %v1461 = vadd.f32 0.0, %v1460
      %v1462 = vpop.f32.mrb[0].mxu0
      %1463 = vmatprep.mubr.f32.mxu0 0.0
      %1464 = vmatmul.mubr.f32.gmra.mrb[0].mxu0 %v1361
      %v1465 = vpop.f32.mrb[0].mxu0
      %v1466 = vadd.f32 0.0, %v1465
      %v1467 = vpop.f32.mrb[0].mxu0
      %1468 = vmatprep.mubr.f32.mxu0 0.0
      %1469 = vmatmul.mubr.f32.gmra.mrb[0].mxu0 %v1364
      %v1470 = vpop.f32.mrb[0].mxu0
      %v1471 = vadd.f32 0.0, %v1470
      %v1472 = vpop.f32.mrb[0].mxu0
      %1473 = vmatprep.mubr.f32.mxu0 0.0
      %1474 = vmatmul.mubr.f32.gmra.mrb[0].mxu0 %v1367
      %v1475 = vpop.f32.mrb[0].mxu0
      %v1476 = vadd.f32 0.0, %v1475
      %v1477 = vpop.f32.mrb[0].mxu0
      %1478 = vdwg.mxu0
      %v1479 = vadd.f32 %v1330, %v1436
      %v1480 = vadd.f32 %v1331, %v1441
      %v1481 = vadd.f32 %v1332, %v1446
      %v1482 = vadd.f32 %v1333, %v1451
      %v1483 = vadd.f32 %v1334, %v1456
      %v1484 = vadd.f32 %v1335, %v1461
      %v1485 = vadd.f32 %v1336, %v1466
      %v1486 = vadd.f32 %v1337, %v1471
      %v1487 = vadd.f32 %v1338, %v1476
      %1488 = vst.msk [vmem:[#allocation2] sm:$0xff] %vm252, %v1479
      %1489 = vst.msk [vmem:[#allocation2 + $0x8] sm:$0xff] %vm252, %v1480
      %1490 = vst.msk [vmem:[#allocation2 + $0x10] sm:$0xff] %vm252, %v1481
      %1491 = vst.msk [vmem:[#allocation2 + $0x18] sm:$0xff] %vm252, %v1482
      %1492 = vst.msk [vmem:[#allocation2 + $0x20] sm:$0xff] %vm252, %v1483
      %1493 = vst.msk [vmem:[#allocation2 + $0x28] sm:$0xff] %vm252, %v1484
      %1494 = vst.msk [vmem:[#allocation2 + $0x30] sm:$0xff] %vm252, %v1485
      %1495 = vst.msk [vmem:[#allocation2 + $0x38] sm:$0xff] %vm252, %v1486
      %1496 = vst.msk [vmem:[#allocation2 + $0x40] sm:$0x7f] %vm261, %v1487
      %v1497 = vld [vmem:[%s438 + $0x9] sm:$0xff]
      %v1498 = vld [vmem:[%s438 + $0x11] sm:$0xff]
      %v1499 = vld [vmem:[%s438 + $0x19] sm:$0xff]
      %v1500 = vld [vmem:[%s438 + $0x21] sm:$0xff]
      %v1501 = vld [vmem:[%s438 + $0x29] sm:$0xff]
      %v1502 = vld [vmem:[%s438 + $0x31] sm:$0xff]
      %v1503 = vld [vmem:[%s438 + $0x39] sm:$0xff]
      %v1504 = vld [vmem:[%s438 + $0x41] sm:$0xff]
      %v1505 = vld [vmem:[%s438 + $0x49] sm:$0x7f]
      %v1506 = vld [vmem:[#allocation2] sm:$0xff]
      %v1507 = vld [vmem:[#allocation2 + $0x8] sm:$0xff]
      %v1508 = vld [vmem:[#allocation2 + $0x10] sm:$0xff]
      %v1509 = vld [vmem:[#allocation2 + $0x18] sm:$0xff]
      %v1510 = vld [vmem:[#allocation2 + $0x20] sm:$0xff]
      %v1511 = vld [vmem:[#allocation2 + $0x28] sm:$0xff]
      %v1512 = vld [vmem:[#allocation2 + $0x30] sm:$0xff]
      %v1513 = vld [vmem:[#allocation2 + $0x38] sm:$0xff]
      %v1514 = vld [vmem:[#allocation2 + $0x40] sm:$0x7f]
      %s1515 = scalar_lea.vmem %s1, 112
      %v1516 = vld [vmem:[%s1515] sm:$0xff]
      %v1517 = vld [vmem:[%s1515 + $0x8] sm:$0xff]
      %v1519 = vsel %vm252, %v1497, 0
      %v1522 = vsel %vm252, %v1498, 0
      %v1525 = vsel %vm252, %v1499, 0
      %v1528 = vsel %vm252, %v1500, 0
      %v1531 = vsel %vm252, %v1501, 0
      %v1534 = vsel %vm252, %v1502, 0
      %v1537 = vsel %vm252, %v1503, 0
      %v1540 = vsel %vm252, %v1504, 0
      %v1543 = vsel %vm252, %v1505, 0
      %1545 = vmatprep.subr.mxu0 0.0
      %1546 = vmatpush1.msra.mxu0 %v1516
      %1547 = vmatprep.subr.mxu0 0.0
      %1548 = vmatpush1.msra.mxu0 %v1517
      %1549 = vmatprep.subr.mxu0 0.0
      %1550 = vmatpush1.msra.mxu0 0.0
      %1551 = vmatprep.subr.mxu0 0.0
      %1552 = vmatpush1.msra.mxu0 0.0
      %1553 = vmatprep.subr.mxu0 0.0
      %1554 = vmatpush1.msra.mxu0 0.0
      %1555 = vmatprep.subr.mxu0 0.0
      %1556 = vmatpush1.msra.mxu0 0.0
      %1557 = vmatprep.subr.mxu0 0.0
      %1558 = vmatpush1.msra.mxu0 0.0
      %1559 = vmatprep.subr.mxu0 0.0
      %1560 = vmatpush1.msra.mxu0 0.0
      %1561 = vmatprep.subr.mxu0 0.0
      %1562 = vmatpush1.msra.mxu0 0.0
      %1563 = vmatprep.subr.mxu0 0.0
      %1564 = vmatpush1.msra.mxu0 0.0
      %1565 = vmatprep.subr.mxu0 0.0
      %1566 = vmatpush1.msra.mxu0 0.0
      %1567 = vmatprep.subr.mxu0 0.0
      %1568 = vmatpush1.msra.mxu0 0.0
      %1569 = vmatprep.subr.mxu0 0.0
      %1570 = vmatpush1.msra.mxu0 0.0
      %1571 = vmatprep.subr.mxu0 0.0
      %1572 = vmatpush1.msra.mxu0 0.0
      %1573 = vmatprep.subr.mxu0 0.0
      %1574 = vmatpush1.msra.mxu0 0.0
      %1575 = vmatprep.subr.mxu0 0.0
      %1576 = vmatpush1.msra.mxu0 0.0
      %1577 = vmatprep.subr.mxu0 0.0
      %1578 = vmatpush1.msra.mxu0 0.0
      %1579 = vmatprep.subr.mxu0 0.0
      %1580 = vmatpush1.msra.mxu0 0.0
      %1581 = vmatprep.subr.mxu0 0.0
      %1582 = vmatpush1.msra.mxu0 0.0
      %1583 = vmatprep.subr.mxu0 0.0
      %1584 = vmatpush1.msra.mxu0 0.0
      %1585 = vmatprep.subr.mxu0 0.0
      %1586 = vmatpush1.msra.mxu0 0.0
      %1587 = vmatprep.subr.mxu0 0.0
      %1588 = vmatpush1.msra.mxu0 0.0
      %1589 = vmatprep.subr.mxu0 0.0
      %1590 = vmatpush1.msra.mxu0 0.0
      %1591 = vmatprep.subr.mxu0 0.0
      %1592 = vmatpush1.msra.mxu0 0.0
      %1593 = vmatprep.subr.mxu0 0.0
      %1594 = vmatpush1.msra.mxu0 0.0
      %1595 = vmatprep.subr.mxu0 0.0
      %1596 = vmatpush1.msra.mxu0 0.0
      %1597 = vmatprep.subr.mxu0 0.0
      %1598 = vmatpush1.msra.mxu0 0.0
      %1599 = vmatprep.subr.mxu0 0.0
      %1600 = vmatpush1.msra.mxu0 0.0
      %1601 = vmatprep.subr.mxu0 0.0
      %1602 = vmatpush1.msra.mxu0 0.0
      %1603 = vmatprep.subr.mxu0 0.0
      %1604 = vmatpush1.msra.mxu0 0.0
      %1605 = vmatprep.subr.mxu0 0.0
      %1606 = vmatpush1.msra.mxu0 0.0
      %1607 = vmatprep.subr.mxu0 0.0
      %1608 = vmatpush1.msra.mxu0 0.0
      %1609 = vmatprep.mubr.f32.mxu0 0.0
      %1610 = vmatmul.mubr.f32.gmra.mrb[0].mxu0 %v1519
      %v1611 = vpop.f32.mrb[0].mxu0
      %v1612 = vadd.f32 0.0, %v1611
      %v1613 = vpop.f32.mrb[0].mxu0
      %1614 = vmatprep.mubr.f32.mxu0 0.0
      %1615 = vmatmul.mubr.f32.gmra.mrb[0].mxu0 %v1522
      %v1616 = vpop.f32.mrb[0].mxu0
      %v1617 = vadd.f32 0.0, %v1616
      %v1618 = vpop.f32.mrb[0].mxu0
      %1619 = vmatprep.mubr.f32.mxu0 0.0
      %1620 = vmatmul.mubr.f32.gmra.mrb[0].mxu0 %v1525
      %v1621 = vpop.f32.mrb[0].mxu0
      %v1622 = vadd.f32 0.0, %v1621
      %v1623 = vpop.f32.mrb[0].mxu0
      %1624 = vmatprep.mubr.f32.mxu0 0.0
      %1625 = vmatmul.mubr.f32.gmra.mrb[0].mxu0 %v1528
      %v1626 = vpop.f32.mrb[0].mxu0
      %v1627 = vadd.f32 0.0, %v1626
      %v1628 = vpop.f32.mrb[0].mxu0
      %1629 = vmatprep.mubr.f32.mxu0 0.0
      %1630 = vmatmul.mubr.f32.gmra.mrb[0].mxu0 %v1531
      %v1631 = vpop.f32.mrb[0].mxu0
      %v1632 = vadd.f32 0.0, %v1631
      %v1633 = vpop.f32.mrb[0].mxu0
      %1634 = vmatprep.mubr.f32.mxu0 0.0
      %1635 = vmatmul.mubr.f32.gmra.mrb[0].mxu0 %v1534
      %v1636 = vpop.f32.mrb[0].mxu0
      %v1637 = vadd.f32 0.0, %v1636
      %v1638 = vpop.f32.mrb[0].mxu0
      %1639 = vmatprep.mubr.f32.mxu0 0.0
      %1640 = vmatmul.mubr.f32.gmra.mrb[0].mxu0 %v1537
      %v1641 = vpop.f32.mrb[0].mxu0
      %v1642 = vadd.f32 0.0, %v1641
      %v1643 = vpop.f32.mrb[0].mxu0
      %1644 = vmatprep.mubr.f32.mxu0 0.0
      %1645 = vmatmul.mubr.f32.gmra.mrb[0].mxu0 %v1540
      %v1646 = vpop.f32.mrb[0].mxu0
      %v1647 = vadd.f32 0.0, %v1646
      %v1648 = vpop.f32.mrb[0].mxu0
      %1649 = vmatprep.mubr.f32.mxu0 0.0
      %1650 = vmatmul.mubr.f32.gmra.mrb[0].mxu0 %v1543
      %v1651 = vpop.f32.mrb[0].mxu0
      %v1652 = vadd.f32 0.0, %v1651
      %v1653 = vpop.f32.mrb[0].mxu0
      %1654 = vdwg.mxu0
      %v1655 = vadd.f32 %v1506, %v1612
      %v1656 = vadd.f32 %v1507, %v1617
      %v1657 = vadd.f32 %v1508, %v1622
      %v1658 = vadd.f32 %v1509, %v1627
      %v1659 = vadd.f32 %v1510, %v1632
      %v1660 = vadd.f32 %v1511, %v1637
      %v1661 = vadd.f32 %v1512, %v1642
      %v1662 = vadd.f32 %v1513, %v1647
      %v1663 = vadd.f32 %v1514, %v1652
      %1664 = vst.msk [vmem:[#allocation2] sm:$0xff] %vm252, %v1655
      %1665 = vst.msk [vmem:[#allocation2 + $0x8] sm:$0xff] %vm252, %v1656
      %1666 = vst.msk [vmem:[#allocation2 + $0x10] sm:$0xff] %vm252, %v1657
      %1667 = vst.msk [vmem:[#allocation2 + $0x18] sm:$0xff] %vm252, %v1658
      %1668 = vst.msk [vmem:[#allocation2 + $0x20] sm:$0xff] %vm252, %v1659
      %1669 = vst.msk [vmem:[#allocation2 + $0x28] sm:$0xff] %vm252, %v1660
      %1670 = vst.msk [vmem:[#allocation2 + $0x30] sm:$0xff] %vm252, %v1661
      %1671 = vst.msk [vmem:[#allocation2 + $0x38] sm:$0xff] %vm252, %v1662
      %1672 = vst.msk [vmem:[#allocation2 + $0x40] sm:$0x7f] %vm261, %v1663
      %v1673 = vld [vmem:[%s246 + $0xa] sm:$0xff]
      %v1674 = vld [vmem:[%s246 + $0x12] sm:$0xff]
      %v1675 = vld [vmem:[%s246 + $0x1a] sm:$0xff]
      %v1676 = vld [vmem:[%s246 + $0x22] sm:$0xff]
      %v1677 = vld [vmem:[%s246 + $0x2a] sm:$0xff]
      %v1678 = vld [vmem:[%s246 + $0x32] sm:$0xff]
      %v1679 = vld [vmem:[%s246 + $0x3a] sm:$0xff]
      %v1680 = vld [vmem:[%s246 + $0x42] sm:$0xff]
      %v1681 = vld [vmem:[%s246 + $0x4a] sm:$0x7f]
      %v1682 = vld [vmem:[#allocation2] sm:$0xff]
      %v1683 = vld [vmem:[#allocation2 + $0x8] sm:$0xff]
      %v1684 = vld [vmem:[#allocation2 + $0x10] sm:$0xff]
      %v1685 = vld [vmem:[#allocation2 + $0x18] sm:$0xff]
      %v1686 = vld [vmem:[#allocation2 + $0x20] sm:$0xff]
      %v1687 = vld [vmem:[#allocation2 + $0x28] sm:$0xff]
      %v1688 = vld [vmem:[#allocation2 + $0x30] sm:$0xff]
      %v1689 = vld [vmem:[#allocation2 + $0x38] sm:$0xff]
      %v1690 = vld [vmem:[#allocation2 + $0x40] sm:$0x7f]
      %s1691 = scalar_lea.vmem %s1, 128
      %v1692 = vld [vmem:[%s1691] sm:$0xff]
      %v1693 = vld [vmem:[%s1691 + $0x8] sm:$0xff]
      %v1695 = vsel %vm252, %v1673, 0
      %v1698 = vsel %vm252, %v1674, 0
      %v1701 = vsel %vm252, %v1675, 0
      %v1704 = vsel %vm252, %v1676, 0
      %v1707 = vsel %vm252, %v1677, 0
      %v1710 = vsel %vm252, %v1678, 0
      %v1713 = vsel %vm252, %v1679, 0
      %v1716 = vsel %vm252, %v1680, 0
      %v1719 = vsel %vm252, %v1681, 0
      %1721 = vmatprep.subr.mxu0 0.0
      %1722 = vmatpush1.msra.mxu0 %v1692
      %1723 = vmatprep.subr.mxu0 0.0
      %1724 = vmatpush1.msra.mxu0 %v1693
      %1725 = vmatprep.subr.mxu0 0.0
      %1726 = vmatpush1.msra.mxu0 0.0
      %1727 = vmatprep.subr.mxu0 0.0
      %1728 = vmatpush1.msra.mxu0 0.0
      %1729 = vmatprep.subr.mxu0 0.0
      %1730 = vmatpush1.msra.mxu0 0.0
      %1731 = vmatprep.subr.mxu0 0.0
      %1732 = vmatpush1.msra.mxu0 0.0
      %1733 = vmatprep.subr.mxu0 0.0
      %1734 = vmatpush1.msra.mxu0 0.0
      %1735 = vmatprep.subr.mxu0 0.0
      %1736 = vmatpush1.msra.mxu0 0.0
      %1737 = vmatprep.subr.mxu0 0.0
      %1738 = vmatpush1.msra.mxu0 0.0
      %1739 = vmatprep.subr.mxu0 0.0
      %1740 = vmatpush1.msra.mxu0 0.0
      %1741 = vmatprep.subr.mxu0 0.0
      %1742 = vmatpush1.msra.mxu0 0.0
      %1743 = vmatprep.subr.mxu0 0.0
      %1744 = vmatpush1.msra.mxu0 0.0
      %1745 = vmatprep.subr.mxu0 0.0
      %1746 = vmatpush1.msra.mxu0 0.0
      %1747 = vmatprep.subr.mxu0 0.0
      %1748 = vmatpush1.msra.mxu0 0.0
      %1749 = vmatprep.subr.mxu0 0.0
      %1750 = vmatpush1.msra.mxu0 0.0
      %1751 = vmatprep.subr.mxu0 0.0
      %1752 = vmatpush1.msra.mxu0 0.0
      %1753 = vmatprep.subr.mxu0 0.0
      %1754 = vmatpush1.msra.mxu0 0.0
      %1755 = vmatprep.subr.mxu0 0.0
      %1756 = vmatpush1.msra.mxu0 0.0
      %1757 = vmatprep.subr.mxu0 0.0
      %1758 = vmatpush1.msra.mxu0 0.0
      %1759 = vmatprep.subr.mxu0 0.0
      %1760 = vmatpush1.msra.mxu0 0.0
      %1761 = vmatprep.subr.mxu0 0.0
      %1762 = vmatpush1.msra.mxu0 0.0
      %1763 = vmatprep.subr.mxu0 0.0
      %1764 = vmatpush1.msra.mxu0 0.0
      %1765 = vmatprep.subr.mxu0 0.0
      %1766 = vmatpush1.msra.mxu0 0.0
      %1767 = vmatprep.subr.mxu0 0.0
      %1768 = vmatpush1.msra.mxu0 0.0
      %1769 = vmatprep.subr.mxu0 0.0
      %1770 = vmatpush1.msra.mxu0 0.0
      %1771 = vmatprep.subr.mxu0 0.0
      %1772 = vmatpush1.msra.mxu0 0.0
      %1773 = vmatprep.subr.mxu0 0.0
      %1774 = vmatpush1.msra.mxu0 0.0
      %1775 = vmatprep.subr.mxu0 0.0
      %1776 = vmatpush1.msra.mxu0 0.0
      %1777 = vmatprep.subr.mxu0 0.0
      %1778 = vmatpush1.msra.mxu0 0.0
      %1779 = vmatprep.subr.mxu0 0.0
      %1780 = vmatpush1.msra.mxu0 0.0
      %1781 = vmatprep.subr.mxu0 0.0
      %1782 = vmatpush1.msra.mxu0 0.0
      %1783 = vmatprep.subr.mxu0 0.0
      %1784 = vmatpush1.msra.mxu0 0.0
      %1785 = vmatprep.mubr.f32.mxu0 0.0
      %1786 = vmatmul.mubr.f32.gmra.mrb[0].mxu0 %v1695
      %v1787 = vpop.f32.mrb[0].mxu0
      %v1788 = vadd.f32 0.0, %v1787
      %v1789 = vpop.f32.mrb[0].mxu0
      %1790 = vmatprep.mubr.f32.mxu0 0.0
      %1791 = vmatmul.mubr.f32.gmra.mrb[0].mxu0 %v1698
      %v1792 = vpop.f32.mrb[0].mxu0
      %v1793 = vadd.f32 0.0, %v1792
      %v1794 = vpop.f32.mrb[0].mxu0
      %1795 = vmatprep.mubr.f32.mxu0 0.0
      %1796 = vmatmul.mubr.f32.gmra.mrb[0].mxu0 %v1701
      %v1797 = vpop.f32.mrb[0].mxu0
      %v1798 = vadd.f32 0.0, %v1797
      %v1799 = vpop.f32.mrb[0].mxu0
      %1800 = vmatprep.mubr.f32.mxu0 0.0
      %1801 = vmatmul.mubr.f32.gmra.mrb[0].mxu0 %v1704
      %v1802 = vpop.f32.mrb[0].mxu0
      %v1803 = vadd.f32 0.0, %v1802
      %v1804 = vpop.f32.mrb[0].mxu0
      %1805 = vmatprep.mubr.f32.mxu0 0.0
      %1806 = vmatmul.mubr.f32.gmra.mrb[0].mxu0 %v1707
      %v1807 = vpop.f32.mrb[0].mxu0
      %v1808 = vadd.f32 0.0, %v1807
      %v1809 = vpop.f32.mrb[0].mxu0
      %1810 = vmatprep.mubr.f32.mxu0 0.0
      %1811 = vmatmul.mubr.f32.gmra.mrb[0].mxu0 %v1710
      %v1812 = vpop.f32.mrb[0].mxu0
      %v1813 = vadd.f32 0.0, %v1812
      %v1814 = vpop.f32.mrb[0].mxu0
      %1815 = vmatprep.mubr.f32.mxu0 0.0
      %1816 = vmatmul.mubr.f32.gmra.mrb[0].mxu0 %v1713
      %v1817 = vpop.f32.mrb[0].mxu0
      %v1818 = vadd.f32 0.0, %v1817
      %v1819 = vpop.f32.mrb[0].mxu0
      %1820 = vmatprep.mubr.f32.mxu0 0.0
      %1821 = vmatmul.mubr.f32.gmra.mrb[0].mxu0 %v1716
      %v1822 = vpop.f32.mrb[0].mxu0
      %v1823 = vadd.f32 0.0, %v1822
      %v1824 = vpop.f32.mrb[0].mxu0
      %1825 = vmatprep.mubr.f32.mxu0 0.0
      %1826 = vmatmul.mubr.f32.gmra.mrb[0].mxu0 %v1719
      %v1827 = vpop.f32.mrb[0].mxu0
      %v1828 = vadd.f32 0.0, %v1827
      %v1829 = vpop.f32.mrb[0].mxu0
      %1830 = vdwg.mxu0
      %v1831 = vadd.f32 %v1682, %v1788
      %v1832 = vadd.f32 %v1683, %v1793
      %v1833 = vadd.f32 %v1684, %v1798
      %v1834 = vadd.f32 %v1685, %v1803
      %v1835 = vadd.f32 %v1686, %v1808
      %v1836 = vadd.f32 %v1687, %v1813
      %v1837 = vadd.f32 %v1688, %v1818
      %v1838 = vadd.f32 %v1689, %v1823
      %v1839 = vadd.f32 %v1690, %v1828
      %1840 = vst.msk [vmem:[#allocation2] sm:$0xff] %vm252, %v1831
      %1841 = vst.msk [vmem:[#allocation2 + $0x8] sm:$0xff] %vm252, %v1832
      %1842 = vst.msk [vmem:[#allocation2 + $0x10] sm:$0xff] %vm252, %v1833
      %1843 = vst.msk [vmem:[#allocation2 + $0x18] sm:$0xff] %vm252, %v1834
      %1844 = vst.msk [vmem:[#allocation2 + $0x20] sm:$0xff] %vm252, %v1835
      %1845 = vst.msk [vmem:[#allocation2 + $0x28] sm:$0xff] %vm252, %v1836
      %1846 = vst.msk [vmem:[#allocation2 + $0x30] sm:$0xff] %vm252, %v1837
      %1847 = vst.msk [vmem:[#allocation2 + $0x38] sm:$0xff] %vm252, %v1838
      %1848 = vst.msk [vmem:[#allocation2 + $0x40] sm:$0x7f] %vm261, %v1839
      %v1849 = vld [vmem:[#allocation2] sm:$0xff]
      %v1850 = vld [vmem:[#allocation2 + $0x8] sm:$0xff]
      %v1851 = vld [vmem:[#allocation2 + $0x10] sm:$0xff]
      %v1852 = vld [vmem:[#allocation2 + $0x18] sm:$0xff]
      %v1853 = vld [vmem:[#allocation2 + $0x20] sm:$0xff]
      %v1854 = vld [vmem:[#allocation2 + $0x28] sm:$0xff]
      %v1855 = vld [vmem:[#allocation2 + $0x30] sm:$0xff]
      %v1856 = vld [vmem:[#allocation2 + $0x38] sm:$0xff]
      %v1857 = vld [vmem:[#allocation2 + $0x40] sm:$0x7f]
      %v1858 = vld [vmem:[%s2] sm:$0xff]
      %v1859 = vld [vmem:[%s2 + $0x8] sm:$0xff]
      %v1860 = vld [vmem:[%s2 + $0x10] sm:$0xff]
      %v1861 = vld [vmem:[%s2 + $0x18] sm:$0xff]
      %v1862 = vld [vmem:[%s2 + $0x20] sm:$0xff]
      %v1863 = vld [vmem:[%s2 + $0x28] sm:$0xff]
      %v1864 = vld [vmem:[%s2 + $0x30] sm:$0xff]
      %v1865 = vld [vmem:[%s2 + $0x38] sm:$0xff]
      %v1866 = vld [vmem:[%s2 + $0x40] sm:$0x7f]
      %v1867 = vld [vmem:[%s5] sm:$0xff]
      %v1868 = vld [vmem:[%s5 + $0x8] sm:$0xff]
      %1870 = vset.pattern.permute.xlu0 0
      %1871 = vperm.xlu0 %1870, %v1858
      %v1872 = vpop.permute.xlu0 %1871
      %1875 = vset.pattern.permute.xlu0 0
      %1876 = vperm.xlu0 %1875, %v1859
      %v1877 = vpop.permute.xlu0 %1876
      %1880 = vset.pattern.permute.xlu0 0
      %1881 = vperm.xlu0 %1880, %v1860
      %v1882 = vpop.permute.xlu0 %1881
      %1885 = vset.pattern.permute.xlu0 0
      %1886 = vperm.xlu0 %1885, %v1861
      %v1887 = vpop.permute.xlu0 %1886
      %1890 = vset.pattern.permute.xlu0 0
      %1891 = vperm.xlu0 %1890, %v1862
      %v1892 = vpop.permute.xlu0 %1891
      %1895 = vset.pattern.permute.xlu0 0
      %1896 = vperm.xlu0 %1895, %v1863
      %v1897 = vpop.permute.xlu0 %1896
      %1900 = vset.pattern.permute.xlu0 0
      %1901 = vperm.xlu0 %1900, %v1864
      %v1902 = vpop.permute.xlu0 %1901
      %1905 = vset.pattern.permute.xlu0 0
      %1906 = vperm.xlu0 %1905, %v1865
      %v1907 = vpop.permute.xlu0 %1906
      %1910 = vset.pattern.permute.xlu0 0
      %1911 = vperm.xlu0 %1910, %v1866
      %v1912 = vpop.permute.xlu0 %1911
      %v1914 = vmul.f32 %v1849, %v1872
      %v1915 = vmul.f32 %v1850, %v1877
      %v1916 = vmul.f32 %v1851, %v1882
      %v1917 = vmul.f32 %v1852, %v1887
      %v1918 = vmul.f32 %v1853, %v1892
      %v1919 = vmul.f32 %v1854, %v1897
      %v1920 = vmul.f32 %v1855, %v1902
      %v1921 = vmul.f32 %v1856, %v1907
      %v1922 = vmul.f32 %v1857, %v1912
      %v1923 = vsel %vm252, %v1914, 0.0
      %v1924 = vsel %vm252, %v1915, 0.0
      %v1925 = vadd.f32 %v1923, %v1924
      %v1926 = vsel %vm252, %v1916, 0.0
      %v1927 = vadd.f32 %v1925, %v1926
      %v1928 = vsel %vm252, %v1917, 0.0
      %v1929 = vadd.f32 %v1927, %v1928
      %v1930 = vsel %vm252, %v1918, 0.0
      %v1931 = vadd.f32 %v1929, %v1930
      %v1932 = vsel %vm252, %v1919, 0.0
      %v1933 = vadd.f32 %v1931, %v1932
      %v1934 = vsel %vm252, %v1920, 0.0
      %v1935 = vadd.f32 %v1933, %v1934
      %v1936 = vsel %vm252, %v1921, 0.0
      %v1937 = vadd.f32 %v1935, %v1936
      %v1938 = vsel %vm261, %v1922, 0.0
      %v1939 = vadd.f32 %v1937, %v1938
      %v1940 = vrot.slane %v1939, 4
      %v1941 = vadd.f32 %v1939, %v1940
      %v1942 = vrot.slane %v1941, 2
      %v1943 = vadd.f32 %v1941, %v1942
      %v1944 = vrot.slane %v1943, 1
      %v1945 = vadd.f32 %v1943, %v1944
      %v1947 = vsel %vm252, %v1945, 0
      %1949 = vmatprep.subr.mxu0 0.0
      %1950 = vmatpush1.msra.mxu0 %v1867
      %1951 = vmatprep.subr.mxu0 0.0
      %1952 = vmatpush1.msra.mxu0 %v1868
      %1953 = vmatprep.subr.mxu0 0.0
      %1954 = vmatpush1.msra.mxu0 0.0
      %1955 = vmatprep.subr.mxu0 0.0
      %1956 = vmatpush1.msra.mxu0 0.0
      %1957 = vmatprep.subr.mxu0 0.0
      %1958 = vmatpush1.msra.mxu0 0.0
      %1959 = vmatprep.subr.mxu0 0.0
      %1960 = vmatpush1.msra.mxu0 0.0
      %1961 = vmatprep.subr.mxu0 0.0
      %1962 = vmatpush1.msra.mxu0 0.0
      %1963 = vmatprep.subr.mxu0 0.0
      %1964 = vmatpush1.msra.mxu0 0.0
      %1965 = vmatprep.subr.mxu0 0.0
      %1966 = vmatpush1.msra.mxu0 0.0
      %1967 = vmatprep.subr.mxu0 0.0
      %1968 = vmatpush1.msra.mxu0 0.0
      %1969 = vmatprep.subr.mxu0 0.0
      %1970 = vmatpush1.msra.mxu0 0.0
      %1971 = vmatprep.subr.mxu0 0.0
      %1972 = vmatpush1.msra.mxu0 0.0
      %1973 = vmatprep.subr.mxu0 0.0
      %1974 = vmatpush1.msra.mxu0 0.0
      %1975 = vmatprep.subr.mxu0 0.0
      %1976 = vmatpush1.msra.mxu0 0.0
      %1977 = vmatprep.subr.mxu0 0.0
      %1978 = vmatpush1.msra.mxu0 0.0
      %1979 = vmatprep.subr.mxu0 0.0
      %1980 = vmatpush1.msra.mxu0 0.0
      %1981 = vmatprep.subr.mxu0 0.0
      %1982 = vmatpush1.msra.mxu0 0.0
      %1983 = vmatprep.subr.mxu0 0.0
      %1984 = vmatpush1.msra.mxu0 0.0
      %1985 = vmatprep.subr.mxu0 0.0
      %1986 = vmatpush1.msra.mxu0 0.0
      %1987 = vmatprep.subr.mxu0 0.0
      %1988 = vmatpush1.msra.mxu0 0.0
      %1989 = vmatprep.subr.mxu0 0.0
      %1990 = vmatpush1.msra.mxu0 0.0
      %1991 = vmatprep.subr.mxu0 0.0
      %1992 = vmatpush1.msra.mxu0 0.0
      %1993 = vmatprep.subr.mxu0 0.0
      %1994 = vmatpush1.msra.mxu0 0.0
      %1995 = vmatprep.subr.mxu0 0.0
      %1996 = vmatpush1.msra.mxu0 0.0
      %1997 = vmatprep.subr.mxu0 0.0
      %1998 = vmatpush1.msra.mxu0 0.0
      %1999 = vmatprep.subr.mxu0 0.0
      %2000 = vmatpush1.msra.mxu0 0.0
      %2001 = vmatprep.subr.mxu0 0.0
      %2002 = vmatpush1.msra.mxu0 0.0
      %2003 = vmatprep.subr.mxu0 0.0
      %2004 = vmatpush1.msra.mxu0 0.0
      %2005 = vmatprep.subr.mxu0 0.0
      %2006 = vmatpush1.msra.mxu0 0.0
      %2007 = vmatprep.subr.mxu0 0.0
      %2008 = vmatpush1.msra.mxu0 0.0
      %2009 = vmatprep.subr.mxu0 0.0
      %2010 = vmatpush1.msra.mxu0 0.0
      %2011 = vmatprep.subr.mxu0 0.0
      %2012 = vmatpush1.msra.mxu0 0.0
      %2013 = vmatprep.mubr.f32.mxu0 0.0
      %2014 = vmatmul.mubr.f32.gmra.mrb[0].mxu0 %v1947
      %v2015 = vpop.f32.mrb[0].mxu0
      %v2016 = vadd.f32 0.0, %v2015
      %v2017 = vpop.f32.mrb[0].mxu0
      %2018 = vdwg.mxu0
      %v2019 = vmul.f32 %v2016, 0.001953125
      %v2020 = vlaneseq
      %v2021 = vshrl.u32 %v2020, 7
      %v2022 = vsub.s32 0, %v2021
      %v2023 = vrot.slane %v2019, %v2022
      %v2024 = vsub.f32 %v1849, %v2023
      %v2025 = vsub.f32 %v1850, %v2023
      %v2026 = vsub.f32 %v1851, %v2023
      %v2027 = vsub.f32 %v1852, %v2023
      %v2028 = vsub.f32 %v1853, %v2023
      %v2029 = vsub.f32 %v1854, %v2023
      %v2030 = vsub.f32 %v1855, %v2023
      %v2031 = vsub.f32 %v1856, %v2023
      %v2032 = vsub.f32 %v1857, %v2023
      %v2033 = vmul.f32 %v2024, %v2024
      %v2034 = vmul.f32 %v2025, %v2025
      %v2035 = vmul.f32 %v2026, %v2026
      %v2036 = vmul.f32 %v2027, %v2027
      %v2037 = vmul.f32 %v2028, %v2028
      %v2038 = vmul.f32 %v2029, %v2029
      %v2039 = vmul.f32 %v2030, %v2030
      %v2040 = vmul.f32 %v2031, %v2031
      %v2041 = vmul.f32 %v2032, %v2032
      %v2042 = vmul.f32 %v2033, %v1872
      %v2043 = vmul.f32 %v2034, %v1877
      %v2044 = vmul.f32 %v2035, %v1882
      %v2045 = vmul.f32 %v2036, %v1887
      %v2046 = vmul.f32 %v2037, %v1892
      %v2047 = vmul.f32 %v2038, %v1897
      %v2048 = vmul.f32 %v2039, %v1902
      %v2049 = vmul.f32 %v2040, %v1907
      %v2050 = vmul.f32 %v2041, %v1912
      %v2051 = vsel %vm252, %v2042, 0.0
      %v2052 = vsel %vm252, %v2043, 0.0
      %v2053 = vadd.f32 %v2051, %v2052
      %v2054 = vsel %vm252, %v2044, 0.0
      %v2055 = vadd.f32 %v2053, %v2054
      %v2056 = vsel %vm252, %v2045, 0.0
      %v2057 = vadd.f32 %v2055, %v2056
      %v2058 = vsel %vm252, %v2046, 0.0
      %v2059 = vadd.f32 %v2057, %v2058
      %v2060 = vsel %vm252, %v2047, 0.0
      %v2061 = vadd.f32 %v2059, %v2060
      %v2062 = vsel %vm252, %v2048, 0.0
      %v2063 = vadd.f32 %v2061, %v2062
      %v2064 = vsel %vm252, %v2049, 0.0
      %v2065 = vadd.f32 %v2063, %v2064
      %v2066 = vsel %vm261, %v2050, 0.0
      %v2067 = vadd.f32 %v2065, %v2066
      %v2068 = vrot.slane %v2067, 4
      %v2069 = vadd.f32 %v2067, %v2068
      %v2070 = vrot.slane %v2069, 2
      %v2071 = vadd.f32 %v2069, %v2070
      %v2072 = vrot.slane %v2071, 1
      %v2073 = vadd.f32 %v2071, %v2072
      %v2075 = vsel %vm252, %v2073, 0
      %2077 = vmatprep.subr.mxu0 0.0
      %2078 = vmatpush1.msra.mxu0 %v1867
      %2079 = vmatprep.subr.mxu0 0.0
      %2080 = vmatpush1.msra.mxu0 %v1868
      %2081 = vmatprep.subr.mxu0 0.0
      %2082 = vmatpush1.msra.mxu0 0.0
      %2083 = vmatprep.subr.mxu0 0.0
      %2084 = vmatpush1.msra.mxu0 0.0
      %2085 = vmatprep.subr.mxu0 0.0
      %2086 = vmatpush1.msra.mxu0 0.0
      %2087 = vmatprep.subr.mxu0 0.0
      %2088 = vmatpush1.msra.mxu0 0.0
      %2089 = vmatprep.subr.mxu0 0.0
      %2090 = vmatpush1.msra.mxu0 0.0
      %2091 = vmatprep.subr.mxu0 0.0
      %2092 = vmatpush1.msra.mxu0 0.0
      %2093 = vmatprep.subr.mxu0 0.0
      %2094 = vmatpush1.msra.mxu0 0.0
      %2095 = vmatprep.subr.mxu0 0.0
      %2096 = vmatpush1.msra.mxu0 0.0
      %2097 = vmatprep.subr.mxu0 0.0
      %2098 = vmatpush1.msra.mxu0 0.0
      %2099 = vmatprep.subr.mxu0 0.0
      %2100 = vmatpush1.msra.mxu0 0.0
      %2101 = vmatprep.subr.mxu0 0.0
      %2102 = vmatpush1.msra.mxu0 0.0
      %2103 = vmatprep.subr.mxu0 0.0
      %2104 = vmatpush1.msra.mxu0 0.0
      %2105 = vmatprep.subr.mxu0 0.0
      %2106 = vmatpush1.msra.mxu0 0.0
      %2107 = vmatprep.subr.mxu0 0.0
      %2108 = vmatpush1.msra.mxu0 0.0
      %2109 = vmatprep.subr.mxu0 0.0
      %2110 = vmatpush1.msra.mxu0 0.0
      %2111 = vmatprep.subr.mxu0 0.0
      %2112 = vmatpush1.msra.mxu0 0.0
      %2113 = vmatprep.subr.mxu0 0.0
      %2114 = vmatpush1.msra.mxu0 0.0
      %2115 = vmatprep.subr.mxu0 0.0
      %2116 = vmatpush1.msra.mxu0 0.0
      %2117 = vmatprep.subr.mxu0 0.0
      %2118 = vmatpush1.msra.mxu0 0.0
      %2119 = vmatprep.subr.mxu0 0.0
      %2120 = vmatpush1.msra.mxu0 0.0
      %2121 = vmatprep.subr.mxu0 0.0
      %2122 = vmatpush1.msra.mxu0 0.0
      %2123 = vmatprep.subr.mxu0 0.0
      %2124 = vmatpush1.msra.mxu0 0.0
      %2125 = vmatprep.subr.mxu0 0.0
      %2126 = vmatpush1.msra.mxu0 0.0
      %2127 = vmatprep.subr.mxu0 0.0
      %2128 = vmatpush1.msra.mxu0 0.0
      %2129 = vmatprep.subr.mxu0 0.0
      %2130 = vmatpush1.msra.mxu0 0.0
      %2131 = vmatprep.subr.mxu0 0.0
      %2132 = vmatpush1.msra.mxu0 0.0
      %2133 = vmatprep.subr.mxu0 0.0
      %2134 = vmatpush1.msra.mxu0 0.0
      %2135 = vmatprep.subr.mxu0 0.0
      %2136 = vmatpush1.msra.mxu0 0.0
      %2137 = vmatprep.subr.mxu0 0.0
      %2138 = vmatpush1.msra.mxu0 0.0
      %2139 = vmatprep.subr.mxu0 0.0
      %2140 = vmatpush1.msra.mxu0 0.0
      %2141 = vmatprep.mubr.f32.mxu0 0.0
      %2142 = vmatmul.mubr.f32.gmra.mrb[0].mxu0 %v2075
      %v2143 = vpop.f32.mrb[0].mxu0
      %v2144 = vadd.f32 0.0, %v2143
      %v2145 = vpop.f32.mrb[0].mxu0
      %2146 = vdwg.mxu0
      %v2147 = vmul.f32 %v2144, 0.001953125
      %v2148 = vadd.f32 %v2147, 1e-05
      %v2149 = vrsqrt.pop %v2148
      %v2150 = vld [vmem:[%s3] sm:$0x1]
      %v2151 = vmul.f32 %v2149, %v2150
      %v2152 = vld [vmem:[%s4] sm:$0x1]
      %v2153 = vmul.f32 %v2019, %v2151
      %v2154 = vsub.f32 %v2152, %v2153
      %v2155 = vld [vmem:[#allocation2] sm:$0xff]
      %v2156 = vlaneseq
      %v2157 = vshrl.u32 %v2156, 7
      %v2158 = vsub.s32 0, %v2157
      %v2159 = vrot.slane %v2151, %v2158
      %v2160 = vmul.f32 %v2155, %v2159
      %v2162 = vlaneseq
      %v2163 = vshrl.u32 %v2162, 7
      %v2164 = vsub.s32 0, %v2163
      %v2165 = vrot.slane %v2154, %v2164
      %v2167 = vadd.f32 %v2160, %v2165
      %v2168 = vmax.f32 %v2167, 0.0
      %2169 = vst.msk [vmem:[%s251] sm:$0xff] %vm252, %v2168
      %v2170 = vld [vmem:[#allocation2 + $0x9] sm:$0xff]
      %v2171 = vmul.f32 %v2170, %v2159
      %v2172 = vadd.f32 %v2171, %v2165
      %v2173 = vmax.f32 %v2172, 0.0
      %s2174 = scalar_lea.vmem %s251, 8
      %2175 = vst.msk [vmem:[%s2174] sm:$0xff] %vm252, %v2173
      %v2176 = vld [vmem:[#allocation2 + $0x12] sm:$0xff]
      %v2177 = vmul.f32 %v2176, %v2159
      %v2178 = vadd.f32 %v2177, %v2165
      %v2179 = vmax.f32 %v2178, 0.0
      %s2180 = scalar_lea.vmem %s251, 16
      %2181 = vst.msk [vmem:[%s2180] sm:$0xff] %vm252, %v2179
      %v2182 = vld [vmem:[#allocation2 + $0x1b] sm:$0xff]
      %v2183 = vmul.f32 %v2182, %v2159
      %v2184 = vadd.f32 %v2183, %v2165
      %v2185 = vmax.f32 %v2184, 0.0
      %s2186 = scalar_lea.vmem %s251, 24
      %2187 = vst.msk [vmem:[%s2186] sm:$0xff] %vm252, %v2185
      %v2188 = vld [vmem:[#allocation2 + $0x24] sm:$0xff]
      %v2189 = vmul.f32 %v2188, %v2159
      %v2190 = vadd.f32 %v2189, %v2165
      %v2191 = vmax.f32 %v2190, 0.0
      %s2192 = scalar_lea.vmem %s251, 32
      %2193 = vst.msk [vmem:[%s2192] sm:$0xff] %vm252, %v2191
      %v2194 = vld [vmem:[#allocation2 + $0x2d] sm:$0xff]
      %v2195 = vmul.f32 %v2194, %v2159
      %v2196 = vadd.f32 %v2195, %v2165
      %v2197 = vmax.f32 %v2196, 0.0
      %s2198 = scalar_lea.vmem %s251, 40
      %2199 = vst.msk [vmem:[%s2198] sm:$0xff] %vm252, %v2197
      %v2200 = vld [vmem:[#allocation2 + $0x36] sm:$0xff]
      %v2201 = vmul.f32 %v2200, %v2159
      %v2202 = vadd.f32 %v2201, %v2165
      %v2203 = vmax.f32 %v2202, 0.0
      %s2204 = scalar_lea.vmem %s251, 48
      %2205 = vst.msk [vmem:[%s2204] sm:$0xff] %vm252, %v2203
      %v2206 = vld [vmem:[#allocation2 + $0x3f] sm:$0xff]
      %v2207 = vmul.f32 %v2206, %v2159
      %v2208 = vadd.f32 %v2207, %v2165
      %v2209 = vmax.f32 %v2208, 0.0
      %s2210 = scalar_lea.vmem %s251, 56
      %2211 = vst.msk [vmem:[%s2210] sm:$0xff] %vm252, %v2209
      %p2212 = scmp.lt.s32.totalorder %s17, 1
      %s2213 = scalar_select %p2212, %s17, 1
      %s2214 = smul.addr %s2213, 8
      %s2215 = smul.addr %s2214, 8
      %s2216 = scalar_lea.vmem %s6, %s2215
      // Predicated region
      $region45: #{_lambda_.5} parent=43 // pred_check
        %p2217 = pneg %p166
      $region46: #{_lambda_.5} parent=43 // pred_check_branch
        %2219 = sbr.rel (%p2217) target = $region48
      $region47: #{_lambda_.5} parent=43 // pred_region
        _
      $region48: #{_lambda_.5} parent=43 // pred_fallthru
        _
    $region44: #{_lambda_.5} parent=5 // pred_fallthru
      _
    %p2220 = scmp.le.s32.totalorder 2, %s12
    // Predicated region
    $region49: #{_lambda_.5} parent=5 // pred_check
      %p2221 = pneg %p2220
    $region50: #{_lambda_.5} parent=5 // pred_check_branch
      %2223 = sbr.rel (%p2221) target = $region52
    $region51: #{_lambda_.5} parent=5 // pred_region
      %s2224 = ssub.s32 %s12, 2
      // Predicated region
      $region53: #{_lambda_.5} parent=51 // pred_check
        %p2225 = pneg %p172
      $region54: #{_lambda_.5} parent=51 // pred_check_branch
        %2227 = sbr.rel (%p2225) target = $region56
      $region55: #{_lambda_.5} parent=51 // pred_region
        %p2228 = scmp.lt.s32.totalorder %s18, 1
        %s2229 = scalar_select %p2228, %s18, 1
        %s2230 = smul.addr %s2229, 8
        %s2231 = smul.addr %s2230, 8
        %s2232 = scalar_lea.vmem %s6, %s2231
      $region56: #{_lambda_.5} parent=51 // pred_fallthru
        _
    $region52: #{_lambda_.5} parent=5 // pred_fallthru
      _
  $region6: #{_lambda_.5} parent=0 // loop_footer
    %s16 = sadd.s32 1, %s12
  $region7: #{_lambda_.5} parent=0 // loop_footer_branch
    %11 = sbr.rel target = $region3
  $region8: #{_lambda_.5} parent=0 // loop_exit
    _

</llo_original>
